<compile_context>
chip_gen: v6e
topology: v6e:2x2x1
jax: 0.10.0
libtpu: 0.0.40
codegen_flags: <defaults>
</compile_context>

<pallas_src>
import jax
import jax.numpy as jnp
from jax.experimental import pallas as pl
from jax.experimental.pallas import tpu as pltpu


def _layer_norm(x, g, b, eps=1e-5):
    mu = jnp.mean(x, axis=-1, keepdims=True)
    var = jnp.mean((x - mu) ** 2, axis=-1, keepdims=True)
    return (x - mu) * jax.lax.rsqrt(var + eps) * g + b


def _softmax_lastdim(s):
    m = jnp.max(s, axis=-1, keepdims=True)
    e = jnp.exp(s - m)
    denom = jnp.sum(e, axis=-1, keepdims=True)
    return e * pl.reciprocal(denom, approx=True)


def _split_heads(x2d, H, hd):
    # (L, H*hd) f32 -> (H, L, hd) bf16   (lane slices + leading-axis stack)
    return jnp.stack(
        [x2d[:, h * hd:(h + 1) * hd] for h in range(H)], axis=0
    ).astype(jnp.bfloat16)


def _merge_heads(x3d, H):
    # (H, L, hd) -> (L, H*hd)   (lane concat, head-0 first == torch concat order)
    return jnp.concatenate([x3d[h] for h in range(H)], axis=-1)


def _make_kernel(H, DK, DV, TQ, Ld, Le, D, DFF):
    # Python float -> lowered as an immediate literal (NOT a captured jnp constant).
    scale = float(1.0 / (DK ** 0.5))

    def kernel(decq_ref, decf_ref, enc_ref, sbias_ref, ebias_ref,
               wq_ref, wk_ref, wv_ref, wq2_ref, wk2_ref, wv2_ref, wo_ref,
               w1_ref, w2_ref, g1_ref, b1_ref, g3_ref, b3_ref,
               out_ref, sattn_ref, cattn_ref):
        xq = decq_ref[0]          # (TQ, D) f32 — query rows / residual
        xf = decf_ref[0]          # (Ld, D) f32 — full sequence for K/V
        enc = enc_ref[0]          # (Le, D) f32
        sbias = sbias_ref[0]      # (TQ, Ld) additive bias (0 or -1e9)
        ebias = ebias_ref[0]      # (TQ, Le)

        xq_bf = xq.astype(jnp.bfloat16)
        xf_bf = xf.astype(jnp.bfloat16)
        enc_bf = enc.astype(jnp.bfloat16)

        # ---------------- self attention (head-batched) ----------------
        Q = jnp.dot(xq_bf, wq_ref[...], preferred_element_type=jnp.float32) * scale
        K = jnp.dot(xf_bf, wk_ref[...], preferred_element_type=jnp.float32)
        V = jnp.dot(xf_bf, wv_ref[...], preferred_element_type=jnp.float32)
        Qh = _split_heads(Q, H, DK)          # (H, TQ, DK) bf16
        Kh = _split_heads(K, H, DK)          # (H, Ld, DK) bf16
        Vh = _split_heads(V, H, DV)          # (H, Ld, DV) bf16

        s1 = jnp.einsum('hqd,hkd->hqk', Qh, Kh,
                        preferred_element_type=jnp.float32) + sbias[None]
        p1 = _softmax_lastdim(s1)            # (H, TQ, Ld) f32
        sattn_ref[0] = p1                    # one slab store per grid step
        ctx1_h = jnp.einsum('hqk,hkd->hqd', p1.astype(jnp.bfloat16), Vh,
                            preferred_element_type=jnp.float32)
        ctx1 = _merge_heads(ctx1_h, H).astype(jnp.bfloat16)      # (TQ, H*DV)

        # ---------------- cross attention (head-batched) ----------------
        Q2 = jnp.dot(ctx1, wq2_ref[...], preferred_element_type=jnp.float32) * scale
        K2 = jnp.dot(enc_bf, wk2_ref[...], preferred_element_type=jnp.float32)
        V2 = jnp.dot(enc_bf, wv2_ref[...], preferred_element_type=jnp.float32)
        Q2h = _split_heads(Q2, H, DK)        # (H, TQ, DK)
        K2h = _split_heads(K2, H, DK)        # (H, Le, DK)
        V2h = _split_heads(V2, H, DV)        # (H, Le, DV)

        s2 = jnp.einsum('hqd,hkd->hqk', Q2h, K2h,
                        preferred_element_type=jnp.float32) + ebias[None]
        p2 = _softmax_lastdim(s2)            # (H, TQ, Le) f32
        cattn_ref[0] = p2
        ctx2_h = jnp.einsum('hqk,hkd->hqd', p2.astype(jnp.bfloat16), V2h,
                            preferred_element_type=jnp.float32)
        ctx2 = _merge_heads(ctx2_h, H).astype(jnp.bfloat16)      # (TQ, H*DV)

        attn_out = jnp.dot(ctx2, wo_ref[...],
                           preferred_element_type=jnp.float32)  # (TQ, D)

        # ---------------- add & norm 1 ----------------
        out1 = _layer_norm(xq + attn_out, g1_ref[...], b1_ref[...])

        # ---------------- position-wise FFN ----------------
        h1 = jnp.maximum(
            jnp.dot(out1.astype(jnp.bfloat16), w1_ref[...],
                    preferred_element_type=jnp.float32), 0.0)
        ffn = jnp.dot(h1.astype(jnp.bfloat16), w2_ref[...],
                      preferred_element_type=jnp.float32)

        # ---------------- add & norm 3 ----------------
        out_ref[0] = _layer_norm(out1 + ffn, g3_ref[...], b3_ref[...])

    return kernel


def decoder_layer2(dec_inputs, enc_outputs, self_attn_mask, enc_attn_mask, params,
                   *, n_heads, d_k, d_v, q_tile=None):
    B, Ld, D = dec_inputs.shape
    Le = enc_outputs.shape[1]
    DFF = params["w1"].shape[1]
    H, DK, DV = n_heads, d_k, d_v

    # Query-dim tiling: largest clean tile <= 256 (bounds VMEM at long Ld; more
    # parallel grid steps for megacore).  Full sequence if it does not divide.
    if q_tile is None:
        q_tile = Ld
        for cand in (256, 128):
            if Ld > cand and Ld % cand == 0:
                q_tile = cand
                break
    TQ = q_tile if (Ld % q_tile == 0) else Ld
    nq = Ld // TQ

    kernel = _make_kernel(H, DK, DV, TQ, Ld, Le, D, DFF)

    # Additive mask bias precomputed once (0 where keep, -1e9 where masked) —
    # removes the per-step compare+select from the VALU path.
    sbias = self_attn_mask.astype(jnp.float32) * (-1e9)
    ebias = enc_attn_mask.astype(jnp.float32) * (-1e9)

    # bf16 weights for the MXU (halves weight DMA/VMEM); layernorm params stay f32.
    bf = lambda k: params[k].astype(jnp.bfloat16)
    weights = [bf("wq"), bf("wk"), bf("wv"), bf("wq2"), bf("wk2"), bf("wv2"),
               bf("wo"), bf("w1"), bf("w2"),
               params["g1"].astype(jnp.float32), params["b1"].astype(jnp.float32),
               params["g3"].astype(jnp.float32), params["b3"].astype(jnp.float32)]

    def full_spec(shape):
        nd = len(shape)
        return pl.BlockSpec(shape, lambda b, q, nd=nd: (0,) * nd)

    in_specs = [
        pl.BlockSpec((1, TQ, D), lambda b, q: (b, q, 0)),    # dec query tile / residual
        pl.BlockSpec((1, Ld, D), lambda b, q: (b, 0, 0)),    # dec full (K/V source)
        pl.BlockSpec((1, Le, D), lambda b, q: (b, 0, 0)),    # enc outputs
        pl.BlockSpec((1, TQ, Ld), lambda b, q: (b, q, 0)),   # self-attn additive bias
        pl.BlockSpec((1, TQ, Le), lambda b, q: (b, q, 0)),   # cross-attn additive bias
    ] + [full_spec(w.shape) for w in weights]                # grid-invariant weights

    out_shapes = (jax.ShapeDtypeStruct((B, Ld, D), jnp.float32),
                  jax.ShapeDtypeStruct((B, H, Ld, Ld), jnp.float32),
                  jax.ShapeDtypeStruct((B, H, Ld, Le), jnp.float32))
    out_specs = (pl.BlockSpec((1, TQ, D), lambda b, q: (b, q, 0)),
                 pl.BlockSpec((1, H, TQ, Ld), lambda b, q: (b, 0, q, 0)),
                 pl.BlockSpec((1, H, TQ, Le), lambda b, q: (b, 0, q, 0)))

    return pl.pallas_call(
        kernel,
        out_shape=out_shapes,
        grid=(B, nq),
        in_specs=in_specs,
        out_specs=out_specs,
        compiler_params=pltpu.CompilerParams(
            dimension_semantics=("parallel", "parallel"),
            vmem_limit_bytes=32 * 1024 * 1024),
    )(dec_inputs, dec_inputs, enc_outputs, sbias, ebias, *weights)


def init_params(key, d_model, d_ff, n_heads, d_k, d_v):
    ks = jax.random.split(key, 9)
    f = lambda k, s: (0.1 * jax.random.normal(k, s, jnp.float32))
    return {
        "wq":  f(ks[0], (d_model, n_heads * d_k)),
        "wk":  f(ks[1], (d_model, n_heads * d_k)),
        "wv":  f(ks[2], (d_model, n_heads * d_v)),
        "wq2": f(ks[3], (n_heads * d_v, n_heads * d_k)),
        "wk2": f(ks[4], (d_model, n_heads * d_k)),
        "wv2": f(ks[5], (d_model, n_heads * d_v)),
        "wo":  f(ks[6], (n_heads * d_v, d_model)),
        "w1":  f(ks[7], (d_model, d_ff)),
        "w2":  f(ks[8], (d_ff, d_model)),
        "g1":  jnp.ones((1, d_model), jnp.float32),
        "b1":  jnp.zeros((1, d_model), jnp.float32),
        "g3":  jnp.ones((1, d_model), jnp.float32),
        "b3":  jnp.zeros((1, d_model), jnp.float32),
    }


if __name__ == "__main__":
    B, Ld, Le = 2, 8, 8
    d_model, d_ff, n_heads, d_k, d_v = 32, 64, 4, 8, 8

    key = jax.random.PRNGKey(0)
    k_dec, k_enc, k_par = jax.random.split(key, 3)

    dec_inputs = jax.random.normal(k_dec, (B, Ld, d_model), jnp.float32)
    enc_outputs = jax.random.normal(k_enc, (B, Le, d_model), jnp.float32)
    # causal self-attention mask (1.0 = masked), no encoder masking
    causal = jnp.triu(jnp.ones((Ld, Ld), jnp.float32), k=1)
    self_attn_mask = jnp.broadcast_to(causal, (B, Ld, Ld))
    enc_attn_mask = jnp.zeros((B, Ld, Le), jnp.float32)

    params = init_params(k_par, d_model, d_ff, n_heads, d_k, d_v)

    dec_out, self_attn, cross_attn = decoder_layer2(
        dec_inputs, enc_outputs, self_attn_mask, enc_attn_mask, params,
        n_heads=n_heads, d_k=d_k, d_v=d_v)
    jax.block_until_ready((dec_out, self_attn, cross_attn))

    assert dec_out.shape == (B, Ld, d_model)
    assert self_attn.shape == (B, n_heads, Ld, Ld)
    assert cross_attn.shape == (B, n_heads, Ld, Le)
    assert bool(jnp.isfinite(dec_out).all())
    assert bool(jnp.isfinite(self_attn).all())
    assert bool(jnp.isfinite(cross_attn).all())
    print("KERNEL_OK")
</pallas_src>

<mosaic_0001>
module attributes {stable_mosaic.version = 11 : i64} {
  func.func @kernel(%arg0: i32, %arg1: i32, %arg2: memref<1x8x32xf32, #tpu.memory_space<vmem>>, %arg3: memref<1x8x32xf32, #tpu.memory_space<vmem>>, %arg4: memref<1x8x32xf32, #tpu.memory_space<vmem>>, %arg5: memref<1x8x8xf32, #tpu.memory_space<vmem>>, %arg6: memref<1x8x8xf32, #tpu.memory_space<vmem>>, %arg7: memref<32x32xbf16, #tpu.memory_space<vmem>>, %arg8: memref<32x32xbf16, #tpu.memory_space<vmem>>, %arg9: memref<32x32xbf16, #tpu.memory_space<vmem>>, %arg10: memref<32x32xbf16, #tpu.memory_space<vmem>>, %arg11: memref<32x32xbf16, #tpu.memory_space<vmem>>, %arg12: memref<32x32xbf16, #tpu.memory_space<vmem>>, %arg13: memref<32x32xbf16, #tpu.memory_space<vmem>>, %arg14: memref<32x64xbf16, #tpu.memory_space<vmem>>, %arg15: memref<64x32xbf16, #tpu.memory_space<vmem>>, %arg16: memref<1x32xf32, #tpu.memory_space<vmem>>, %arg17: memref<1x32xf32, #tpu.memory_space<vmem>>, %arg18: memref<1x32xf32, #tpu.memory_space<vmem>>, %arg19: memref<1x32xf32, #tpu.memory_space<vmem>>, %arg20: memref<1x8x32xf32, #tpu.memory_space<vmem>>, %arg21: memref<1x4x8x8xf32, #tpu.memory_space<vmem>>, %arg22: memref<1x4x8x8xf32, #tpu.memory_space<vmem>>) attributes {dimension_semantics = [#tpu.dimension_semantics<parallel>, #tpu.dimension_semantics<parallel>], iteration_bounds = array<i64: 2, 1>, scalar_prefetch = 0 : i64, scratch_operands = 0 : i64, tpu.core_type = #tpu.core_type<tc>, window_params = [{transform_indices = @transform_0, window_bounds = array<i64: 1, 8, 32>}, {transform_indices = @transform_1, window_bounds = array<i64: 1, 8, 32>}, {transform_indices = @transform_2, window_bounds = array<i64: 1, 8, 32>}, {transform_indices = @transform_3, window_bounds = array<i64: 1, 8, 8>}, {transform_indices = @transform_4, window_bounds = array<i64: 1, 8, 8>}, {pipeline_mode = #tpu.pipeline_mode<synchronous>, transform_indices = @transform_5, window_bounds = array<i64: 32, 32>}, {pipeline_mode = #tpu.pipeline_mode<synchronous>, transform_indices = @transform_6, window_bounds = array<i64: 32, 32>}, {pipeline_mode = #tpu.pipeline_mode<synchronous>, transform_indices = @transform_7, window_bounds = array<i64: 32, 32>}, {pipeline_mode = #tpu.pipeline_mode<synchronous>, transform_indices = @transform_8, window_bounds = array<i64: 32, 32>}, {pipeline_mode = #tpu.pipeline_mode<synchronous>, transform_indices = @transform_9, window_bounds = array<i64: 32, 32>}, {pipeline_mode = #tpu.pipeline_mode<synchronous>, transform_indices = @transform_10, window_bounds = array<i64: 32, 32>}, {pipeline_mode = #tpu.pipeline_mode<synchronous>, transform_indices = @transform_11, window_bounds = array<i64: 32, 32>}, {pipeline_mode = #tpu.pipeline_mode<synchronous>, transform_indices = @transform_12, window_bounds = array<i64: 32, 64>}, {pipeline_mode = #tpu.pipeline_mode<synchronous>, transform_indices = @transform_13, window_bounds = array<i64: 64, 32>}, {pipeline_mode = #tpu.pipeline_mode<synchronous>, transform_indices = @transform_14, window_bounds = array<i64: 1, 32>}, {pipeline_mode = #tpu.pipeline_mode<synchronous>, transform_indices = @transform_15, window_bounds = array<i64: 1, 32>}, {pipeline_mode = #tpu.pipeline_mode<synchronous>, transform_indices = @transform_16, window_bounds = array<i64: 1, 32>}, {pipeline_mode = #tpu.pipeline_mode<synchronous>, transform_indices = @transform_17, window_bounds = array<i64: 1, 32>}, {transform_indices = @transform_18, window_bounds = array<i64: 1, 8, 32>}, {transform_indices = @transform_19, window_bounds = array<i64: 1, 4, 8, 8>}, {transform_indices = @transform_20, window_bounds = array<i64: 1, 4, 8, 8>}]} {
    %c0 = arith.constant 0 : index
    %c0_0 = arith.constant 0 : index
    %c0_1 = arith.constant 0 : index
    %0 = vector.load %arg2[%c0, %c0_0, %c0_1] : memref<1x8x32xf32, #tpu.memory_space<vmem>>, vector<1x8x32xf32>
    %1 = vector.shape_cast %0 : vector<1x8x32xf32> to vector<8x32xf32>
    %c0_2 = arith.constant 0 : index
    %c0_3 = arith.constant 0 : index
    %c0_4 = arith.constant 0 : index
    %2 = vector.load %arg3[%c0_2, %c0_3, %c0_4] : memref<1x8x32xf32, #tpu.memory_space<vmem>>, vector<1x8x32xf32>
    %3 = vector.shape_cast %2 : vector<1x8x32xf32> to vector<8x32xf32>
    %c0_5 = arith.constant 0 : index
    %c0_6 = arith.constant 0 : index
    %c0_7 = arith.constant 0 : index
    %4 = vector.load %arg4[%c0_5, %c0_6, %c0_7] : memref<1x8x32xf32, #tpu.memory_space<vmem>>, vector<1x8x32xf32>
    %5 = vector.shape_cast %4 : vector<1x8x32xf32> to vector<8x32xf32>
    %c0_8 = arith.constant 0 : index
    %c0_9 = arith.constant 0 : index
    %c0_10 = arith.constant 0 : index
    %6 = vector.load %arg5[%c0_8, %c0_9, %c0_10] : memref<1x8x8xf32, #tpu.memory_space<vmem>>, vector<1x8x8xf32>
    %7 = vector.shape_cast %6 : vector<1x8x8xf32> to vector<8x8xf32>
    %c0_11 = arith.constant 0 : index
    %c0_12 = arith.constant 0 : index
    %c0_13 = arith.constant 0 : index
    %8 = vector.load %arg6[%c0_11, %c0_12, %c0_13] : memref<1x8x8xf32, #tpu.memory_space<vmem>>, vector<1x8x8xf32>
    %9 = vector.shape_cast %8 : vector<1x8x8xf32> to vector<8x8xf32>
    %10 = arith.truncf %1 : vector<8x32xf32> to vector<8x32xbf16>
    %11 = arith.truncf %3 : vector<8x32xf32> to vector<8x32xbf16>
    %12 = arith.truncf %5 : vector<8x32xf32> to vector<8x32xbf16>
    %c0_14 = arith.constant 0 : index
    %c0_15 = arith.constant 0 : index
    %13 = vector.load %arg7[%c0_14, %c0_15] : memref<32x32xbf16, #tpu.memory_space<vmem>>, vector<32x32xbf16>
    %cst = arith.constant dense<0.000000e+00> : vector<8x32xf32>
    %14 = tpu.matmul %10, %13, %cst {dimension_numbers = #tpu.dot_dimension_numbers<[1], [0], [0], [1], [0, 0, 1, 1], [], []>} : vector<8x32xbf16>, vector<32x32xbf16>, vector<8x32xf32> -> vector<8x32xf32>
    %cst_16 = arith.constant 0.353553385 : f32
    %15 = vector.broadcast %cst_16 : f32 to vector<8x32xf32>
    %16 = arith.mulf %14, %15 : vector<8x32xf32>
    %c0_17 = arith.constant 0 : index
    %c0_18 = arith.constant 0 : index
    %17 = vector.load %arg8[%c0_17, %c0_18] : memref<32x32xbf16, #tpu.memory_space<vmem>>, vector<32x32xbf16>
    %cst_19 = arith.constant dense<0.000000e+00> : vector<8x32xf32>
    %18 = tpu.matmul %11, %17, %cst_19 {dimension_numbers = #tpu.dot_dimension_numbers<[1], [0], [0], [1], [0, 0, 1, 1], [], []>} : vector<8x32xbf16>, vector<32x32xbf16>, vector<8x32xf32> -> vector<8x32xf32>
    %c0_20 = arith.constant 0 : index
    %c0_21 = arith.constant 0 : index
    %19 = vector.load %arg9[%c0_20, %c0_21] : memref<32x32xbf16, #tpu.memory_space<vmem>>, vector<32x32xbf16>
    %cst_22 = arith.constant dense<0.000000e+00> : vector<8x32xf32>
    %20 = tpu.matmul %11, %19, %cst_22 {dimension_numbers = #tpu.dot_dimension_numbers<[1], [0], [0], [1], [0, 0, 1, 1], [], []>} : vector<8x32xbf16>, vector<32x32xbf16>, vector<8x32xf32> -> vector<8x32xf32>
    %21 = vector.extract_strided_slice %16 {offsets = [0, 0], sizes = [8, 8], strides = [1, 1]} : vector<8x32xf32> to vector<8x8xf32>
    %22 = vector.extract_strided_slice %16 {offsets = [0, 8], sizes = [8, 8], strides = [1, 1]} : vector<8x32xf32> to vector<8x8xf32>
    %23 = vector.extract_strided_slice %16 {offsets = [0, 16], sizes = [8, 8], strides = [1, 1]} : vector<8x32xf32> to vector<8x8xf32>
    %24 = vector.extract_strided_slice %16 {offsets = [0, 24], sizes = [8, 8], strides = [1, 1]} : vector<8x32xf32> to vector<8x8xf32>
    %25 = vector.shape_cast %21 : vector<8x8xf32> to vector<1x8x8xf32>
    %26 = vector.shape_cast %22 : vector<8x8xf32> to vector<1x8x8xf32>
    %27 = vector.shape_cast %23 : vector<8x8xf32> to vector<1x8x8xf32>
    %28 = vector.shape_cast %24 : vector<8x8xf32> to vector<1x8x8xf32>
    %29 = tpu.concatenate %25, %26, %27, %28 in 0 : vector<1x8x8xf32>, vector<1x8x8xf32>, vector<1x8x8xf32>, vector<1x8x8xf32> -> vector<4x8x8xf32>
    %30 = arith.truncf %29 : vector<4x8x8xf32> to vector<4x8x8xbf16>
    %31 = vector.extract_strided_slice %18 {offsets = [0, 0], sizes = [8, 8], strides = [1, 1]} : vector<8x32xf32> to vector<8x8xf32>
    %32 = vector.extract_strided_slice %18 {offsets = [0, 8], sizes = [8, 8], strides = [1, 1]} : vector<8x32xf32> to vector<8x8xf32>
    %33 = vector.extract_strided_slice %18 {offsets = [0, 16], sizes = [8, 8], strides = [1, 1]} : vector<8x32xf32> to vector<8x8xf32>
    %34 = vector.extract_strided_slice %18 {offsets = [0, 24], sizes = [8, 8], strides = [1, 1]} : vector<8x32xf32> to vector<8x8xf32>
    %35 = vector.shape_cast %31 : vector<8x8xf32> to vector<1x8x8xf32>
    %36 = vector.shape_cast %32 : vector<8x8xf32> to vector<1x8x8xf32>
    %37 = vector.shape_cast %33 : vector<8x8xf32> to vector<1x8x8xf32>
    %38 = vector.shape_cast %34 : vector<8x8xf32> to vector<1x8x8xf32>
    %39 = tpu.concatenate %35, %36, %37, %38 in 0 : vector<1x8x8xf32>, vector<1x8x8xf32>, vector<1x8x8xf32>, vector<1x8x8xf32> -> vector<4x8x8xf32>
    %40 = arith.truncf %39 : vector<4x8x8xf32> to vector<4x8x8xbf16>
    %41 = vector.extract_strided_slice %20 {offsets = [0, 0], sizes = [8, 8], strides = [1, 1]} : vector<8x32xf32> to vector<8x8xf32>
    %42 = vector.extract_strided_slice %20 {offsets = [0, 8], sizes = [8, 8], strides = [1, 1]} : vector<8x32xf32> to vector<8x8xf32>
    %43 = vector.extract_strided_slice %20 {offsets = [0, 16], sizes = [8, 8], strides = [1, 1]} : vector<8x32xf32> to vector<8x8xf32>
    %44 = vector.extract_strided_slice %20 {offsets = [0, 24], sizes = [8, 8], strides = [1, 1]} : vector<8x32xf32> to vector<8x8xf32>
    %45 = vector.shape_cast %41 : vector<8x8xf32> to vector<1x8x8xf32>
    %46 = vector.shape_cast %42 : vector<8x8xf32> to vector<1x8x8xf32>
    %47 = vector.shape_cast %43 : vector<8x8xf32> to vector<1x8x8xf32>
    %48 = vector.shape_cast %44 : vector<8x8xf32> to vector<1x8x8xf32>
    %49 = tpu.concatenate %45, %46, %47, %48 in 0 : vector<1x8x8xf32>, vector<1x8x8xf32>, vector<1x8x8xf32>, vector<1x8x8xf32> -> vector<4x8x8xf32>
    %50 = arith.truncf %49 : vector<4x8x8xf32> to vector<4x8x8xbf16>
    "tpu.trace_start"() <{level = 10 : i32, message = "hqd,hkd->hqk"}> : () -> ()
    %cst_23 = arith.constant dense<0.000000e+00> : vector<4x8x8xf32>
    %51 = tpu.matmul %30, %40, %cst_23 {dimension_numbers = #tpu.dot_dimension_numbers<[2], [2], [1], [1], [0, 0, 0, 1, 1, 1], [0], [0]>} : vector<4x8x8xbf16>, vector<4x8x8xbf16>, vector<4x8x8xf32> -> vector<4x8x8xf32>
    "tpu.trace_stop"() : () -> ()
    %52 = vector.shape_cast %7 : vector<8x8xf32> to vector<1x8x8xf32>
    %53 = vector.broadcast %52 : vector<1x8x8xf32> to vector<4x8x8xf32>
    %54 = arith.addf %51, %53 : vector<4x8x8xf32>
    %cst_24 = arith.constant dense<0xFF800000> : vector<4x8xf32>
    %55 = vector.multi_reduction <maximumf>, %54, %cst_24 [2] : vector<4x8x8xf32> to vector<4x8xf32>
    %56 = vector.shape_cast %55 : vector<4x8xf32> to vector<4x8x1xf32>
    %57 = vector.broadcast %56 : vector<4x8x1xf32> to vector<4x8x8xf32>
    %58 = arith.subf %54, %57 : vector<4x8x8xf32>
    %59 = math.exp %58 : vector<4x8x8xf32>
    %cst_25 = arith.constant dense<0.000000e+00> : vector<4x8xf32>
    %60 = vector.multi_reduction <add>, %59, %cst_25 [2] : vector<4x8x8xf32> to vector<4x8xf32>
    %61 = vector.shape_cast %60 : vector<4x8xf32> to vector<4x8x1xf32>
    %62 = tpu.reciprocal %61 {approx = true} : vector<4x8x1xf32> -> vector<4x8x1xf32>
    %63 = vector.broadcast %62 : vector<4x8x1xf32> to vector<4x8x8xf32>
    %64 = arith.mulf %59, %63 : vector<4x8x8xf32>
    %c0_26 = arith.constant 0 : index
    %c0_27 = arith.constant 0 : index
    %c0_28 = arith.constant 0 : index
    %c0_29 = arith.constant 0 : index
    %65 = vector.load %arg21[%c0_26, %c0_27, %c0_28, %c0_29] : memref<1x4x8x8xf32, #tpu.memory_space<vmem>>, vector<1x4x8x8xf32>
    %66 = vector.shape_cast %65 : vector<1x4x8x8xf32> to vector<4x8x8xf32>
    %67 = vector.shape_cast %64 : vector<4x8x8xf32> to vector<1x4x8x8xf32>
    tpu.vector_store %arg21[%c0_26, %c0_27, %c0_28, %c0_29], %67 {strides = array<i32>} : memref<1x4x8x8xf32, #tpu.memory_space<vmem>>, vector<1x4x8x8xf32>,
    %68 = arith.truncf %64 : vector<4x8x8xf32> to vector<4x8x8xbf16>
    "tpu.trace_start"() <{level = 10 : i32, message = "hqk,hkd->hqd"}> : () -> ()
    %cst_30 = arith.constant dense<0.000000e+00> : vector<4x8x8xf32>
    %69 = tpu.matmul %68, %50, %cst_30 {dimension_numbers = #tpu.dot_dimension_numbers<[2], [1], [1], [2], [0, 0, 0, 1, 1, 2], [0], [0]>} : vector<4x8x8xbf16>, vector<4x8x8xbf16>, vector<4x8x8xf32> -> vector<4x8x8xf32>
    "tpu.trace_stop"() : () -> ()
    %70 = vector.extract_strided_slice %69 {offsets = [0, 0, 0], sizes = [1, 8, 8], strides = [1, 1, 1]} : vector<4x8x8xf32> to vector<1x8x8xf32>
    %71 = vector.shape_cast %70 : vector<1x8x8xf32> to vector<8x8xf32>
    %72 = vector.extract_strided_slice %69 {offsets = [1, 0, 0], sizes = [1, 8, 8], strides = [1, 1, 1]} : vector<4x8x8xf32> to vector<1x8x8xf32>
    %73 = vector.shape_cast %72 : vector<1x8x8xf32> to vector<8x8xf32>
    %74 = vector.extract_strided_slice %69 {offsets = [2, 0, 0], sizes = [1, 8, 8], strides = [1, 1, 1]} : vector<4x8x8xf32> to vector<1x8x8xf32>
    %75 = vector.shape_cast %74 : vector<1x8x8xf32> to vector<8x8xf32>
    %76 = vector.extract_strided_slice %69 {offsets = [3, 0, 0], sizes = [1, 8, 8], strides = [1, 1, 1]} : vector<4x8x8xf32> to vector<1x8x8xf32>
    %77 = vector.shape_cast %76 : vector<1x8x8xf32> to vector<8x8xf32>
    %78 = tpu.concatenate %71, %73, %75, %77 in 1 : vector<8x8xf32>, vector<8x8xf32>, vector<8x8xf32>, vector<8x8xf32> -> vector<8x32xf32>
    %79 = arith.truncf %78 : vector<8x32xf32> to vector<8x32xbf16>
    %c0_31 = arith.constant 0 : index
    %c0_32 = arith.constant 0 : index
    %80 = vector.load %arg10[%c0_31, %c0_32] : memref<32x32xbf16, #tpu.memory_space<vmem>>, vector<32x32xbf16>
    %cst_33 = arith.constant dense<0.000000e+00> : vector<8x32xf32>
    %81 = tpu.matmul %79, %80, %cst_33 {dimension_numbers = #tpu.dot_dimension_numbers<[1], [0], [0], [1], [0, 0, 1, 1], [], []>} : vector<8x32xbf16>, vector<32x32xbf16>, vector<8x32xf32> -> vector<8x32xf32>
    %cst_34 = arith.constant 0.353553385 : f32
    %82 = vector.broadcast %cst_34 : f32 to vector<8x32xf32>
    %83 = arith.mulf %81, %82 : vector<8x32xf32>
    %c0_35 = arith.constant 0 : index
    %c0_36 = arith.constant 0 : index
    %84 = vector.load %arg11[%c0_35, %c0_36] : memref<32x32xbf16, #tpu.memory_space<vmem>>, vector<32x32xbf16>
    %cst_37 = arith.constant dense<0.000000e+00> : vector<8x32xf32>
    %85 = tpu.matmul %12, %84, %cst_37 {dimension_numbers = #tpu.dot_dimension_numbers<[1], [0], [0], [1], [0, 0, 1, 1], [], []>} : vector<8x32xbf16>, vector<32x32xbf16>, vector<8x32xf32> -> vector<8x32xf32>
    %c0_38 = arith.constant 0 : index
    %c0_39 = arith.constant 0 : index
    %86 = vector.load %arg12[%c0_38, %c0_39] : memref<32x32xbf16, #tpu.memory_space<vmem>>, vector<32x32xbf16>
    %cst_40 = arith.constant dense<0.000000e+00> : vector<8x32xf32>
    %87 = tpu.matmul %12, %86, %cst_40 {dimension_numbers = #tpu.dot_dimension_numbers<[1], [0], [0], [1], [0, 0, 1, 1], [], []>} : vector<8x32xbf16>, vector<32x32xbf16>, vector<8x32xf32> -> vector<8x32xf32>
    %88 = vector.extract_strided_slice %83 {offsets = [0, 0], sizes = [8, 8], strides = [1, 1]} : vector<8x32xf32> to vector<8x8xf32>
    %89 = vector.extract_strided_slice %83 {offsets = [0, 8], sizes = [8, 8], strides = [1, 1]} : vector<8x32xf32> to vector<8x8xf32>
    %90 = vector.extract_strided_slice %83 {offsets = [0, 16], sizes = [8, 8], strides = [1, 1]} : vector<8x32xf32> to vector<8x8xf32>
    %91 = vector.extract_strided_slice %83 {offsets = [0, 24], sizes = [8, 8], strides = [1, 1]} : vector<8x32xf32> to vector<8x8xf32>
    %92 = vector.shape_cast %88 : vector<8x8xf32> to vector<1x8x8xf32>
    %93 = vector.shape_cast %89 : vector<8x8xf32> to vector<1x8x8xf32>
    %94 = vector.shape_cast %90 : vector<8x8xf32> to vector<1x8x8xf32>
    %95 = vector.shape_cast %91 : vector<8x8xf32> to vector<1x8x8xf32>
    %96 = tpu.concatenate %92, %93, %94, %95 in 0 : vector<1x8x8xf32>, vector<1x8x8xf32>, vector<1x8x8xf32>, vector<1x8x8xf32> -> vector<4x8x8xf32>
    %97 = arith.truncf %96 : vector<4x8x8xf32> to vector<4x8x8xbf16>
    %98 = vector.extract_strided_slice %85 {offsets = [0, 0], sizes = [8, 8], strides = [1, 1]} : vector<8x32xf32> to vector<8x8xf32>
    %99 = vector.extract_strided_slice %85 {offsets = [0, 8], sizes = [8, 8], strides = [1, 1]} : vector<8x32xf32> to vector<8x8xf32>
    %100 = vector.extract_strided_slice %85 {offsets = [0, 16], sizes = [8, 8], strides = [1, 1]} : vector<8x32xf32> to vector<8x8xf32>
    %101 = vector.extract_strided_slice %85 {offsets = [0, 24], sizes = [8, 8], strides = [1, 1]} : vector<8x32xf32> to vector<8x8xf32>
    %102 = vector.shape_cast %98 : vector<8x8xf32> to vector<1x8x8xf32>
    %103 = vector.shape_cast %99 : vector<8x8xf32> to vector<1x8x8xf32>
    %104 = vector.shape_cast %100 : vector<8x8xf32> to vector<1x8x8xf32>
    %105 = vector.shape_cast %101 : vector<8x8xf32> to vector<1x8x8xf32>
    %106 = tpu.concatenate %102, %103, %104, %105 in 0 : vector<1x8x8xf32>, vector<1x8x8xf32>, vector<1x8x8xf32>, vector<1x8x8xf32> -> vector<4x8x8xf32>
    %107 = arith.truncf %106 : vector<4x8x8xf32> to vector<4x8x8xbf16>
    %108 = vector.extract_strided_slice %87 {offsets = [0, 0], sizes = [8, 8], strides = [1, 1]} : vector<8x32xf32> to vector<8x8xf32>
    %109 = vector.extract_strided_slice %87 {offsets = [0, 8], sizes = [8, 8], strides = [1, 1]} : vector<8x32xf32> to vector<8x8xf32>
    %110 = vector.extract_strided_slice %87 {offsets = [0, 16], sizes = [8, 8], strides = [1, 1]} : vector<8x32xf32> to vector<8x8xf32>
    %111 = vector.extract_strided_slice %87 {offsets = [0, 24], sizes = [8, 8], strides = [1, 1]} : vector<8x32xf32> to vector<8x8xf32>
    %112 = vector.shape_cast %108 : vector<8x8xf32> to vector<1x8x8xf32>
    %113 = vector.shape_cast %109 : vector<8x8xf32> to vector<1x8x8xf32>
    %114 = vector.shape_cast %110 : vector<8x8xf32> to vector<1x8x8xf32>
    %115 = vector.shape_cast %111 : vector<8x8xf32> to vector<1x8x8xf32>
    %116 = tpu.concatenate %112, %113, %114, %115 in 0 : vector<1x8x8xf32>, vector<1x8x8xf32>, vector<1x8x8xf32>, vector<1x8x8xf32> -> vector<4x8x8xf32>
    %117 = arith.truncf %116 : vector<4x8x8xf32> to vector<4x8x8xbf16>
    "tpu.trace_start"() <{level = 10 : i32, message = "hqd,hkd->hqk"}> : () -> ()
    %cst_41 = arith.constant dense<0.000000e+00> : vector<4x8x8xf32>
    %118 = tpu.matmul %97, %107, %cst_41 {dimension_numbers = #tpu.dot_dimension_numbers<[2], [2], [1], [1], [0, 0, 0, 1, 1, 1], [0], [0]>} : vector<4x8x8xbf16>, vector<4x8x8xbf16>, vector<4x8x8xf32> -> vector<4x8x8xf32>
    "tpu.trace_stop"() : () -> ()
    %119 = vector.shape_cast %9 : vector<8x8xf32> to vector<1x8x8xf32>
    %120 = vector.broadcast %119 : vector<1x8x8xf32> to vector<4x8x8xf32>
    %121 = arith.addf %118, %120 : vector<4x8x8xf32>
    %cst_42 = arith.constant dense<0xFF800000> : vector<4x8xf32>
    %122 = vector.multi_reduction <maximumf>, %121, %cst_42 [2] : vector<4x8x8xf32> to vector<4x8xf32>
    %123 = vector.shape_cast %122 : vector<4x8xf32> to vector<4x8x1xf32>
    %124 = vector.broadcast %123 : vector<4x8x1xf32> to vector<4x8x8xf32>
    %125 = arith.subf %121, %124 : vector<4x8x8xf32>
    %126 = math.exp %125 : vector<4x8x8xf32>
    %cst_43 = arith.constant dense<0.000000e+00> : vector<4x8xf32>
    %127 = vector.multi_reduction <add>, %126, %cst_43 [2] : vector<4x8x8xf32> to vector<4x8xf32>
    %128 = vector.shape_cast %127 : vector<4x8xf32> to vector<4x8x1xf32>
    %129 = tpu.reciprocal %128 {approx = true} : vector<4x8x1xf32> -> vector<4x8x1xf32>
    %130 = vector.broadcast %129 : vector<4x8x1xf32> to vector<4x8x8xf32>
    %131 = arith.mulf %126, %130 : vector<4x8x8xf32>
    %c0_44 = arith.constant 0 : index
    %c0_45 = arith.constant 0 : index
    %c0_46 = arith.constant 0 : index
    %c0_47 = arith.constant 0 : index
    %132 = vector.load %arg22[%c0_44, %c0_45, %c0_46, %c0_47] : memref<1x4x8x8xf32, #tpu.memory_space<vmem>>, vector<1x4x8x8xf32>
    %133 = vector.shape_cast %132 : vector<1x4x8x8xf32> to vector<4x8x8xf32>
    %134 = vector.shape_cast %131 : vector<4x8x8xf32> to vector<1x4x8x8xf32>
    tpu.vector_store %arg22[%c0_44, %c0_45, %c0_46, %c0_47], %134 {strides = array<i32>} : memref<1x4x8x8xf32, #tpu.memory_space<vmem>>, vector<1x4x8x8xf32>,
    %135 = arith.truncf %131 : vector<4x8x8xf32> to vector<4x8x8xbf16>
    "tpu.trace_start"() <{level = 10 : i32, message = "hqk,hkd->hqd"}> : () -> ()
    %cst_48 = arith.constant dense<0.000000e+00> : vector<4x8x8xf32>
    %136 = tpu.matmul %135, %117, %cst_48 {dimension_numbers = #tpu.dot_dimension_numbers<[2], [1], [1], [2], [0, 0, 0, 1, 1, 2], [0], [0]>} : vector<4x8x8xbf16>, vector<4x8x8xbf16>, vector<4x8x8xf32> -> vector<4x8x8xf32>
    "tpu.trace_stop"() : () -> ()
    %137 = vector.extract_strided_slice %136 {offsets = [0, 0, 0], sizes = [1, 8, 8], strides = [1, 1, 1]} : vector<4x8x8xf32> to vector<1x8x8xf32>
    %138 = vector.shape_cast %137 : vector<1x8x8xf32> to vector<8x8xf32>
    %139 = vector.extract_strided_slice %136 {offsets = [1, 0, 0], sizes = [1, 8, 8], strides = [1, 1, 1]} : vector<4x8x8xf32> to vector<1x8x8xf32>
    %140 = vector.shape_cast %139 : vector<1x8x8xf32> to vector<8x8xf32>
    %141 = vector.extract_strided_slice %136 {offsets = [2, 0, 0], sizes = [1, 8, 8], strides = [1, 1, 1]} : vector<4x8x8xf32> to vector<1x8x8xf32>
    %142 = vector.shape_cast %141 : vector<1x8x8xf32> to vector<8x8xf32>
    %143 = vector.extract_strided_slice %136 {offsets = [3, 0, 0], sizes = [1, 8, 8], strides = [1, 1, 1]} : vector<4x8x8xf32> to vector<1x8x8xf32>
    %144 = vector.shape_cast %143 : vector<1x8x8xf32> to vector<8x8xf32>
    %145 = tpu.concatenate %138, %140, %142, %144 in 1 : vector<8x8xf32>, vector<8x8xf32>, vector<8x8xf32>, vector<8x8xf32> -> vector<8x32xf32>
    %146 = arith.truncf %145 : vector<8x32xf32> to vector<8x32xbf16>
    %c0_49 = arith.constant 0 : index
    %c0_50 = arith.constant 0 : index
    %147 = vector.load %arg13[%c0_49, %c0_50] : memref<32x32xbf16, #tpu.memory_space<vmem>>, vector<32x32xbf16>
    %cst_51 = arith.constant dense<0.000000e+00> : vector<8x32xf32>
    %148 = tpu.matmul %146, %147, %cst_51 {dimension_numbers = #tpu.dot_dimension_numbers<[1], [0], [0], [1], [0, 0, 1, 1], [], []>} : vector<8x32xbf16>, vector<32x32xbf16>, vector<8x32xf32> -> vector<8x32xf32>
    %149 = arith.addf %1, %148 : vector<8x32xf32>
    %c0_52 = arith.constant 0 : index
    %c0_53 = arith.constant 0 : index
    %150 = vector.load %arg16[%c0_52, %c0_53] : memref<1x32xf32, #tpu.memory_space<vmem>>, vector<1x32xf32>
    %c0_54 = arith.constant 0 : index
    %c0_55 = arith.constant 0 : index
    %151 = vector.load %arg17[%c0_54, %c0_55] : memref<1x32xf32, #tpu.memory_space<vmem>>, vector<1x32xf32>
    %cst_56 = arith.constant dense<0.000000e+00> : vector<8xf32>
    %152 = vector.multi_reduction <add>, %149, %cst_56 [1] : vector<8x32xf32> to vector<8xf32>
    %153 = vector.shape_cast %152 : vector<8xf32> to vector<8x1xf32>
    %cst_57 = arith.constant 3.200000e+01 : f32
    %154 = vector.broadcast %cst_57 : f32 to vector<8x1xf32>
    %155 = arith.divf %153, %154 : vector<8x1xf32>
    %156 = vector.broadcast %155 : vector<8x1xf32> to vector<8x32xf32>
    %157 = arith.subf %149, %156 : vector<8x32xf32>
    %158 = arith.mulf %157, %157 : vector<8x32xf32>
    %cst_58 = arith.constant dense<0.000000e+00> : vector<8xf32>
    %159 = vector.multi_reduction <add>, %158, %cst_58 [1] : vector<8x32xf32> to vector<8xf32>
    %160 = vector.shape_cast %159 : vector<8xf32> to vector<8x1xf32>
    %cst_59 = arith.constant 3.200000e+01 : f32
    %161 = vector.broadcast %cst_59 : f32 to vector<8x1xf32>
    %162 = arith.divf %160, %161 : vector<8x1xf32>
    %163 = vector.broadcast %155 : vector<8x1xf32> to vector<8x32xf32>
    %164 = arith.subf %149, %163 : vector<8x32xf32>
    %cst_60 = arith.constant 9.99999974E-6 : f32
    %165 = vector.broadcast %cst_60 : f32 to vector<8x1xf32>
    %166 = arith.addf %162, %165 : vector<8x1xf32>
    %167 = math.rsqrt %166 : vector<8x1xf32>
    %168 = vector.broadcast %167 : vector<8x1xf32> to vector<8x32xf32>
    %169 = arith.mulf %164, %168 : vector<8x32xf32>
    %170 = vector.broadcast %150 : vector<1x32xf32> to vector<8x32xf32>
    %171 = arith.mulf %169, %170 : vector<8x32xf32>
    %172 = vector.broadcast %151 : vector<1x32xf32> to vector<8x32xf32>
    %173 = arith.addf %171, %172 : vector<8x32xf32>
    %174 = arith.truncf %173 : vector<8x32xf32> to vector<8x32xbf16>
    %c0_61 = arith.constant 0 : index
    %c0_62 = arith.constant 0 : index
    %175 = vector.load %arg14[%c0_61, %c0_62] : memref<32x64xbf16, #tpu.memory_space<vmem>>, vector<32x64xbf16>
    %cst_63 = arith.constant dense<0.000000e+00> : vector<8x64xf32>
    %176 = tpu.matmul %174, %175, %cst_63 {dimension_numbers = #tpu.dot_dimension_numbers<[1], [0], [0], [1], [0, 0, 1, 1], [], []>} : vector<8x32xbf16>, vector<32x64xbf16>, vector<8x64xf32> -> vector<8x64xf32>
    %cst_64 = arith.constant 0.000000e+00 : f32
    %177 = vector.broadcast %cst_64 : f32 to vector<8x64xf32>
    %178 = arith.maximumf %176, %177 : vector<8x64xf32>
    %179 = arith.truncf %178 : vector<8x64xf32> to vector<8x64xbf16>
    %c0_65 = arith.constant 0 : index
    %c0_66 = arith.constant 0 : index
    %180 = vector.load %arg15[%c0_65, %c0_66] : memref<64x32xbf16, #tpu.memory_space<vmem>>, vector<64x32xbf16>
    %cst_67 = arith.constant dense<0.000000e+00> : vector<8x32xf32>
    %181 = tpu.matmul %179, %180, %cst_67 {dimension_numbers = #tpu.dot_dimension_numbers<[1], [0], [0], [1], [0, 0, 1, 1], [], []>} : vector<8x64xbf16>, vector<64x32xbf16>, vector<8x32xf32> -> vector<8x32xf32>
    %182 = arith.addf %173, %181 : vector<8x32xf32>
    %c0_68 = arith.constant 0 : index
    %c0_69 = arith.constant 0 : index
    %183 = vector.load %arg18[%c0_68, %c0_69] : memref<1x32xf32, #tpu.memory_space<vmem>>, vector<1x32xf32>
    %c0_70 = arith.constant 0 : index
    %c0_71 = arith.constant 0 : index
    %184 = vector.load %arg19[%c0_70, %c0_71] : memref<1x32xf32, #tpu.memory_space<vmem>>, vector<1x32xf32>
    %cst_72 = arith.constant dense<0.000000e+00> : vector<8xf32>
    %185 = vector.multi_reduction <add>, %182, %cst_72 [1] : vector<8x32xf32> to vector<8xf32>
    %186 = vector.shape_cast %185 : vector<8xf32> to vector<8x1xf32>
    %cst_73 = arith.constant 3.200000e+01 : f32
    %187 = vector.broadcast %cst_73 : f32 to vector<8x1xf32>
    %188 = arith.divf %186, %187 : vector<8x1xf32>
    %189 = vector.broadcast %188 : vector<8x1xf32> to vector<8x32xf32>
    %190 = arith.subf %182, %189 : vector<8x32xf32>
    %191 = arith.mulf %190, %190 : vector<8x32xf32>
    %cst_74 = arith.constant dense<0.000000e+00> : vector<8xf32>
    %192 = vector.multi_reduction <add>, %191, %cst_74 [1] : vector<8x32xf32> to vector<8xf32>
    %193 = vector.shape_cast %192 : vector<8xf32> to vector<8x1xf32>
    %cst_75 = arith.constant 3.200000e+01 : f32
    %194 = vector.broadcast %cst_75 : f32 to vector<8x1xf32>
    %195 = arith.divf %193, %194 : vector<8x1xf32>
    %196 = vector.broadcast %188 : vector<8x1xf32> to vector<8x32xf32>
    %197 = arith.subf %182, %196 : vector<8x32xf32>
    %cst_76 = arith.constant 9.99999974E-6 : f32
    %198 = vector.broadcast %cst_76 : f32 to vector<8x1xf32>
    %199 = arith.addf %195, %198 : vector<8x1xf32>
    %200 = math.rsqrt %199 : vector<8x1xf32>
    %201 = vector.broadcast %200 : vector<8x1xf32> to vector<8x32xf32>
    %202 = arith.mulf %197, %201 : vector<8x32xf32>
    %203 = vector.broadcast %183 : vector<1x32xf32> to vector<8x32xf32>
    %204 = arith.mulf %202, %203 : vector<8x32xf32>
    %205 = vector.broadcast %184 : vector<1x32xf32> to vector<8x32xf32>
    %206 = arith.addf %204, %205 : vector<8x32xf32>
    %c0_77 = arith.constant 0 : index
    %c0_78 = arith.constant 0 : index
    %c0_79 = arith.constant 0 : index
    %207 = vector.load %arg20[%c0_77, %c0_78, %c0_79] : memref<1x8x32xf32, #tpu.memory_space<vmem>>, vector<1x8x32xf32>
    %208 = vector.shape_cast %207 : vector<1x8x32xf32> to vector<8x32xf32>
    %209 = vector.shape_cast %206 : vector<8x32xf32> to vector<1x8x32xf32>
    tpu.vector_store %arg20[%c0_77, %c0_78, %c0_79], %209 {strides = array<i32>} : memref<1x8x32xf32, #tpu.memory_space<vmem>>, vector<1x8x32xf32>,
    return
  }
  func.func @transform_0(%arg0: i32, %arg1: i32) -> (i32, i32, i32) {
    %c0_i32 = arith.constant 0 : i32
    %c0_i32_0 = arith.constant 0 : i32
    return %arg0, %arg1, %c0_i32 : i32, i32, i32
  }
  func.func @transform_1(%arg0: i32, %arg1: i32) -> (i32, i32, i32) {
    %c0_i32 = arith.constant 0 : i32
    %c0_i32_0 = arith.constant 0 : i32
    %c0_i32_1 = arith.constant 0 : i32
    return %arg0, %c0_i32, %c0_i32_0 : i32, i32, i32
  }
  func.func @transform_2(%arg0: i32, %arg1: i32) -> (i32, i32, i32) {
    %c0_i32 = arith.constant 0 : i32
    %c0_i32_0 = arith.constant 0 : i32
    %c0_i32_1 = arith.constant 0 : i32
    return %arg0, %c0_i32, %c0_i32_0 : i32, i32, i32
  }
  func.func @transform_3(%arg0: i32, %arg1: i32) -> (i32, i32, i32) {
    %c0_i32 = arith.constant 0 : i32
    %c0_i32_0 = arith.constant 0 : i32
    return %arg0, %arg1, %c0_i32 : i32, i32, i32
  }
  func.func @transform_4(%arg0: i32, %arg1: i32) -> (i32, i32, i32) {
    %c0_i32 = arith.constant 0 : i32
    %c0_i32_0 = arith.constant 0 : i32
    return %arg0, %arg1, %c0_i32 : i32, i32, i32
  }
  func.func @transform_5(%arg0: i32, %arg1: i32) -> (i32, i32) {
    %c0_i32 = arith.constant 0 : i32
    %c0_i32_0 = arith.constant 0 : i32
    %c0_i32_1 = arith.constant 0 : i32
    return %c0_i32, %c0_i32_0 : i32, i32
  }
  func.func @transform_6(%arg0: i32, %arg1: i32) -> (i32, i32) {
    %c0_i32 = arith.constant 0 : i32
    %c0_i32_0 = arith.constant 0 : i32
    %c0_i32_1 = arith.constant 0 : i32
    return %c0_i32, %c0_i32_0 : i32, i32
  }
  func.func @transform_7(%arg0: i32, %arg1: i32) -> (i32, i32) {
    %c0_i32 = arith.constant 0 : i32
    %c0_i32_0 = arith.constant 0 : i32
    %c0_i32_1 = arith.constant 0 : i32
    return %c0_i32, %c0_i32_0 : i32, i32
  }
  func.func @transform_8(%arg0: i32, %arg1: i32) -> (i32, i32) {
    %c0_i32 = arith.constant 0 : i32
    %c0_i32_0 = arith.constant 0 : i32
    %c0_i32_1 = arith.constant 0 : i32
    return %c0_i32, %c0_i32_0 : i32, i32
  }
  func.func @transform_9(%arg0: i32, %arg1: i32) -> (i32, i32) {
    %c0_i32 = arith.constant 0 : i32
    %c0_i32_0 = arith.constant 0 : i32
    %c0_i32_1 = arith.constant 0 : i32
    return %c0_i32, %c0_i32_0 : i32, i32
  }
  func.func @transform_10(%arg0: i32, %arg1: i32) -> (i32, i32) {
    %c0_i32 = arith.constant 0 : i32
    %c0_i32_0 = arith.constant 0 : i32
    %c0_i32_1 = arith.constant 0 : i32
    return %c0_i32, %c0_i32_0 : i32, i32
  }
  func.func @transform_11(%arg0: i32, %arg1: i32) -> (i32, i32) {
    %c0_i32 = arith.constant 0 : i32
    %c0_i32_0 = arith.constant 0 : i32
    %c0_i32_1 = arith.constant 0 : i32
    return %c0_i32, %c0_i32_0 : i32, i32
  }
  func.func @transform_12(%arg0: i32, %arg1: i32) -> (i32, i32) {
    %c0_i32 = arith.constant 0 : i32
    %c0_i32_0 = arith.constant 0 : i32
    %c0_i32_1 = arith.constant 0 : i32
    return %c0_i32, %c0_i32_0 : i32, i32
  }
  func.func @transform_13(%arg0: i32, %arg1: i32) -> (i32, i32) {
    %c0_i32 = arith.constant 0 : i32
    %c0_i32_0 = arith.constant 0 : i32
    %c0_i32_1 = arith.constant 0 : i32
    return %c0_i32, %c0_i32_0 : i32, i32
  }
  func.func @transform_14(%arg0: i32, %arg1: i32) -> (i32, i32) {
    %c0_i32 = arith.constant 0 : i32
    %c0_i32_0 = arith.constant 0 : i32
    %c0_i32_1 = arith.constant 0 : i32
    return %c0_i32, %c0_i32_0 : i32, i32
  }
  func.func @transform_15(%arg0: i32, %arg1: i32) -> (i32, i32) {
    %c0_i32 = arith.constant 0 : i32
    %c0_i32_0 = arith.constant 0 : i32
    %c0_i32_1 = arith.constant 0 : i32
    return %c0_i32, %c0_i32_0 : i32, i32
  }
  func.func @transform_16(%arg0: i32, %arg1: i32) -> (i32, i32) {
    %c0_i32 = arith.constant 0 : i32
    %c0_i32_0 = arith.constant 0 : i32
    %c0_i32_1 = arith.constant 0 : i32
    return %c0_i32, %c0_i32_0 : i32, i32
  }
  func.func @transform_17(%arg0: i32, %arg1: i32) -> (i32, i32) {
    %c0_i32 = arith.constant 0 : i32
    %c0_i32_0 = arith.constant 0 : i32
    %c0_i32_1 = arith.constant 0 : i32
    return %c0_i32, %c0_i32_0 : i32, i32
  }
  func.func @transform_18(%arg0: i32, %arg1: i32) -> (i32, i32, i32) {
    %c0_i32 = arith.constant 0 : i32
    %c0_i32_0 = arith.constant 0 : i32
    return %arg0, %arg1, %c0_i32 : i32, i32, i32
  }
  func.func @transform_19(%arg0: i32, %arg1: i32) -> (i32, i32, i32, i32) {
    %c0_i32 = arith.constant 0 : i32
    %c0_i32_0 = arith.constant 0 : i32
    %c0_i32_1 = arith.constant 0 : i32
    return %arg0, %c0_i32, %arg1, %c0_i32_0 : i32, i32, i32, i32
  }
  func.func @transform_20(%arg0: i32, %arg1: i32) -> (i32, i32, i32, i32) {
    %c0_i32 = arith.constant 0 : i32
    %c0_i32_0 = arith.constant 0 : i32
    %c0_i32_1 = arith.constant 0 : i32
    return %arg0, %c0_i32, %arg1, %c0_i32_0 : i32, i32, i32, i32
  }
}

</mosaic_0001>

<llo_original>
// kernel: tpu_custom_call.1
$region0: #{tpu_custom_call.1}
  #allocation0 [shape = 'u32[]', space=smem, size = 0x4, offset = 0x4, fixed_abs, tag = 'smem constant byte address 0x4 - core index']
  #allocation1 [shape = 'u32[144,128]{1,0:T(1,128)}', space=vmem, size = 0x12000, scoped, tag = 'internal scratch']
  %s0 = inlined_call_operand.vmem [shape: f32[2,8,32], index: 0, kind: input, shape index: {}]
  %s1 = inlined_call_operand.vmem [shape: f32[2,8,32], index: 1, kind: input, shape index: {}]
  %s2 = inlined_call_operand.vmem [shape: f32[2,8,32], index: 2, kind: input, shape index: {}]
  %s3 = inlined_call_operand.hbm [shape: f32[2,8,8], index: 3, kind: input, shape index: {}]
  %s4 = inlined_call_operand.hbm [shape: f32[2,8,8], index: 4, kind: input, shape index: {}]
  %s5 = inlined_call_operand.hbm [shape: bf16[32,32], index: 5, kind: input, shape index: {}]
  %s6 = inlined_call_operand.hbm [shape: bf16[32,32], index: 6, kind: input, shape index: {}]
  %s7 = inlined_call_operand.hbm [shape: bf16[32,32], index: 7, kind: input, shape index: {}]
  %s8 = inlined_call_operand.hbm [shape: bf16[32,32], index: 8, kind: input, shape index: {}]
  %s9 = inlined_call_operand.hbm [shape: bf16[32,32], index: 9, kind: input, shape index: {}]
  %s10 = inlined_call_operand.hbm [shape: bf16[32,32], index: 10, kind: input, shape index: {}]
  %s11 = inlined_call_operand.hbm [shape: bf16[32,32], index: 11, kind: input, shape index: {}]
  %s12 = inlined_call_operand.hbm [shape: bf16[32,64], index: 12, kind: input, shape index: {}]
  %s13 = inlined_call_operand.vmem [shape: bf16[64,32], index: 13, kind: input, shape index: {}]
  %s14 = inlined_call_operand.vmem [shape: f32[1,32], index: 14, kind: input, shape index: {}]
  %s15 = inlined_call_operand.vmem [shape: f32[1,32], index: 15, kind: input, shape index: {}]
  %s16 = inlined_call_operand.vmem [shape: f32[1,32], index: 16, kind: input, shape index: {}]
  %s17 = inlined_call_operand.vmem [shape: f32[1,32], index: 17, kind: input, shape index: {}]
  %s18 = inlined_call_operand.hbm [shape: f32[2,8,32], index: 18, kind: output, shape index: {0}]
  %s19 = inlined_call_operand.hbm [shape: f32[2,4,8,8], index: 19, kind: output, shape index: {1}]
  %s20 = inlined_call_operand.hbm [shape: f32[2,4,8,8], index: 20, kind: output, shape index: {2}]
  %21 = xla_tuple %s18, %s19, %s20
  %s22 = sld [smem:[#allocation0]]
  $region161: #{tpu_custom_call.1} parent=0
    _
  %s24 = ssub.s32 1, %s22
  %s25 = scalar_select 0, %s24, %s22
  $region1: #{tpu_custom_call.1} parent=0
    #allocation2 [shape = 'u8[8192]{0}', space=vmem, size = 0x2000, scoped, tag = 'input window, operand 3']
    #allocation3 [shape = 's32[2]{0}', space=sflag, size = 0x8, scoped, tag = 'scoped memory for tpu_custom_call.1']
    #allocation4 [shape = 's32[2]{0}', space=sflag, size = 0x8, scoped, tag = 'scoped memory for tpu_custom_call.1']
    #allocation5 [shape = 'u8[8192]{0}', space=vmem, size = 0x2000, scoped, tag = 'input window, operand 4']
    #allocation6 [shape = 's32[2]{0}', space=sflag, size = 0x8, scoped, tag = 'scoped memory for tpu_custom_call.1']
    #allocation7 [shape = 'u8[8192]{0}', space=vmem, size = 0x2000, scoped, tag = 'input window, operand 5, single buffered']
    #allocation8 [shape = 'u8[8192]{0}', space=vmem, size = 0x2000, scoped, tag = 'input window, operand 6, single buffered']
    #allocation9 [shape = 's32[1]{0}', space=sflag, size = 0x4, scoped, tag = 'scoped memory for tpu_custom_call.1']
    #allocation10 [shape = 'u8[8192]{0}', space=vmem, size = 0x2000, scoped, tag = 'input window, operand 7, single buffered']
    #allocation11 [shape = 'u8[8192]{0}', space=vmem, size = 0x2000, scoped, tag = 'input window, operand 8, single buffered']
    #allocation12 [shape = 's32[1]{0}', space=sflag, size = 0x4, scoped, tag = 'scoped memory for tpu_custom_call.1']
    #allocation13 [shape = 'u8[8192]{0}', space=vmem, size = 0x2000, scoped, tag = 'input window, operand 9, single buffered']
    #allocation14 [shape = 'u8[8192]{0}', space=vmem, size = 0x2000, scoped, tag = 'input window, operand 10, single buffered']
    #allocation15 [shape = 's32[1]{0}', space=sflag, size = 0x4, scoped, tag = 'scoped memory for tpu_custom_call.1']
    #allocation16 [shape = 'u8[8192]{0}', space=vmem, size = 0x2000, scoped, tag = 'input window, operand 11, single buffered']
    #allocation17 [shape = 'u8[8192]{0}', space=vmem, size = 0x2000, scoped, tag = 'input window, operand 12, single buffered']
    #allocation18 [shape = 's32[1]{0}', space=sflag, size = 0x4, scoped, tag = 'scoped memory for tpu_custom_call.1']
    #allocation19 [shape = 'u8[8192]{0}', space=vmem, size = 0x2000, scoped, tag = 'output window, operand 0']
    #allocation20 [shape = 'u8[32768]{0}', space=vmem, size = 0x8000, scoped, tag = 'output window, operand 1']
    #allocation21 [shape = 's32[2]{0}', space=sflag, size = 0x8, scoped, tag = 'scoped memory for tpu_custom_call.1']
    #allocation22 [shape = 'u8[32768]{0}', space=vmem, size = 0x8000, scoped, tag = 'output window, operand 2']
    %26 = vsyncpa [#allocation3], 0
    %s27 = scalar_lea.sflag [#allocation3], 1
    %28 = vsyncpa %s27, 0
    %29 = vsyncpa [#allocation6], 0
    %s30 = scalar_lea.sflag [#allocation6], 1
    %31 = vsyncpa %s30, 0
    %32 = vsyncpa [#allocation9], 0
    %33 = vsyncpa [#allocation12], 0
    %34 = vsyncpa [#allocation15], 0
    %35 = vsyncpa [#allocation18], 0
    %36 = vsyncpa [#allocation4], 0
    %s37 = scalar_lea.sflag [#allocation4], 1
    %38 = vsyncpa %s37, 0
    %39 = vsyncpa [#allocation21], 0
    %s40 = scalar_lea.sflag [#allocation21], 1
    %41 = vsyncpa %s40, 0
    loop: start=0, step=1, limit=4
    $region2: #{tpu_custom_call.1} parent=1 // loop_pre_header
      _
    $region3: #{tpu_custom_call.1} parent=1 // loop_header
      %s43 = sphi 0, %s47
      %p44 = scmp.ge.s32.totalorder %s43, 4
      %s50 = sphi 0, %s62
      %s51 = sphi 0, %s58
      %s52 = sphi 0, %s50
      %s53 = sphi 0, %s51
      %s54 = sphi 0, %s52
      %s55 = sphi 0, %s53
      %s67 = sphi 0, %s69
      %s70 = sphi 0, %s67
      %s71 = sphi 0, %s70
      %s87 = sphi 0, %s71
      %s93 = sphi 0, %s95
      %s96 = sphi 0, %s93
      %s97 = sphi 0, %s96
      %s113 = sphi 0, %s97
      %s119 = sphi 0, %s121
      %s122 = sphi 0, %s119
      %s123 = sphi 0, %s122
      %s139 = sphi 0, %s123
      %s147 = sphi 0, %s149
      %s150 = sphi 0, %s147
      %s151 = sphi 0, %s150
      %s167 = sphi 0, %s151
      %s175 = sphi 0, %s177
      %s178 = sphi 0, %s175
      %s179 = sphi 0, %s178
      %s195 = sphi 0, %s179
      %s199 = sphi 0, %s199
      %s201 = sphi 0, %s199
      %s202 = sphi 0, %s201
      %s216 = sphi 0, %s202
      %s220 = sphi 0, %s220
      %s222 = sphi 0, %s220
      %s223 = sphi 0, %s222
      %s237 = sphi 0, %s223
      %s241 = sphi 0, %s241
      %s243 = sphi 0, %s241
      %s244 = sphi 0, %s243
      %s258 = sphi 0, %s244
      %s262 = sphi 0, %s262
      %s264 = sphi 0, %s262
      %s265 = sphi 0, %s264
      %s279 = sphi 0, %s265
      %s283 = sphi 0, %s283
      %s285 = sphi 0, %s283
      %s286 = sphi 0, %s285
      %s300 = sphi 0, %s286
      %s304 = sphi 0, %s304
      %s306 = sphi 0, %s304
      %s307 = sphi 0, %s306
      %s321 = sphi 0, %s307
      %s325 = sphi 0, %s325
      %s327 = sphi 0, %s325
      %s328 = sphi 0, %s327
      %s342 = sphi 0, %s328
      %s346 = sphi 0, %s346
      %s348 = sphi 0, %s346
      %s349 = sphi 0, %s348
      %s363 = sphi 0, %s349
      %s367 = sphi 0, %s367
      %s369 = sphi 0, %s367
      %s370 = sphi 0, %s369
      %s384 = sphi 0, %s370
      %s388 = sphi 0, %s388
      %s390 = sphi 0, %s388
      %s391 = sphi 0, %s390
      %s405 = sphi 0, %s391
      %s409 = sphi 0, %s409
      %s411 = sphi 0, %s409
      %s412 = sphi 0, %s411
      %s426 = sphi 0, %s412
      %s430 = sphi 0, %s430
      %s432 = sphi 0, %s430
      %s433 = sphi 0, %s432
      %s447 = sphi 0, %s433
      %s451 = sphi 0, %s451
      %s453 = sphi 0, %s451
      %s454 = sphi 0, %s453
      %s468 = sphi 0, %s454
      %s476 = sphi 0, %s478
      %s479 = sphi 0, %s476
      %s480 = sphi 0, %s479
      %s496 = sphi 0, %s480
      %s504 = sphi 0, %s506
      %s507 = sphi 0, %s504
      %s508 = sphi 0, %s507
      %s524 = sphi 0, %s508
      %s532 = sphi 0, %s534
      %s535 = sphi 0, %s532
      %s536 = sphi 0, %s535
      %s552 = sphi 0, %s536
    $region4: #{tpu_custom_call.1} parent=1 // loop_header_branch
      %46 = sbr.rel (%p44) target = $region8
    $region5: #{tpu_custom_call.1} parent=1 // loop_body
      %s48 = ssub.s32 %s43, 1
      %s49 = ssub.s32 %s43, 2
      %s56 = sadd.s32 1, %s51
      %p57 = scmp.ge.s32.totalorder %s56, 1
      %s58 = scalar_select %p57, 0, %s56
      %s59 = sadd.s32 1, %s50
      %s60 = scalar_select %p57, %s59, %s50
      %p61 = scmp.ge.s32.totalorder %s60, 2
      %s62 = scalar_select %p61, 0, %s60
      %s63 = ssub.s32 %s50, %s62
      %s64 = ssub.s32 %s51, %s58
      %s65 = sor.u32 %s63, %s64
      %p66 = scmp.eq.s32.totalorder %s65, 0
      %s68 = sadd.s32 %s67, 1
      %s69 = scalar_select %p66, %s67, %s68
      %p72 = pneg %p66
      %p73 = scmp.eq.s32.totalorder %s43, 1
      %p74 = por %p72, %p73
      %p75 = scmp.ne.s32.totalorder %s67, %s70
      %p76 = scmp.eq.s32.totalorder %s43, 0
      %p77 = por %p75, %p76
      %p78 = scmp.ne.s32.totalorder %s67, %s70
      %p79 = scmp.eq.s32.totalorder %s48, 1
      %p80 = por %p78, %p79
      %p81 = scmp.ne.s32.totalorder %s70, %s71
      %p82 = scmp.eq.s32.totalorder %s48, 0
      %p83 = por %p81, %p82
      %p84 = scmp.ne.s32.totalorder %s70, %s71
      %p85 = scmp.eq.s32.totalorder %s49, 1
      %p86 = por %p84, %p85
      %p88 = scmp.ne.s32.totalorder %s71, %s87
      %p89 = scmp.eq.s32.totalorder %s49, 0
      %p90 = por %p88, %p89
      %s91 = ssub.s32 %s50, %s62
      %p92 = scmp.eq.s32.totalorder %s91, 0
      %s94 = sadd.s32 %s93, 1
      %s95 = scalar_select %p92, %s93, %s94
      %p98 = pneg %p92
      %p99 = scmp.eq.s32.totalorder %s43, 1
      %p100 = por %p98, %p99
      %p101 = scmp.ne.s32.totalorder %s93, %s96
      %p102 = scmp.eq.s32.totalorder %s43, 0
      %p103 = por %p101, %p102
      %p104 = scmp.ne.s32.totalorder %s93, %s96
      %p105 = scmp.eq.s32.totalorder %s48, 1
      %p106 = por %p104, %p105
      %p107 = scmp.ne.s32.totalorder %s96, %s97
      %p108 = scmp.eq.s32.totalorder %s48, 0
      %p109 = por %p107, %p108
      %p110 = scmp.ne.s32.totalorder %s96, %s97
      %p111 = scmp.eq.s32.totalorder %s49, 1
      %p112 = por %p110, %p111
      %p114 = scmp.ne.s32.totalorder %s97, %s113
      %p115 = scmp.eq.s32.totalorder %s49, 0
      %p116 = por %p114, %p115
      %s117 = ssub.s32 %s50, %s62
      %p118 = scmp.eq.s32.totalorder %s117, 0
      %s120 = sadd.s32 %s119, 1
      %s121 = scalar_select %p118, %s119, %s120
      %p124 = pneg %p118
      %p125 = scmp.eq.s32.totalorder %s43, 1
      %p126 = por %p124, %p125
      %p127 = scmp.ne.s32.totalorder %s119, %s122
      %p128 = scmp.eq.s32.totalorder %s43, 0
      %p129 = por %p127, %p128
      %p130 = scmp.ne.s32.totalorder %s119, %s122
      %p131 = scmp.eq.s32.totalorder %s48, 1
      %p132 = por %p130, %p131
      %p133 = scmp.ne.s32.totalorder %s122, %s123
      %p134 = scmp.eq.s32.totalorder %s48, 0
      %p135 = por %p133, %p134
      %p136 = scmp.ne.s32.totalorder %s122, %s123
      %p137 = scmp.eq.s32.totalorder %s49, 1
      %p138 = por %p136, %p137
      %p140 = scmp.ne.s32.totalorder %s123, %s139
      %p141 = scmp.eq.s32.totalorder %s49, 0
      %p142 = por %p140, %p141
      %s143 = ssub.s32 %s50, %s62
      %s144 = ssub.s32 %s51, %s58
      %s145 = sor.u32 %s143, %s144
      %p146 = scmp.eq.s32.totalorder %s145, 0
      %s148 = sadd.s32 %s147, 1
      %s149 = scalar_select %p146, %s147, %s148
      %p152 = pneg %p146
      %p153 = scmp.eq.s32.totalorder %s43, 1
      %p154 = por %p152, %p153
      %p155 = scmp.ne.s32.totalorder %s147, %s150
      %p156 = scmp.eq.s32.totalorder %s43, 0
      %p157 = por %p155, %p156
      %p158 = scmp.ne.s32.totalorder %s147, %s150
      %p159 = scmp.eq.s32.totalorder %s48, 1
      %p160 = por %p158, %p159
      %p161 = scmp.ne.s32.totalorder %s150, %s151
      %p162 = scmp.eq.s32.totalorder %s48, 0
      %p163 = por %p161, %p162
      %p164 = scmp.ne.s32.totalorder %s150, %s151
      %p165 = scmp.eq.s32.totalorder %s49, 1
      %p166 = por %p164, %p165
      %p168 = scmp.ne.s32.totalorder %s151, %s167
      %p169 = scmp.eq.s32.totalorder %s49, 0
      %p170 = por %p168, %p169
      %s171 = ssub.s32 %s50, %s62
      %s172 = ssub.s32 %s51, %s58
      %s173 = sor.u32 %s171, %s172
      %p174 = scmp.eq.s32.totalorder %s173, 0
      %s176 = sadd.s32 %s175, 1
      %s177 = scalar_select %p174, %s175, %s176
      %p180 = pneg %p174
      %p181 = scmp.eq.s32.totalorder %s43, 1
      %p182 = por %p180, %p181
      %p183 = scmp.ne.s32.totalorder %s175, %s178
      %p184 = scmp.eq.s32.totalorder %s43, 0
      %p185 = por %p183, %p184
      %p186 = scmp.ne.s32.totalorder %s175, %s178
      %p187 = scmp.eq.s32.totalorder %s48, 1
      %p188 = por %p186, %p187
      %p189 = scmp.ne.s32.totalorder %s178, %s179
      %p190 = scmp.eq.s32.totalorder %s48, 0
      %p191 = por %p189, %p190
      %p192 = scmp.ne.s32.totalorder %s178, %s179
      %p193 = scmp.eq.s32.totalorder %s49, 1
      %p194 = por %p192, %p193
      %p196 = scmp.ne.s32.totalorder %s179, %s195
      %p197 = scmp.eq.s32.totalorder %s49, 0
      %p198 = por %p196, %p197
      %s200 = sadd.s32 %s199, 1
      %p203 = scmp.eq.s32.totalorder %s43, 1
      %p204 = scmp.ne.s32.totalorder %s199, %s201
      %p205 = scmp.eq.s32.totalorder %s43, 0
      %p206 = por %p204, %p205
      %p207 = scmp.ne.s32.totalorder %s199, %s201
      %p208 = scmp.eq.s32.totalorder %s48, 1
      %p209 = por %p207, %p208
      %p210 = scmp.ne.s32.totalorder %s201, %s202
      %p211 = scmp.eq.s32.totalorder %s48, 0
      %p212 = por %p210, %p211
      %p213 = scmp.ne.s32.totalorder %s201, %s202
      %p214 = scmp.eq.s32.totalorder %s49, 1
      %p215 = por %p213, %p214
      %p217 = scmp.ne.s32.totalorder %s202, %s216
      %p218 = scmp.eq.s32.totalorder %s49, 0
      %p219 = por %p217, %p218
      %s221 = sadd.s32 %s220, 1
      %p224 = scmp.eq.s32.totalorder %s43, 1
      %p225 = scmp.ne.s32.totalorder %s220, %s222
      %p226 = scmp.eq.s32.totalorder %s43, 0
      %p227 = por %p225, %p226
      %p228 = scmp.ne.s32.totalorder %s220, %s222
      %p229 = scmp.eq.s32.totalorder %s48, 1
      %p230 = por %p228, %p229
      %p231 = scmp.ne.s32.totalorder %s222, %s223
      %p232 = scmp.eq.s32.totalorder %s48, 0
      %p233 = por %p231, %p232
      %p234 = scmp.ne.s32.totalorder %s222, %s223
      %p235 = scmp.eq.s32.totalorder %s49, 1
      %p236 = por %p234, %p235
      %p238 = scmp.ne.s32.totalorder %s223, %s237
      %p239 = scmp.eq.s32.totalorder %s49, 0
      %p240 = por %p238, %p239
      %s242 = sadd.s32 %s241, 1
      %p245 = scmp.eq.s32.totalorder %s43, 1
      %p246 = scmp.ne.s32.totalorder %s241, %s243
      %p247 = scmp.eq.s32.totalorder %s43, 0
      %p248 = por %p246, %p247
      %p249 = scmp.ne.s32.totalorder %s241, %s243
      %p250 = scmp.eq.s32.totalorder %s48, 1
      %p251 = por %p249, %p250
      %p252 = scmp.ne.s32.totalorder %s243, %s244
      %p253 = scmp.eq.s32.totalorder %s48, 0
      %p254 = por %p252, %p253
      %p255 = scmp.ne.s32.totalorder %s243, %s244
      %p256 = scmp.eq.s32.totalorder %s49, 1
      %p257 = por %p255, %p256
      %p259 = scmp.ne.s32.totalorder %s244, %s258
      %p260 = scmp.eq.s32.totalorder %s49, 0
      %p261 = por %p259, %p260
      %s263 = sadd.s32 %s262, 1
      %p266 = scmp.eq.s32.totalorder %s43, 1
      %p267 = scmp.ne.s32.totalorder %s262, %s264
      %p268 = scmp.eq.s32.totalorder %s43, 0
      %p269 = por %p267, %p268
      %p270 = scmp.ne.s32.totalorder %s262, %s264
      %p271 = scmp.eq.s32.totalorder %s48, 1
      %p272 = por %p270, %p271
      %p273 = scmp.ne.s32.totalorder %s264, %s265
      %p274 = scmp.eq.s32.totalorder %s48, 0
      %p275 = por %p273, %p274
      %p276 = scmp.ne.s32.totalorder %s264, %s265
      %p277 = scmp.eq.s32.totalorder %s49, 1
      %p278 = por %p276, %p277
      %p280 = scmp.ne.s32.totalorder %s265, %s279
      %p281 = scmp.eq.s32.totalorder %s49, 0
      %p282 = por %p280, %p281
      %s284 = sadd.s32 %s283, 1
      %p287 = scmp.eq.s32.totalorder %s43, 1
      %p288 = scmp.ne.s32.totalorder %s283, %s285
      %p289 = scmp.eq.s32.totalorder %s43, 0
      %p290 = por %p288, %p289
      %p291 = scmp.ne.s32.totalorder %s283, %s285
      %p292 = scmp.eq.s32.totalorder %s48, 1
      %p293 = por %p291, %p292
      %p294 = scmp.ne.s32.totalorder %s285, %s286
      %p295 = scmp.eq.s32.totalorder %s48, 0
      %p296 = por %p294, %p295
      %p297 = scmp.ne.s32.totalorder %s285, %s286
      %p298 = scmp.eq.s32.totalorder %s49, 1
      %p299 = por %p297, %p298
      %p301 = scmp.ne.s32.totalorder %s286, %s300
      %p302 = scmp.eq.s32.totalorder %s49, 0
      %p303 = por %p301, %p302
      %s305 = sadd.s32 %s304, 1
      %p308 = scmp.eq.s32.totalorder %s43, 1
      %p309 = scmp.ne.s32.totalorder %s304, %s306
      %p310 = scmp.eq.s32.totalorder %s43, 0
      %p311 = por %p309, %p310
      %p312 = scmp.ne.s32.totalorder %s304, %s306
      %p313 = scmp.eq.s32.totalorder %s48, 1
      %p314 = por %p312, %p313
      %p315 = scmp.ne.s32.totalorder %s306, %s307
      %p316 = scmp.eq.s32.totalorder %s48, 0
      %p317 = por %p315, %p316
      %p318 = scmp.ne.s32.totalorder %s306, %s307
      %p319 = scmp.eq.s32.totalorder %s49, 1
      %p320 = por %p318, %p319
      %p322 = scmp.ne.s32.totalorder %s307, %s321
      %p323 = scmp.eq.s32.totalorder %s49, 0
      %p324 = por %p322, %p323
      %s326 = sadd.s32 %s325, 1
      %p329 = scmp.eq.s32.totalorder %s43, 1
      %p330 = scmp.ne.s32.totalorder %s325, %s327
      %p331 = scmp.eq.s32.totalorder %s43, 0
      %p332 = por %p330, %p331
      %p333 = scmp.ne.s32.totalorder %s325, %s327
      %p334 = scmp.eq.s32.totalorder %s48, 1
      %p335 = por %p333, %p334
      %p336 = scmp.ne.s32.totalorder %s327, %s328
      %p337 = scmp.eq.s32.totalorder %s48, 0
      %p338 = por %p336, %p337
      %p339 = scmp.ne.s32.totalorder %s327, %s328
      %p340 = scmp.eq.s32.totalorder %s49, 1
      %p341 = por %p339, %p340
      %p343 = scmp.ne.s32.totalorder %s328, %s342
      %p344 = scmp.eq.s32.totalorder %s49, 0
      %p345 = por %p343, %p344
      %s347 = sadd.s32 %s346, 1
      %p350 = scmp.eq.s32.totalorder %s43, 1
      %p351 = scmp.ne.s32.totalorder %s346, %s348
      %p352 = scmp.eq.s32.totalorder %s43, 0
      %p353 = por %p351, %p352
      %p354 = scmp.ne.s32.totalorder %s346, %s348
      %p355 = scmp.eq.s32.totalorder %s48, 1
      %p356 = por %p354, %p355
      %p357 = scmp.ne.s32.totalorder %s348, %s349
      %p358 = scmp.eq.s32.totalorder %s48, 0
      %p359 = por %p357, %p358
      %p360 = scmp.ne.s32.totalorder %s348, %s349
      %p361 = scmp.eq.s32.totalorder %s49, 1
      %p362 = por %p360, %p361
      %p364 = scmp.ne.s32.totalorder %s349, %s363
      %p365 = scmp.eq.s32.totalorder %s49, 0
      %p366 = por %p364, %p365
      %s368 = sadd.s32 %s367, 1
      %p371 = scmp.eq.s32.totalorder %s43, 1
      %p372 = scmp.ne.s32.totalorder %s367, %s369
      %p373 = scmp.eq.s32.totalorder %s43, 0
      %p374 = por %p372, %p373
      %p375 = scmp.ne.s32.totalorder %s367, %s369
      %p376 = scmp.eq.s32.totalorder %s48, 1
      %p377 = por %p375, %p376
      %p378 = scmp.ne.s32.totalorder %s369, %s370
      %p379 = scmp.eq.s32.totalorder %s48, 0
      %p380 = por %p378, %p379
      %p381 = scmp.ne.s32.totalorder %s369, %s370
      %p382 = scmp.eq.s32.totalorder %s49, 1
      %p383 = por %p381, %p382
      %p385 = scmp.ne.s32.totalorder %s370, %s384
      %p386 = scmp.eq.s32.totalorder %s49, 0
      %p387 = por %p385, %p386
      %s389 = sadd.s32 %s388, 1
      %p392 = scmp.eq.s32.totalorder %s43, 1
      %p393 = scmp.ne.s32.totalorder %s388, %s390
      %p394 = scmp.eq.s32.totalorder %s43, 0
      %p395 = por %p393, %p394
      %p396 = scmp.ne.s32.totalorder %s388, %s390
      %p397 = scmp.eq.s32.totalorder %s48, 1
      %p398 = por %p396, %p397
      %p399 = scmp.ne.s32.totalorder %s390, %s391
      %p400 = scmp.eq.s32.totalorder %s48, 0
      %p401 = por %p399, %p400
      %p402 = scmp.ne.s32.totalorder %s390, %s391
      %p403 = scmp.eq.s32.totalorder %s49, 1
      %p404 = por %p402, %p403
      %p406 = scmp.ne.s32.totalorder %s391, %s405
      %p407 = scmp.eq.s32.totalorder %s49, 0
      %p408 = por %p406, %p407
      %s410 = sadd.s32 %s409, 1
      %p413 = scmp.eq.s32.totalorder %s43, 1
      %p414 = scmp.ne.s32.totalorder %s409, %s411
      %p415 = scmp.eq.s32.totalorder %s43, 0
      %p416 = por %p414, %p415
      %p417 = scmp.ne.s32.totalorder %s409, %s411
      %p418 = scmp.eq.s32.totalorder %s48, 1
      %p419 = por %p417, %p418
      %p420 = scmp.ne.s32.totalorder %s411, %s412
      %p421 = scmp.eq.s32.totalorder %s48, 0
      %p422 = por %p420, %p421
      %p423 = scmp.ne.s32.totalorder %s411, %s412
      %p424 = scmp.eq.s32.totalorder %s49, 1
      %p425 = por %p423, %p424
      %p427 = scmp.ne.s32.totalorder %s412, %s426
      %p428 = scmp.eq.s32.totalorder %s49, 0
      %p429 = por %p427, %p428
      %s431 = sadd.s32 %s430, 1
      %p434 = scmp.eq.s32.totalorder %s43, 1
      %p435 = scmp.ne.s32.totalorder %s430, %s432
      %p436 = scmp.eq.s32.totalorder %s43, 0
      %p437 = por %p435, %p436
      %p438 = scmp.ne.s32.totalorder %s430, %s432
      %p439 = scmp.eq.s32.totalorder %s48, 1
      %p440 = por %p438, %p439
      %p441 = scmp.ne.s32.totalorder %s432, %s433
      %p442 = scmp.eq.s32.totalorder %s48, 0
      %p443 = por %p441, %p442
      %p444 = scmp.ne.s32.totalorder %s432, %s433
      %p445 = scmp.eq.s32.totalorder %s49, 1
      %p446 = por %p444, %p445
      %p448 = scmp.ne.s32.totalorder %s433, %s447
      %p449 = scmp.eq.s32.totalorder %s49, 0
      %p450 = por %p448, %p449
      %s452 = sadd.s32 %s451, 1
      %p455 = scmp.eq.s32.totalorder %s43, 1
      %p456 = scmp.ne.s32.totalorder %s451, %s453
      %p457 = scmp.eq.s32.totalorder %s43, 0
      %p458 = por %p456, %p457
      %p459 = scmp.ne.s32.totalorder %s451, %s453
      %p460 = scmp.eq.s32.totalorder %s48, 1
      %p461 = por %p459, %p460
      %p462 = scmp.ne.s32.totalorder %s453, %s454
      %p463 = scmp.eq.s32.totalorder %s48, 0
      %p464 = por %p462, %p463
      %p465 = scmp.ne.s32.totalorder %s453, %s454
      %p466 = scmp.eq.s32.totalorder %s49, 1
      %p467 = por %p465, %p466
      %p469 = scmp.ne.s32.totalorder %s454, %s468
      %p470 = scmp.eq.s32.totalorder %s49, 0
      %p471 = por %p469, %p470
      %s472 = ssub.s32 %s50, %s62
      %s473 = ssub.s32 %s51, %s58
      %s474 = sor.u32 %s472, %s473
      %p475 = scmp.eq.s32.totalorder %s474, 0
      %s477 = sadd.s32 %s476, 1
      %s478 = scalar_select %p475, %s476, %s477
      %p481 = pneg %p475
      %p482 = scmp.eq.s32.totalorder %s43, 1
      %p483 = por %p481, %p482
      %p484 = scmp.ne.s32.totalorder %s476, %s479
      %p485 = scmp.eq.s32.totalorder %s43, 0
      %p486 = por %p484, %p485
      %p487 = scmp.ne.s32.totalorder %s476, %s479
      %p488 = scmp.eq.s32.totalorder %s48, 1
      %p489 = por %p487, %p488
      %p490 = scmp.ne.s32.totalorder %s479, %s480
      %p491 = scmp.eq.s32.totalorder %s48, 0
      %p492 = por %p490, %p491
      %p493 = scmp.ne.s32.totalorder %s479, %s480
      %p494 = scmp.eq.s32.totalorder %s49, 1
      %p495 = por %p493, %p494
      %p497 = scmp.ne.s32.totalorder %s480, %s496
      %p498 = scmp.eq.s32.totalorder %s49, 0
      %p499 = por %p497, %p498
      %s500 = ssub.s32 %s50, %s62
      %s501 = ssub.s32 %s51, %s58
      %s502 = sor.u32 %s500, %s501
      %p503 = scmp.eq.s32.totalorder %s502, 0
      %s505 = sadd.s32 %s504, 1
      %s506 = scalar_select %p503, %s504, %s505
      %p509 = pneg %p503
      %p510 = scmp.eq.s32.totalorder %s43, 1
      %p511 = por %p509, %p510
      %p512 = scmp.ne.s32.totalorder %s504, %s507
      %p513 = scmp.eq.s32.totalorder %s43, 0
      %p514 = por %p512, %p513
      %p515 = scmp.ne.s32.totalorder %s504, %s507
      %p516 = scmp.eq.s32.totalorder %s48, 1
      %p517 = por %p515, %p516
      %p518 = scmp.ne.s32.totalorder %s507, %s508
      %p519 = scmp.eq.s32.totalorder %s48, 0
      %p520 = por %p518, %p519
      %p521 = scmp.ne.s32.totalorder %s507, %s508
      %p522 = scmp.eq.s32.totalorder %s49, 1
      %p523 = por %p521, %p522
      %p525 = scmp.ne.s32.totalorder %s508, %s524
      %p526 = scmp.eq.s32.totalorder %s49, 0
      %p527 = por %p525, %p526
      %s528 = ssub.s32 %s50, %s62
      %s529 = ssub.s32 %s51, %s58
      %s530 = sor.u32 %s528, %s529
      %p531 = scmp.eq.s32.totalorder %s530, 0
      %s533 = sadd.s32 %s532, 1
      %s534 = scalar_select %p531, %s532, %s533
      %p537 = pneg %p531
      %p538 = scmp.eq.s32.totalorder %s43, 1
      %p539 = por %p537, %p538
      %p540 = scmp.ne.s32.totalorder %s532, %s535
      %p541 = scmp.eq.s32.totalorder %s43, 0
      %p542 = por %p540, %p541
      %p543 = scmp.ne.s32.totalorder %s532, %s535
      %p544 = scmp.eq.s32.totalorder %s48, 1
      %p545 = por %p543, %p544
      %p546 = scmp.ne.s32.totalorder %s535, %s536
      %p547 = scmp.eq.s32.totalorder %s48, 0
      %p548 = por %p546, %p547
      %p549 = scmp.ne.s32.totalorder %s535, %s536
      %p550 = scmp.eq.s32.totalorder %s49, 1
      %p551 = por %p549, %p550
      %p553 = scmp.ne.s32.totalorder %s536, %s552
      %p554 = scmp.eq.s32.totalorder %s49, 0
      %p555 = por %p553, %p554
      %p556 = scmp.le.s32.totalorder 1, %s43
      %p557 = scmp.lt.s32.totalorder %s43, 3
      %p558 = pnand %p556, %p557
      %p559 = pneg %p558
      // Predicated region
      $region9: #{tpu_custom_call.1} parent=5 // pred_check
        _
      $region10: #{tpu_custom_call.1} parent=5 // pred_check_branch
        %561 = sbr.rel (%p558) target = $region12
      $region11: #{tpu_custom_call.1} parent=5 // pred_region
        %s562 = ssub.s32 %s43, 1
        // Predicated region
        $region13: #{tpu_custom_call.1} parent=11 // pred_check
          %p563 = pneg %p212
        $region14: #{tpu_custom_call.1} parent=11 // pred_check_branch
          %565 = sbr.rel (%p563) target = $region16
        $region15: #{tpu_custom_call.1} parent=11 // pred_region
          %s567 = ssub.s32 256, 256
          %568 = vsyncadd [#allocation6], %s567
          %s569 = sshll.u32 [#allocation7], 4
          %s570 = int_to_ptr.vmem [resolvable:$true] %s569
          %575 = dma.hbm_to_vmem [thread:$0]  %s5, 256, %s570, [#allocation6], 64, 64, 4
        $region16: #{tpu_custom_call.1} parent=11 // pred_fallthru
          _
        // Predicated region
        $region17: #{tpu_custom_call.1} parent=11 // pred_check
          %p576 = pneg %p233
        $region18: #{tpu_custom_call.1} parent=11 // pred_check_branch
          %578 = sbr.rel (%p576) target = $region20
        $region19: #{tpu_custom_call.1} parent=11 // pred_region
          %s580 = ssub.s32 256, 256
          %581 = vsyncadd [#allocation9], %s580
          %s582 = sshll.u32 [#allocation8], 4
          %s583 = int_to_ptr.vmem [resolvable:$true] %s582
          %588 = dma.hbm_to_vmem [thread:$0]  %s6, 256, %s583, [#allocation9], 64, 64, 4
        $region20: #{tpu_custom_call.1} parent=11 // pred_fallthru
          _
        // Predicated region
        $region21: #{tpu_custom_call.1} parent=11 // pred_check
          %p589 = pneg %p254
        $region22: #{tpu_custom_call.1} parent=11 // pred_check_branch
          %591 = sbr.rel (%p589) target = $region24
        $region23: #{tpu_custom_call.1} parent=11 // pred_region
          %s593 = ssub.s32 256, 256
          %594 = vsyncadd [#allocation9], %s593
          %s595 = sshll.u32 [#allocation10], 4
          %s596 = int_to_ptr.vmem [resolvable:$true] %s595
          %601 = dma.hbm_to_vmem [thread:$0]  %s7, 256, %s596, [#allocation9], 64, 64, 4
        $region24: #{tpu_custom_call.1} parent=11 // pred_fallthru
          _
        // Predicated region
        $region25: #{tpu_custom_call.1} parent=11 // pred_check
          %p602 = pneg %p275
        $region26: #{tpu_custom_call.1} parent=11 // pred_check_branch
          %604 = sbr.rel (%p602) target = $region28
        $region27: #{tpu_custom_call.1} parent=11 // pred_region
          %s606 = ssub.s32 256, 256
          %607 = vsyncadd [#allocation12], %s606
          %s608 = sshll.u32 [#allocation11], 4
          %s609 = int_to_ptr.vmem [resolvable:$true] %s608
          %614 = dma.hbm_to_vmem [thread:$0]  %s8, 256, %s609, [#allocation12], 64, 64, 4
        $region28: #{tpu_custom_call.1} parent=11 // pred_fallthru
          _
        // Predicated region
        $region29: #{tpu_custom_call.1} parent=11 // pred_check
          %p615 = pneg %p296
        $region30: #{tpu_custom_call.1} parent=11 // pred_check_branch
          %617 = sbr.rel (%p615) target = $region32
        $region31: #{tpu_custom_call.1} parent=11 // pred_region
          %s619 = ssub.s32 256, 256
          %620 = vsyncadd [#allocation12], %s619
          %s621 = sshll.u32 [#allocation13], 4
          %s622 = int_to_ptr.vmem [resolvable:$true] %s621
          %627 = dma.hbm_to_vmem [thread:$0]  %s9, 256, %s622, [#allocation12], 64, 64, 4
        $region32: #{tpu_custom_call.1} parent=11 // pred_fallthru
          _
        // Predicated region
        $region33: #{tpu_custom_call.1} parent=11 // pred_check
          %p628 = pneg %p317
        $region34: #{tpu_custom_call.1} parent=11 // pred_check_branch
          %630 = sbr.rel (%p628) target = $region36
        $region35: #{tpu_custom_call.1} parent=11 // pred_region
          %s632 = ssub.s32 256, 256
          %633 = vsyncadd [#allocation15], %s632
          %s634 = sshll.u32 [#allocation14], 4
          %s635 = int_to_ptr.vmem [resolvable:$true] %s634
          %640 = dma.hbm_to_vmem [thread:$0]  %s10, 256, %s635, [#allocation15], 64, 64, 4
        $region36: #{tpu_custom_call.1} parent=11 // pred_fallthru
          _
        // Predicated region
        $region37: #{tpu_custom_call.1} parent=11 // pred_check
          %p641 = pneg %p338
        $region38: #{tpu_custom_call.1} parent=11 // pred_check_branch
          %643 = sbr.rel (%p641) target = $region40
        $region39: #{tpu_custom_call.1} parent=11 // pred_region
          %s645 = ssub.s32 256, 256
          %646 = vsyncadd [#allocation15], %s645
          %s647 = sshll.u32 [#allocation16], 4
          %s648 = int_to_ptr.vmem [resolvable:$true] %s647
          %653 = dma.hbm_to_vmem [thread:$0]  %s11, 256, %s648, [#allocation15], 64, 64, 4
        $region40: #{tpu_custom_call.1} parent=11 // pred_fallthru
          _
        // Predicated region
        $region41: #{tpu_custom_call.1} parent=11 // pred_check
          %p654 = pneg %p359
        $region42: #{tpu_custom_call.1} parent=11 // pred_check_branch
          %656 = sbr.rel (%p654) target = $region44
        $region43: #{tpu_custom_call.1} parent=11 // pred_region
          %s658 = ssub.s32 256, 256
          %659 = vsyncadd [#allocation18], %s658
          %s660 = sshll.u32 [#allocation17], 4
          %s661 = int_to_ptr.vmem [resolvable:$true] %s660
          %666 = dma.hbm_to_vmem [thread:$0]  %s12, 256, %s661, [#allocation18], 64, 64, 4
        $region44: #{tpu_custom_call.1} parent=11 // pred_fallthru
          _
        // Predicated region
        $region45: #{tpu_custom_call.1} parent=11 // pred_check
          %p667 = pneg %p380
        $region46: #{tpu_custom_call.1} parent=11 // pred_check_branch
          %669 = sbr.rel (%p667) target = $region48
        $region47: #{tpu_custom_call.1} parent=11 // pred_region
          _
        $region48: #{tpu_custom_call.1} parent=11 // pred_fallthru
          _
        // Predicated region
        $region49: #{tpu_custom_call.1} parent=11 // pred_check
          %p670 = pneg %p401
        $region50: #{tpu_custom_call.1} parent=11 // pred_check_branch
          %672 = sbr.rel (%p670) target = $region52
        $region51: #{tpu_custom_call.1} parent=11 // pred_region
          _
        $region52: #{tpu_custom_call.1} parent=11 // pred_fallthru
          _
        // Predicated region
        $region53: #{tpu_custom_call.1} parent=11 // pred_check
          %p673 = pneg %p422
        $region54: #{tpu_custom_call.1} parent=11 // pred_check_branch
          %675 = sbr.rel (%p673) target = $region56
        $region55: #{tpu_custom_call.1} parent=11 // pred_region
          _
        $region56: #{tpu_custom_call.1} parent=11 // pred_fallthru
          _
        // Predicated region
        $region57: #{tpu_custom_call.1} parent=11 // pred_check
          %p676 = pneg %p443
        $region58: #{tpu_custom_call.1} parent=11 // pred_check_branch
          %678 = sbr.rel (%p676) target = $region60
        $region59: #{tpu_custom_call.1} parent=11 // pred_region
          _
        $region60: #{tpu_custom_call.1} parent=11 // pred_fallthru
          _
        // Predicated region
        $region61: #{tpu_custom_call.1} parent=11 // pred_check
          %p679 = pneg %p464
        $region62: #{tpu_custom_call.1} parent=11 // pred_check_branch
          %681 = sbr.rel (%p679) target = $region64
        $region63: #{tpu_custom_call.1} parent=11 // pred_region
          _
        $region64: #{tpu_custom_call.1} parent=11 // pred_fallthru
          _
      $region12: #{tpu_custom_call.1} parent=5 // pred_fallthru
        _
      %p682 = scmp.lt.s32.totalorder %s43, 2
      // Predicated region
      $region65: #{tpu_custom_call.1} parent=5 // pred_check
        %p683 = pneg %p682
      $region66: #{tpu_custom_call.1} parent=5 // pred_check_branch
        %685 = sbr.rel (%p683) target = $region68
      $region67: #{tpu_custom_call.1} parent=5 // pred_region
        // Predicated region
        $region69: #{tpu_custom_call.1} parent=67 // pred_check
          %p686 = pneg %p77
        $region70: #{tpu_custom_call.1} parent=67 // pred_check_branch
          %688 = sbr.rel (%p686) target = $region72
        $region71: #{tpu_custom_call.1} parent=67 // pred_region
          %p689 = scmp.lt.s32.totalorder %s50, 1
          %s690 = scalar_select %p689, %s50, 1
          %p691 = scmp.lt.s32.totalorder %s51, 0
          %s692 = scalar_select %p691, %s51, 0
          %s693 = sadd.s32 %s692, %s690
          %s694 = smul.addr %s693, 8
          %s695 = scalar_lea.vmem %s0, %s694
        $region72: #{tpu_custom_call.1} parent=67 // pred_fallthru
          _
        // Predicated region
        $region73: #{tpu_custom_call.1} parent=67 // pred_check
          %p696 = pneg %p103
        $region74: #{tpu_custom_call.1} parent=67 // pred_check_branch
          %698 = sbr.rel (%p696) target = $region76
        $region75: #{tpu_custom_call.1} parent=67 // pred_region
          %p699 = scmp.lt.s32.totalorder %s50, 1
          %s700 = scalar_select %p699, %s50, 1
          %s701 = smul.addr %s700, 8
          %s702 = scalar_lea.vmem %s1, %s701
        $region76: #{tpu_custom_call.1} parent=67 // pred_fallthru
          _
        // Predicated region
        $region77: #{tpu_custom_call.1} parent=67 // pred_check
          %p703 = pneg %p129
        $region78: #{tpu_custom_call.1} parent=67 // pred_check_branch
          %705 = sbr.rel (%p703) target = $region80
        $region79: #{tpu_custom_call.1} parent=67 // pred_region
          %p706 = scmp.lt.s32.totalorder %s50, 1
          %s707 = scalar_select %p706, %s50, 1
          %s708 = smul.addr %s707, 8
          %s709 = scalar_lea.vmem %s2, %s708
        $region80: #{tpu_custom_call.1} parent=67 // pred_fallthru
          _
        // Predicated region
        $region81: #{tpu_custom_call.1} parent=67 // pred_check
          %p710 = pneg %p157
        $region82: #{tpu_custom_call.1} parent=67 // pred_check_branch
          %712 = sbr.rel (%p710) target = $region84
        $region83: #{tpu_custom_call.1} parent=67 // pred_region
          %s713 = sand.u32 %s147, 1
          %s714 = scalar_lea.sflag [#allocation3], %s713
          %s715 = sand.u32 %s147, 1
          %s716 = smul.addr %s715, 8
          %s717 = scalar_lea.vmem [#allocation2], %s716
          %s719 = ssub.s32 128, 128
          %720 = vsyncadd %s714, %s719
          %s721 = sadd.s32 %s51, %s50
          %s722 = smul.addr %s721, 128
          %s723 = scalar_lea.hbm %s3, %s722
          %s725 = sshll.u32 %s717, 4
          %s726 = int_to_ptr.vmem [resolvable:$true] %s725
          %728 = dma.hbm_to_vmem [thread:$0]  %s723, 128, %s726, %s714
        $region84: #{tpu_custom_call.1} parent=67 // pred_fallthru
          _
        // Predicated region
        $region85: #{tpu_custom_call.1} parent=67 // pred_check
          %p729 = pneg %p185
        $region86: #{tpu_custom_call.1} parent=67 // pred_check_branch
          %731 = sbr.rel (%p729) target = $region88
        $region87: #{tpu_custom_call.1} parent=67 // pred_region
          %s732 = sand.u32 %s43, 1
          %s733 = scalar_lea.sflag [#allocation6], %s732
          %s734 = sand.u32 %s175, 1
          %s735 = smul.addr %s734, 8
          %s736 = scalar_lea.vmem [#allocation5], %s735
          %s738 = ssub.s32 128, 128
          %739 = vsyncadd %s733, %s738
          %s740 = sadd.s32 %s51, %s50
          %s741 = smul.addr %s740, 128
          %s742 = scalar_lea.hbm %s4, %s741
          %s744 = sshll.u32 %s736, 4
          %s745 = int_to_ptr.vmem [resolvable:$true] %s744
          %747 = dma.hbm_to_vmem [thread:$0]  %s742, 128, %s745, %s733
        $region88: #{tpu_custom_call.1} parent=67 // pred_fallthru
          _
      $region68: #{tpu_custom_call.1} parent=5 // pred_fallthru
        _
      %p748 = scmp.le.s32.totalorder 1, %s43
      %p749 = scmp.lt.s32.totalorder %s43, 3
      %p750 = pnand %p748, %p749
      %p751 = pneg %p750
      // Predicated region
      $region89: #{tpu_custom_call.1} parent=5 // pred_check
        _
      $region90: #{tpu_custom_call.1} parent=5 // pred_check_branch
        %753 = sbr.rel (%p750) target = $region92
      $region91: #{tpu_custom_call.1} parent=5 // pred_region
        %s754 = ssub.s32 %s43, 1
        %s755 = sand.u32 %s150, 1
        %s756 = scalar_lea.sflag [#allocation3], %s755
        %s757 = sand.u32 %s150, 1
        %s758 = smul.addr %s757, 8
        %s759 = scalar_lea.vmem [#allocation2], %s758
        // Predicated region
        $region93: #{tpu_custom_call.1} parent=91 // pred_check
          %p760 = pneg %p163
        $region94: #{tpu_custom_call.1} parent=91 // pred_check_branch
          %762 = sbr.rel (%p760) target = $region96
        $region95: #{tpu_custom_call.1} parent=91 // pred_region
          %763 = dma.done %s756, 128
        $region96: #{tpu_custom_call.1} parent=91 // pred_fallthru
          _
        %s764 = sand.u32 %s48, 1
        %s765 = scalar_lea.sflag [#allocation6], %s764
        %s766 = sand.u32 %s178, 1
        %s767 = smul.addr %s766, 8
        %s768 = scalar_lea.vmem [#allocation5], %s767
        // Predicated region
        $region97: #{tpu_custom_call.1} parent=91 // pred_check
          %p769 = pneg %p191
        $region98: #{tpu_custom_call.1} parent=91 // pred_check_branch
          %771 = sbr.rel (%p769) target = $region100
        $region99: #{tpu_custom_call.1} parent=91 // pred_region
          %772 = dma.done %s765, 128
        $region100: #{tpu_custom_call.1} parent=91 // pred_fallthru
          _
        // Predicated region
        $region101: #{tpu_custom_call.1} parent=91 // pred_check
          %p773 = pneg %p212
        $region102: #{tpu_custom_call.1} parent=91 // pred_check_branch
          %775 = sbr.rel (%p773) target = $region104
        $region103: #{tpu_custom_call.1} parent=91 // pred_region
          %776 = dma.done [#allocation6], 256
        $region104: #{tpu_custom_call.1} parent=91 // pred_fallthru
          _
        // Predicated region
        $region105: #{tpu_custom_call.1} parent=91 // pred_check
          %p777 = pneg %p233
        $region106: #{tpu_custom_call.1} parent=91 // pred_check_branch
          %779 = sbr.rel (%p777) target = $region108
        $region107: #{tpu_custom_call.1} parent=91 // pred_region
          %780 = dma.done [#allocation9], 256
        $region108: #{tpu_custom_call.1} parent=91 // pred_fallthru
          _
        // Predicated region
        $region109: #{tpu_custom_call.1} parent=91 // pred_check
          %p781 = pneg %p254
        $region110: #{tpu_custom_call.1} parent=91 // pred_check_branch
          %783 = sbr.rel (%p781) target = $region112
        $region111: #{tpu_custom_call.1} parent=91 // pred_region
          %784 = dma.done [#allocation9], 256
        $region112: #{tpu_custom_call.1} parent=91 // pred_fallthru
          _
        // Predicated region
        $region113: #{tpu_custom_call.1} parent=91 // pred_check
          %p785 = pneg %p275
        $region114: #{tpu_custom_call.1} parent=91 // pred_check_branch
          %787 = sbr.rel (%p785) target = $region116
        $region115: #{tpu_custom_call.1} parent=91 // pred_region
          %788 = dma.done [#allocation12], 256
        $region116: #{tpu_custom_call.1} parent=91 // pred_fallthru
          _
        // Predicated region
        $region117: #{tpu_custom_call.1} parent=91 // pred_check
          %p789 = pneg %p296
        $region118: #{tpu_custom_call.1} parent=91 // pred_check_branch
          %791 = sbr.rel (%p789) target = $region120
        $region119: #{tpu_custom_call.1} parent=91 // pred_region
          %792 = dma.done [#allocation12], 256
        $region120: #{tpu_custom_call.1} parent=91 // pred_fallthru
          _
        // Predicated region
        $region121: #{tpu_custom_call.1} parent=91 // pred_check
          %p793 = pneg %p317
        $region122: #{tpu_custom_call.1} parent=91 // pred_check_branch
          %795 = sbr.rel (%p793) target = $region124
        $region123: #{tpu_custom_call.1} parent=91 // pred_region
          %796 = dma.done [#allocation15], 256
        $region124: #{tpu_custom_call.1} parent=91 // pred_fallthru
          _
        // Predicated region
        $region125: #{tpu_custom_call.1} parent=91 // pred_check
          %p797 = pneg %p338
        $region126: #{tpu_custom_call.1} parent=91 // pred_check_branch
          %799 = sbr.rel (%p797) target = $region128
        $region127: #{tpu_custom_call.1} parent=91 // pred_region
          %800 = dma.done [#allocation15], 256
        $region128: #{tpu_custom_call.1} parent=91 // pred_fallthru
          _
        // Predicated region
        $region129: #{tpu_custom_call.1} parent=91 // pred_check
          %p801 = pneg %p359
        $region130: #{tpu_custom_call.1} parent=91 // pred_check_branch
          %803 = sbr.rel (%p801) target = $region132
        $region131: #{tpu_custom_call.1} parent=91 // pred_region
          %804 = dma.done [#allocation18], 256
        $region132: #{tpu_custom_call.1} parent=91 // pred_fallthru
          _
        %p805 = scmp.lt.s32.totalorder %s52, 1
        %s806 = scalar_select %p805, %s52, 1
        %p807 = scmp.lt.s32.totalorder %s53, 0
        %s808 = scalar_select %p807, %s53, 0
        %s809 = sadd.s32 %s808, %s806
        %s810 = smul.addr %s809, 8
        %s811 = scalar_lea.vmem %s0, %s810
        %p812 = pneg %p83
        %p813 = pneg %p80
        %p814 = scmp.lt.s32.totalorder %s52, 1
        %s815 = scalar_select %p814, %s52, 1
        %s816 = smul.addr %s815, 8
        %s817 = scalar_lea.vmem %s1, %s816
        %p818 = pneg %p109
        %p819 = pneg %p106
        %p820 = scmp.lt.s32.totalorder %s52, 1
        %s821 = scalar_select %p820, %s52, 1
        %s822 = smul.addr %s821, 8
        %s823 = scalar_lea.vmem %s2, %s822
        %p824 = pneg %p135
        %p825 = pneg %p132
        %s826 = sand.u32 %s150, 1
        %s827 = scalar_lea.sflag [#allocation3], %s826
        %s828 = sand.u32 %s150, 1
        %s829 = smul.addr %s828, 8
        %s830 = scalar_lea.vmem [#allocation2], %s829
        %p831 = pneg %p163
        %p832 = pneg %p160
        %s833 = sand.u32 %s48, 1
        %s834 = scalar_lea.sflag [#allocation6], %s833
        %s835 = sand.u32 %s178, 1
        %s836 = smul.addr %s835, 8
        %s837 = scalar_lea.vmem [#allocation5], %s836
        %p838 = pneg %p191
        %p839 = pneg %p188
        %p840 = pneg %p212
        %p841 = pneg %p209
        %p842 = pneg %p233
        %p843 = pneg %p230
        %p844 = pneg %p254
        %p845 = pneg %p251
        %p846 = pneg %p275
        %p847 = pneg %p272
        %p848 = pneg %p296
        %p849 = pneg %p293
        %p850 = pneg %p317
        %p851 = pneg %p314
        %p852 = pneg %p338
        %p853 = pneg %p335
        %p854 = pneg %p359
        %p855 = pneg %p356
        %p856 = pneg %p380
        %p857 = pneg %p377
        %p858 = pneg %p401
        %p859 = pneg %p398
        %p860 = pneg %p422
        %p861 = pneg %p419
        %p862 = pneg %p443
        %p863 = pneg %p440
        %p864 = pneg %p464
        %p865 = pneg %p461
        %p866 = pneg %p492
        %p867 = pneg %p489
        %s868 = sand.u32 %s479, 1
        %s869 = scalar_lea.sflag [#allocation4], %s868
        %s870 = sand.u32 %s479, 1
        %s871 = smul.addr %s870, 8
        %s872 = scalar_lea.vmem [#allocation19], %s871
        %p873 = pneg %p520
        %p874 = pneg %p517
        %s875 = sand.u32 %s48, 1
        %s876 = scalar_lea.sflag [#allocation21], %s875
        %s877 = sand.u32 %s507, 1
        %s878 = smul.addr %s877, 32
        %s879 = scalar_lea.vmem [#allocation20], %s878
        %p880 = pneg %p548
        %p881 = pneg %p545
        %s882 = sand.u32 %s48, 1
        %s883 = scalar_lea.sflag [#allocation21], %s882
        %s884 = sand.u32 %s535, 1
        %s885 = smul.addr %s884, 32
        %s886 = scalar_lea.vmem [#allocation22], %s885
        %p887 = scmp.lt.s32.totalorder %s52, 1
        %s888 = scalar_select %p887, %s52, 1
        %p889 = scmp.lt.s32.totalorder %s53, 0
        %s890 = scalar_select %p889, %s53, 0
        %s891 = sadd.s32 %s890, %s888
        %s892 = smul.addr %s891, 8
        %s893 = scalar_lea.vmem %s0, %s892
        %p894 = scmp.lt.s32.totalorder %s52, 1
        %s895 = scalar_select %p894, %s52, 1
        %s896 = smul.addr %s895, 8
        %s897 = scalar_lea.vmem %s1, %s896
        %p898 = scmp.lt.s32.totalorder %s52, 1
        %s899 = scalar_select %p898, %s52, 1
        %s900 = smul.addr %s899, 8
        %s901 = scalar_lea.vmem %s2, %s900
        %v903 = vld [vmem:[%s893] sm:$0xff]
        %v904 = vld [vmem:[%s897] sm:$0xff]
        %v905 = vld [vmem:[%s901] sm:$0xff]
        %v906 = vld [vmem:[%s759] sm:$0xff]
        %v907 = vld [vmem:[%s768] sm:$0xff]
        %v908 = vpack.c.bf16 %v903, %v903
        %v909 = vpack.c.bf16 %v904, %v904
        %v910 = vpack.c.bf16 %v905, %v905
        %v911 = vld [vmem:[#allocation7] sm:$0xf]
        %v912 = vld [vmem:[#allocation7 + $0x4] sm:$0xf]
        %v913 = vld [vmem:[#allocation7 + $0x8] sm:$0xf]
        %v914 = vld [vmem:[#allocation7 + $0xc] sm:$0xf]
        %v919 = vunpack.c.l.b16 %v911
        %v920 = vunpack.c.l.b16 %v912
        %v921 = vunpack.c.l.b16 %v913
        %v922 = vunpack.c.l.b16 %v914
        %v923 = vpack.c.b16 %v920, %v919
        %v924 = vpack.c.b16 %v922, %v921
        %vm927 = vcmask 261120
        %v929 = vsel %vm927, %v908, 0
        %931 = vmatprep.subr.bf16.mxu0 0
        %932 = vmatpush1.bf16.msra.mxu0 0
        %933 = vmatprep.subr.bf16.mxu0 0
        %934 = vmatpush1.bf16.msra.mxu0 0
        %935 = vmatprep.subr.bf16.mxu0 0
        %936 = vmatpush1.bf16.msra.mxu0 0
        %937 = vmatprep.subr.bf16.mxu0 0
        %938 = vmatpush1.bf16.msra.mxu0 0
        %939 = vmatprep.subr.bf16.mxu0 0
        %940 = vmatpush1.bf16.msra.mxu0 0
        %941 = vmatprep.subr.bf16.mxu0 0
        %942 = vmatpush1.bf16.msra.mxu0 0
        %943 = vmatprep.subr.bf16.mxu0 0
        %944 = vmatpush1.bf16.msra.mxu0 %v924
        %945 = vmatprep.subr.bf16.mxu0 0
        %946 = vmatpush1.bf16.msra.mxu0 %v923
        %947 = vmatprep.subr.bf16.mxu0 0
        %948 = vmatpush2.bf16.msra.mxu0 0
        %949 = vmatprep.subr.bf16.mxu0 0
        %950 = vmatpush2.bf16.msra.mxu0 0
        %951 = vmatprep.subr.bf16.mxu0 0
        %952 = vmatpush2.bf16.msra.mxu0 0
        %953 = vmatprep.subr.bf16.mxu0 0
        %954 = vmatpush2.bf16.msra.mxu0 0
        %955 = vmatprep.subr.bf16.mxu0 0
        %956 = vmatpush2.bf16.msra.mxu0 0
        %957 = vmatprep.subr.bf16.mxu0 0
        %958 = vmatpush2.bf16.msra.mxu0 0
        %959 = vmatprep.subr.bf16.mxu0 0
        %960 = vmatpush2.bf16.msra.mxu0 0
        %961 = vmatprep.subr.bf16.mxu0 0
        %962 = vmatpush2.bf16.msra.mxu0 0
        %963 = vmatprep.mubr.bf16.mxu0 0
        %964 = vmatmul.mubr.bf16.gmra.mxu0 %v929
        %v965 = vpop.f32.mrf.mxu0
        %v966 = vadd.f32 0.0, %v965
        %v967 = vpop.f32.mrf.mxu0
        %v968 = vpop.f32.mrf.mxu0
        %v969 = vpop.f32.mrf.mxu0
        %970 = vdwg.mxu0
        %v971 = vmul.f32 %v966, 0.35355338
        %v972 = vld [vmem:[#allocation8] sm:$0xf]
        %v973 = vld [vmem:[#allocation8 + $0x4] sm:$0xf]
        %v974 = vld [vmem:[#allocation8 + $0x8] sm:$0xf]
        %v975 = vld [vmem:[#allocation8 + $0xc] sm:$0xf]
        %v980 = vunpack.c.l.b16 %v972
        %v981 = vunpack.c.l.b16 %v973
        %v982 = vunpack.c.l.b16 %v974
        %v983 = vunpack.c.l.b16 %v975
        %v984 = vpack.c.b16 %v981, %v980
        %v985 = vpack.c.b16 %v983, %v982
        %v989 = vsel %vm927, %v909, 0
        %991 = vmatprep.subr.bf16.mxu0 0
        %992 = vmatpush1.bf16.msra.mxu0 0
        %993 = vmatprep.subr.bf16.mxu0 0
        %994 = vmatpush1.bf16.msra.mxu0 0
        %995 = vmatprep.subr.bf16.mxu0 0
        %996 = vmatpush1.bf16.msra.mxu0 0
        %997 = vmatprep.subr.bf16.mxu0 0
        %998 = vmatpush1.bf16.msra.mxu0 0
        %999 = vmatprep.subr.bf16.mxu0 0
        %1000 = vmatpush1.bf16.msra.mxu0 0
        %1001 = vmatprep.subr.bf16.mxu0 0
        %1002 = vmatpush1.bf16.msra.mxu0 0
        %1003 = vmatprep.subr.bf16.mxu0 0
        %1004 = vmatpush1.bf16.msra.mxu0 %v985
        %1005 = vmatprep.subr.bf16.mxu0 0
        %1006 = vmatpush1.bf16.msra.mxu0 %v984
        %1007 = vmatprep.subr.bf16.mxu0 0
        %1008 = vmatpush2.bf16.msra.mxu0 0
        %1009 = vmatprep.subr.bf16.mxu0 0
        %1010 = vmatpush2.bf16.msra.mxu0 0
        %1011 = vmatprep.subr.bf16.mxu0 0
        %1012 = vmatpush2.bf16.msra.mxu0 0
        %1013 = vmatprep.subr.bf16.mxu0 0
        %1014 = vmatpush2.bf16.msra.mxu0 0
        %1015 = vmatprep.subr.bf16.mxu0 0
        %1016 = vmatpush2.bf16.msra.mxu0 0
        %1017 = vmatprep.subr.bf16.mxu0 0
        %1018 = vmatpush2.bf16.msra.mxu0 0
        %1019 = vmatprep.subr.bf16.mxu0 0
        %1020 = vmatpush2.bf16.msra.mxu0 0
        %1021 = vmatprep.subr.bf16.mxu0 0
        %1022 = vmatpush2.bf16.msra.mxu0 0
        %1023 = vmatprep.mubr.bf16.mxu0 0
        %1024 = vmatmul.mubr.bf16.gmra.mxu0 %v989
        %v1025 = vpop.f32.mrf.mxu0
        %v1026 = vadd.f32 0.0, %v1025
        %v1027 = vpop.f32.mrf.mxu0
        %v1028 = vpop.f32.mrf.mxu0
        %v1029 = vpop.f32.mrf.mxu0
        %1030 = vdwg.mxu0
        %v1031 = vld [vmem:[#allocation10] sm:$0xf]
        %v1032 = vld [vmem:[#allocation10 + $0x4] sm:$0xf]
        %v1033 = vld [vmem:[#allocation10 + $0x8] sm:$0xf]
        %v1034 = vld [vmem:[#allocation10 + $0xc] sm:$0xf]
        %v1039 = vunpack.c.l.b16 %v1031
        %v1040 = vunpack.c.l.b16 %v1032
        %v1041 = vunpack.c.l.b16 %v1033
        %v1042 = vunpack.c.l.b16 %v1034
        %v1043 = vpack.c.b16 %v1040, %v1039
        %v1044 = vpack.c.b16 %v1042, %v1041
        %1047 = vmatprep.subr.bf16.mxu0 0
        %1048 = vmatpush1.bf16.msra.mxu0 0
        %1049 = vmatprep.subr.bf16.mxu0 0
        %1050 = vmatpush1.bf16.msra.mxu0 0
        %1051 = vmatprep.subr.bf16.mxu0 0
        %1052 = vmatpush1.bf16.msra.mxu0 0
        %1053 = vmatprep.subr.bf16.mxu0 0
        %1054 = vmatpush1.bf16.msra.mxu0 0
        %1055 = vmatprep.subr.bf16.mxu0 0
        %1056 = vmatpush1.bf16.msra.mxu0 0
        %1057 = vmatprep.subr.bf16.mxu0 0
        %1058 = vmatpush1.bf16.msra.mxu0 0
        %1059 = vmatprep.subr.bf16.mxu0 0
        %1060 = vmatpush1.bf16.msra.mxu0 %v1044
        %1061 = vmatprep.subr.bf16.mxu0 0
        %1062 = vmatpush1.bf16.msra.mxu0 %v1043
        %1063 = vmatprep.subr.bf16.mxu0 0
        %1064 = vmatpush2.bf16.msra.mxu0 0
        %1065 = vmatprep.subr.bf16.mxu0 0
        %1066 = vmatpush2.bf16.msra.mxu0 0
        %1067 = vmatprep.subr.bf16.mxu0 0
        %1068 = vmatpush2.bf16.msra.mxu0 0
        %1069 = vmatprep.subr.bf16.mxu0 0
        %1070 = vmatpush2.bf16.msra.mxu0 0
        %1071 = vmatprep.subr.bf16.mxu0 0
        %1072 = vmatpush2.bf16.msra.mxu0 0
        %1073 = vmatprep.subr.bf16.mxu0 0
        %1074 = vmatpush2.bf16.msra.mxu0 0
        %1075 = vmatprep.subr.bf16.mxu0 0
        %1076 = vmatpush2.bf16.msra.mxu0 0
        %1077 = vmatprep.subr.bf16.mxu0 0
        %1078 = vmatpush2.bf16.msra.mxu0 0
        %1079 = vmatprep.mubr.bf16.mxu0 0
        %1080 = vmatmul.mubr.bf16.gmra.mxu0 %v989
        %v1081 = vpop.f32.mrf.mxu0
        %v1082 = vadd.f32 0.0, %v1081
        %v1083 = vpop.f32.mrf.mxu0
        %v1084 = vpop.f32.mrf.mxu0
        %v1085 = vpop.f32.mrf.mxu0
        %1086 = vdwg.mxu0
        %1088 = vrot.lane.b32.xlu0 %v971, 120
        %v1089 = vpop.permute.xlu0 %1088
        %1091 = vrot.lane.b32.xlu0 %v971, 112
        %v1092 = vpop.permute.xlu0 %1091
        %1094 = vrot.lane.b32.xlu0 %v971, 104
        %v1095 = vpop.permute.xlu0 %1094
        %v1097 = vpack.c.bf16 %v971, %v971
        %v1098 = vpack.c.bf16 %v1089, %v1089
        %v1099 = vpack.c.bf16 %v1092, %v1092
        %v1100 = vpack.c.bf16 %v1095, %v1095
        %1102 = vrot.lane.b32.xlu0 %v1026, 120
        %v1103 = vpop.permute.xlu0 %1102
        %1105 = vrot.lane.b32.xlu0 %v1026, 112
        %v1106 = vpop.permute.xlu0 %1105
        %1108 = vrot.lane.b32.xlu0 %v1026, 104
        %v1109 = vpop.permute.xlu0 %1108
        %v1111 = vpack.c.bf16 %v1026, %v1026
        %v1112 = vpack.c.bf16 %v1103, %v1103
        %v1113 = vpack.c.bf16 %v1106, %v1106
        %v1114 = vpack.c.bf16 %v1109, %v1109
        %1116 = vrot.lane.b32.xlu0 %v1082, 120
        %v1117 = vpop.permute.xlu0 %1116
        %1119 = vrot.lane.b32.xlu0 %v1082, 112
        %v1120 = vpop.permute.xlu0 %1119
        %1122 = vrot.lane.b32.xlu0 %v1082, 104
        %v1123 = vpop.permute.xlu0 %1122
        %v1125 = vpack.c.bf16 %v1082, %v1082
        %v1126 = vpack.c.bf16 %v1117, %v1117
        %v1127 = vpack.c.bf16 %v1120, %v1120
        %v1128 = vpack.c.bf16 %v1123, %v1123
        %vm1129 = vcmask 64512
        %v1131 = vsel %vm1129, %v1097, 0
        %v1134 = vsel %vm1129, %v1111, 0
        %1136 = vmatprep.subr.bf16.mxu0 0
        %1137 = vmatpush1.bf16.xpose.msra.mxu0 0
        %1138 = vmatprep.subr.bf16.mxu0 0
        %1139 = vmatpush1.bf16.xpose.msra.mxu0 0
        %1140 = vmatprep.subr.bf16.mxu0 0
        %1141 = vmatpush1.bf16.xpose.msra.mxu0 0
        %1142 = vmatprep.subr.bf16.mxu0 0
        %1143 = vmatpush1.bf16.xpose.msra.mxu0 0
        %1144 = vmatprep.subr.bf16.mxu0 0
        %1145 = vmatpush1.bf16.xpose.msra.mxu0 0
        %1146 = vmatprep.subr.bf16.mxu0 0
        %1147 = vmatpush1.bf16.xpose.msra.mxu0 0
        %1148 = vmatprep.subr.bf16.mxu0 0
        %1149 = vmatpush1.bf16.xpose.msra.mxu0 0
        %1150 = vmatprep.subr.bf16.mxu0 0
        %1151 = vmatpush1.bf16.xpose.msra.mxu0 %v1134
        %1152 = vmatprep.subr.bf16.mxu0 0
        %1153 = vmatpush2.bf16.xpose.msra.mxu0 0
        %1154 = vmatprep.subr.bf16.mxu0 0
        %1155 = vmatpush2.bf16.xpose.msra.mxu0 0
        %1156 = vmatprep.subr.bf16.mxu0 0
        %1157 = vmatpush2.bf16.xpose.msra.mxu0 0
        %1158 = vmatprep.subr.bf16.mxu0 0
        %1159 = vmatpush2.bf16.xpose.msra.mxu0 0
        %1160 = vmatprep.subr.bf16.mxu0 0
        %1161 = vmatpush2.bf16.xpose.msra.mxu0 0
        %1162 = vmatprep.subr.bf16.mxu0 0
        %1163 = vmatpush2.bf16.xpose.msra.mxu0 0
        %1164 = vmatprep.subr.bf16.mxu0 0
        %1165 = vmatpush2.bf16.xpose.msra.mxu0 0
        %1166 = vmatprep.subr.bf16.mxu0 0
        %1167 = vmatpush2.bf16.xpose.msra.mxu0 0
        %1168 = vmatprep.mubr.bf16.mxu0 0
        %1169 = vmatmul.mubr.bf16.gmra.mxu0 %v1131
        %v1170 = vpop.f32.mrf.mxu0
        %v1171 = vadd.f32 %v906, %v1170
        %v1172 = vpop.f32.mrf.mxu0
        %v1173 = vpop.f32.mrf.mxu0
        %v1174 = vpop.f32.mrf.mxu0
        %1175 = vdwg.mxu0
        %v1177 = vsel %vm1129, %v1098, 0
        %v1180 = vsel %vm1129, %v1112, 0
        %1182 = vmatprep.subr.bf16.mxu0 0
        %1183 = vmatpush1.bf16.xpose.msra.mxu0 0
        %1184 = vmatprep.subr.bf16.mxu0 0
        %1185 = vmatpush1.bf16.xpose.msra.mxu0 0
        %1186 = vmatprep.subr.bf16.mxu0 0
        %1187 = vmatpush1.bf16.xpose.msra.mxu0 0
        %1188 = vmatprep.subr.bf16.mxu0 0
        %1189 = vmatpush1.bf16.xpose.msra.mxu0 0
        %1190 = vmatprep.subr.bf16.mxu0 0
        %1191 = vmatpush1.bf16.xpose.msra.mxu0 0
        %1192 = vmatprep.subr.bf16.mxu0 0
        %1193 = vmatpush1.bf16.xpose.msra.mxu0 0
        %1194 = vmatprep.subr.bf16.mxu0 0
        %1195 = vmatpush1.bf16.xpose.msra.mxu0 0
        %1196 = vmatprep.subr.bf16.mxu0 0
        %1197 = vmatpush1.bf16.xpose.msra.mxu0 %v1180
        %1198 = vmatprep.subr.bf16.mxu0 0
        %1199 = vmatpush2.bf16.xpose.msra.mxu0 0
        %1200 = vmatprep.subr.bf16.mxu0 0
        %1201 = vmatpush2.bf16.xpose.msra.mxu0 0
        %1202 = vmatprep.subr.bf16.mxu0 0
        %1203 = vmatpush2.bf16.xpose.msra.mxu0 0
        %1204 = vmatprep.subr.bf16.mxu0 0
        %1205 = vmatpush2.bf16.xpose.msra.mxu0 0
        %1206 = vmatprep.subr.bf16.mxu0 0
        %1207 = vmatpush2.bf16.xpose.msra.mxu0 0
        %1208 = vmatprep.subr.bf16.mxu0 0
        %1209 = vmatpush2.bf16.xpose.msra.mxu0 0
        %1210 = vmatprep.subr.bf16.mxu0 0
        %1211 = vmatpush2.bf16.xpose.msra.mxu0 0
        %1212 = vmatprep.subr.bf16.mxu0 0
        %1213 = vmatpush2.bf16.xpose.msra.mxu0 0
        %1214 = vmatprep.mubr.bf16.mxu0 0
        %1215 = vmatmul.mubr.bf16.gmra.mxu0 %v1177
        %v1216 = vpop.f32.mrf.mxu0
        %v1217 = vadd.f32 %v906, %v1216
        %v1218 = vpop.f32.mrf.mxu0
        %v1219 = vpop.f32.mrf.mxu0
        %v1220 = vpop.f32.mrf.mxu0
        %1221 = vdwg.mxu0
        %v1223 = vsel %vm1129, %v1099, 0
        %v1226 = vsel %vm1129, %v1113, 0
        %1228 = vmatprep.subr.bf16.mxu0 0
        %1229 = vmatpush1.bf16.xpose.msra.mxu0 0
        %1230 = vmatprep.subr.bf16.mxu0 0
        %1231 = vmatpush1.bf16.xpose.msra.mxu0 0
        %1232 = vmatprep.subr.bf16.mxu0 0
        %1233 = vmatpush1.bf16.xpose.msra.mxu0 0
        %1234 = vmatprep.subr.bf16.mxu0 0
        %1235 = vmatpush1.bf16.xpose.msra.mxu0 0
        %1236 = vmatprep.subr.bf16.mxu0 0
        %1237 = vmatpush1.bf16.xpose.msra.mxu0 0
        %1238 = vmatprep.subr.bf16.mxu0 0
        %1239 = vmatpush1.bf16.xpose.msra.mxu0 0
        %1240 = vmatprep.subr.bf16.mxu0 0
        %1241 = vmatpush1.bf16.xpose.msra.mxu0 0
        %1242 = vmatprep.subr.bf16.mxu0 0
        %1243 = vmatpush1.bf16.xpose.msra.mxu0 %v1226
        %1244 = vmatprep.subr.bf16.mxu0 0
        %1245 = vmatpush2.bf16.xpose.msra.mxu0 0
        %1246 = vmatprep.subr.bf16.mxu0 0
        %1247 = vmatpush2.bf16.xpose.msra.mxu0 0
        %1248 = vmatprep.subr.bf16.mxu0 0
        %1249 = vmatpush2.bf16.xpose.msra.mxu0 0
        %1250 = vmatprep.subr.bf16.mxu0 0
        %1251 = vmatpush2.bf16.xpose.msra.mxu0 0
        %1252 = vmatprep.subr.bf16.mxu0 0
        %1253 = vmatpush2.bf16.xpose.msra.mxu0 0
        %1254 = vmatprep.subr.bf16.mxu0 0
        %1255 = vmatpush2.bf16.xpose.msra.mxu0 0
        %1256 = vmatprep.subr.bf16.mxu0 0
        %1257 = vmatpush2.bf16.xpose.msra.mxu0 0
        %1258 = vmatprep.subr.bf16.mxu0 0
        %1259 = vmatpush2.bf16.xpose.msra.mxu0 0
        %1260 = vmatprep.mubr.bf16.mxu0 0
        %1261 = vmatmul.mubr.bf16.gmra.mxu0 %v1223
        %v1262 = vpop.f32.mrf.mxu0
        %v1263 = vadd.f32 %v906, %v1262
        %v1264 = vpop.f32.mrf.mxu0
        %v1265 = vpop.f32.mrf.mxu0
        %v1266 = vpop.f32.mrf.mxu0
        %1267 = vdwg.mxu0
        %v1269 = vsel %vm1129, %v1100, 0
        %v1272 = vsel %vm1129, %v1114, 0
        %1274 = vmatprep.subr.bf16.mxu0 0
        %1275 = vmatpush1.bf16.xpose.msra.mxu0 0
        %1276 = vmatprep.subr.bf16.mxu0 0
        %1277 = vmatpush1.bf16.xpose.msra.mxu0 0
        %1278 = vmatprep.subr.bf16.mxu0 0
        %1279 = vmatpush1.bf16.xpose.msra.mxu0 0
        %1280 = vmatprep.subr.bf16.mxu0 0
        %1281 = vmatpush1.bf16.xpose.msra.mxu0 0
        %1282 = vmatprep.subr.bf16.mxu0 0
        %1283 = vmatpush1.bf16.xpose.msra.mxu0 0
        %1284 = vmatprep.subr.bf16.mxu0 0
        %1285 = vmatpush1.bf16.xpose.msra.mxu0 0
        %1286 = vmatprep.subr.bf16.mxu0 0
        %1287 = vmatpush1.bf16.xpose.msra.mxu0 0
        %1288 = vmatprep.subr.bf16.mxu0 0
        %1289 = vmatpush1.bf16.xpose.msra.mxu0 %v1272
        %1290 = vmatprep.subr.bf16.mxu0 0
        %1291 = vmatpush2.bf16.xpose.msra.mxu0 0
        %1292 = vmatprep.subr.bf16.mxu0 0
        %1293 = vmatpush2.bf16.xpose.msra.mxu0 0
        %1294 = vmatprep.subr.bf16.mxu0 0
        %1295 = vmatpush2.bf16.xpose.msra.mxu0 0
        %1296 = vmatprep.subr.bf16.mxu0 0
        %1297 = vmatpush2.bf16.xpose.msra.mxu0 0
        %1298 = vmatprep.subr.bf16.mxu0 0
        %1299 = vmatpush2.bf16.xpose.msra.mxu0 0
        %1300 = vmatprep.subr.bf16.mxu0 0
        %1301 = vmatpush2.bf16.xpose.msra.mxu0 0
        %1302 = vmatprep.subr.bf16.mxu0 0
        %1303 = vmatpush2.bf16.xpose.msra.mxu0 0
        %1304 = vmatprep.subr.bf16.mxu0 0
        %1305 = vmatpush2.bf16.xpose.msra.mxu0 0
        %1306 = vmatprep.mubr.bf16.mxu0 0
        %1307 = vmatmul.mubr.bf16.gmra.mxu0 %v1269
        %v1308 = vpop.f32.mrf.mxu0
        %v1309 = vadd.f32 %v906, %v1308
        %v1310 = vpop.f32.mrf.mxu0
        %v1311 = vpop.f32.mrf.mxu0
        %v1312 = vpop.f32.mrf.mxu0
        %1313 = vdwg.mxu0
        %v1314 = vsel %vm1129, %v1171, -inf
        %1315 = vmax.xlane.f32.xlu0 %v1314
        %v1316 = vpop.xlane.xlu0 %1315
        %v1317 = vsel %vm1129, %v1217, -inf
        %1318 = vmax.xlane.f32.xlu0 %v1317
        %v1319 = vpop.xlane.xlu0 %1318
        %v1320 = vsel %vm1129, %v1263, -inf
        %1321 = vmax.xlane.f32.xlu0 %v1320
        %v1322 = vpop.xlane.xlu0 %1321
        %v1323 = vsel %vm1129, %v1309, -inf
        %1324 = vmax.xlane.f32.xlu0 %v1323
        %v1325 = vpop.xlane.xlu0 %1324
        %v1326 = vsub.f32 %v1171, %v1316
        %v1327 = vsub.f32 %v1217, %v1319
        %v1328 = vsub.f32 %v1263, %v1322
        %v1329 = vsub.f32 %v1309, %v1325
        %v1330 = vmul.f32 %v1326, 1.442695
        %v1331 = vpow.pop %v1330
        %v1332 = vmul.f32 %v1327, 1.442695
        %v1333 = vpow.pop %v1332
        %v1334 = vmul.f32 %v1328, 1.442695
        %v1335 = vpow.pop %v1334
        %v1336 = vmul.f32 %v1329, 1.442695
        %v1337 = vpow.pop %v1336
        %v1338 = vsel %vm1129, %v1331, 0.0
        %1339 = vadd.xlane.f32.xlu0 %v1338
        %v1340 = vpop.xlane.xlu0 %1339
        %v1341 = vsel %vm1129, %v1333, 0.0
        %1342 = vadd.xlane.f32.xlu0 %v1341
        %v1343 = vpop.xlane.xlu0 %1342
        %v1344 = vsel %vm1129, %v1335, 0.0
        %1345 = vadd.xlane.f32.xlu0 %v1344
        %v1346 = vpop.xlane.xlu0 %1345
        %v1347 = vsel %vm1129, %v1337, 0.0
        %1348 = vadd.xlane.f32.xlu0 %v1347
        %v1349 = vpop.xlane.xlu0 %1348
        %v1350 = vrcp.pop %v1340
        %v1351 = vrcp.pop %v1343
        %v1352 = vrcp.pop %v1346
        %v1353 = vrcp.pop %v1349
        %v1354 = vmul.f32 %v1331, %v1350
        %v1355 = vmul.f32 %v1333, %v1351
        %v1356 = vmul.f32 %v1335, %v1352
        %v1357 = vmul.f32 %v1337, %v1353
        %1358 = vst.msk [vmem:[%s879] sm:$0xff] %vm1129, %v1354
        %1359 = vst.msk [vmem:[%s879 + $0x8] sm:$0xff] %vm1129, %v1355
        %1360 = vst.msk [vmem:[%s879 + $0x10] sm:$0xff] %vm1129, %v1356
        %1361 = vst.msk [vmem:[%s879 + $0x18] sm:$0xff] %vm1129, %v1357
        %v1362 = vpack.c.bf16 %v1354, %v1354
        %v1363 = vpack.c.bf16 %v1355, %v1355
        %v1364 = vpack.c.bf16 %v1356, %v1356
        %v1365 = vpack.c.bf16 %v1357, %v1357
        %v1367 = vsel %vm1129, %v1362, 0
        %vm1369 = vcmask 1043456
        %v1371 = vsel %vm1369, %v1125, 0
        %1373 = vmatprep.subr.bf16.mxu0 0
        %1374 = vmatpush1.bf16.msra.mxu0 0
        %1375 = vmatprep.subr.bf16.mxu0 0
        %1376 = vmatpush1.bf16.msra.mxu0 0
        %1377 = vmatprep.subr.bf16.mxu0 0
        %1378 = vmatpush1.bf16.msra.mxu0 0
        %1379 = vmatprep.subr.bf16.mxu0 0
        %1380 = vmatpush1.bf16.msra.mxu0 0
        %1381 = vmatprep.subr.bf16.mxu0 0
        %1382 = vmatpush1.bf16.msra.mxu0 0
        %1383 = vmatprep.subr.bf16.mxu0 0
        %1384 = vmatpush1.bf16.msra.mxu0 0
        %1385 = vmatprep.subr.bf16.mxu0 0
        %1386 = vmatpush1.bf16.msra.mxu0 0
        %1387 = vmatprep.subr.bf16.mxu0 0
        %1388 = vmatpush1.bf16.msra.mxu0 %v1371
        %1389 = vmatprep.subr.bf16.mxu0 0
        %1390 = vmatpush2.bf16.msra.mxu0 0
        %1391 = vmatprep.subr.bf16.mxu0 0
        %1392 = vmatpush2.bf16.msra.mxu0 0
        %1393 = vmatprep.subr.bf16.mxu0 0
        %1394 = vmatpush2.bf16.msra.mxu0 0
        %1395 = vmatprep.subr.bf16.mxu0 0
        %1396 = vmatpush2.bf16.msra.mxu0 0
        %1397 = vmatprep.subr.bf16.mxu0 0
        %1398 = vmatpush2.bf16.msra.mxu0 0
        %1399 = vmatprep.subr.bf16.mxu0 0
        %1400 = vmatpush2.bf16.msra.mxu0 0
        %1401 = vmatprep.subr.bf16.mxu0 0
        %1402 = vmatpush2.bf16.msra.mxu0 0
        %1403 = vmatprep.subr.bf16.mxu0 0
        %1404 = vmatpush2.bf16.msra.mxu0 0
        %1405 = vmatprep.mubr.bf16.mxu0 0
        %1406 = vmatmul.mubr.bf16.gmra.mxu0 %v1367
        %v1407 = vpop.f32.mrf.mxu0
        %v1408 = vadd.f32 0.0, %v1407
        %v1409 = vpop.f32.mrf.mxu0
        %v1410 = vpop.f32.mrf.mxu0
        %v1411 = vpop.f32.mrf.mxu0
        %1412 = vdwg.mxu0
        %v1414 = vsel %vm1129, %v1363, 0
        %v1417 = vsel %vm1369, %v1126, 0
        %1419 = vmatprep.subr.bf16.mxu0 0
        %1420 = vmatpush1.bf16.msra.mxu0 0
        %1421 = vmatprep.subr.bf16.mxu0 0
        %1422 = vmatpush1.bf16.msra.mxu0 0
        %1423 = vmatprep.subr.bf16.mxu0 0
        %1424 = vmatpush1.bf16.msra.mxu0 0
        %1425 = vmatprep.subr.bf16.mxu0 0
        %1426 = vmatpush1.bf16.msra.mxu0 0
        %1427 = vmatprep.subr.bf16.mxu0 0
        %1428 = vmatpush1.bf16.msra.mxu0 0
        %1429 = vmatprep.subr.bf16.mxu0 0
        %1430 = vmatpush1.bf16.msra.mxu0 0
        %1431 = vmatprep.subr.bf16.mxu0 0
        %1432 = vmatpush1.bf16.msra.mxu0 0
        %1433 = vmatprep.subr.bf16.mxu0 0
        %1434 = vmatpush1.bf16.msra.mxu0 %v1417
        %1435 = vmatprep.subr.bf16.mxu0 0
        %1436 = vmatpush2.bf16.msra.mxu0 0
        %1437 = vmatprep.subr.bf16.mxu0 0
        %1438 = vmatpush2.bf16.msra.mxu0 0
        %1439 = vmatprep.subr.bf16.mxu0 0
        %1440 = vmatpush2.bf16.msra.mxu0 0
        %1441 = vmatprep.subr.bf16.mxu0 0
        %1442 = vmatpush2.bf16.msra.mxu0 0
        %1443 = vmatprep.subr.bf16.mxu0 0
        %1444 = vmatpush2.bf16.msra.mxu0 0
        %1445 = vmatprep.subr.bf16.mxu0 0
        %1446 = vmatpush2.bf16.msra.mxu0 0
        %1447 = vmatprep.subr.bf16.mxu0 0
        %1448 = vmatpush2.bf16.msra.mxu0 0
        %1449 = vmatprep.subr.bf16.mxu0 0
        %1450 = vmatpush2.bf16.msra.mxu0 0
        %1451 = vmatprep.mubr.bf16.mxu0 0
        %1452 = vmatmul.mubr.bf16.gmra.mxu0 %v1414
        %v1453 = vpop.f32.mrf.mxu0
        %v1454 = vadd.f32 0.0, %v1453
        %v1455 = vpop.f32.mrf.mxu0
        %v1456 = vpop.f32.mrf.mxu0
        %v1457 = vpop.f32.mrf.mxu0
        %1458 = vdwg.mxu0
        %v1460 = vsel %vm1129, %v1364, 0
        %v1463 = vsel %vm1369, %v1127, 0
        %1465 = vmatprep.subr.bf16.mxu0 0
        %1466 = vmatpush1.bf16.msra.mxu0 0
        %1467 = vmatprep.subr.bf16.mxu0 0
        %1468 = vmatpush1.bf16.msra.mxu0 0
        %1469 = vmatprep.subr.bf16.mxu0 0
        %1470 = vmatpush1.bf16.msra.mxu0 0
        %1471 = vmatprep.subr.bf16.mxu0 0
        %1472 = vmatpush1.bf16.msra.mxu0 0
        %1473 = vmatprep.subr.bf16.mxu0 0
        %1474 = vmatpush1.bf16.msra.mxu0 0
        %1475 = vmatprep.subr.bf16.mxu0 0
        %1476 = vmatpush1.bf16.msra.mxu0 0
        %1477 = vmatprep.subr.bf16.mxu0 0
        %1478 = vmatpush1.bf16.msra.mxu0 0
        %1479 = vmatprep.subr.bf16.mxu0 0
        %1480 = vmatpush1.bf16.msra.mxu0 %v1463
        %1481 = vmatprep.subr.bf16.mxu0 0
        %1482 = vmatpush2.bf16.msra.mxu0 0
        %1483 = vmatprep.subr.bf16.mxu0 0
        %1484 = vmatpush2.bf16.msra.mxu0 0
        %1485 = vmatprep.subr.bf16.mxu0 0
        %1486 = vmatpush2.bf16.msra.mxu0 0
        %1487 = vmatprep.subr.bf16.mxu0 0
        %1488 = vmatpush2.bf16.msra.mxu0 0
        %1489 = vmatprep.subr.bf16.mxu0 0
        %1490 = vmatpush2.bf16.msra.mxu0 0
        %1491 = vmatprep.subr.bf16.mxu0 0
        %1492 = vmatpush2.bf16.msra.mxu0 0
        %1493 = vmatprep.subr.bf16.mxu0 0
        %1494 = vmatpush2.bf16.msra.mxu0 0
        %1495 = vmatprep.subr.bf16.mxu0 0
        %1496 = vmatpush2.bf16.msra.mxu0 0
        %1497 = vmatprep.mubr.bf16.mxu0 0
        %1498 = vmatmul.mubr.bf16.gmra.mxu0 %v1460
        %v1499 = vpop.f32.mrf.mxu0
        %v1500 = vadd.f32 0.0, %v1499
        %v1501 = vpop.f32.mrf.mxu0
        %v1502 = vpop.f32.mrf.mxu0
        %v1503 = vpop.f32.mrf.mxu0
        %1504 = vdwg.mxu0
        %v1506 = vsel %vm1129, %v1365, 0
        %v1509 = vsel %vm1369, %v1128, 0
        %1511 = vmatprep.subr.bf16.mxu0 0
        %1512 = vmatpush1.bf16.msra.mxu0 0
        %1513 = vmatprep.subr.bf16.mxu0 0
        %1514 = vmatpush1.bf16.msra.mxu0 0
        %1515 = vmatprep.subr.bf16.mxu0 0
        %1516 = vmatpush1.bf16.msra.mxu0 0
        %1517 = vmatprep.subr.bf16.mxu0 0
        %1518 = vmatpush1.bf16.msra.mxu0 0
        %1519 = vmatprep.subr.bf16.mxu0 0
        %1520 = vmatpush1.bf16.msra.mxu0 0
        %1521 = vmatprep.subr.bf16.mxu0 0
        %1522 = vmatpush1.bf16.msra.mxu0 0
        %1523 = vmatprep.subr.bf16.mxu0 0
        %1524 = vmatpush1.bf16.msra.mxu0 0
        %1525 = vmatprep.subr.bf16.mxu0 0
        %1526 = vmatpush1.bf16.msra.mxu0 %v1509
        %1527 = vmatprep.subr.bf16.mxu0 0
        %1528 = vmatpush2.bf16.msra.mxu0 0
        %1529 = vmatprep.subr.bf16.mxu0 0
        %1530 = vmatpush2.bf16.msra.mxu0 0
        %1531 = vmatprep.subr.bf16.mxu0 0
        %1532 = vmatpush2.bf16.msra.mxu0 0
        %1533 = vmatprep.subr.bf16.mxu0 0
        %1534 = vmatpush2.bf16.msra.mxu0 0
        %1535 = vmatprep.subr.bf16.mxu0 0
        %1536 = vmatpush2.bf16.msra.mxu0 0
        %1537 = vmatprep.subr.bf16.mxu0 0
        %1538 = vmatpush2.bf16.msra.mxu0 0
        %1539 = vmatprep.subr.bf16.mxu0 0
        %1540 = vmatpush2.bf16.msra.mxu0 0
        %1541 = vmatprep.subr.bf16.mxu0 0
        %1542 = vmatpush2.bf16.msra.mxu0 0
        %1543 = vmatprep.mubr.bf16.mxu0 0
        %1544 = vmatmul.mubr.bf16.gmra.mxu0 %v1506
        %v1545 = vpop.f32.mrf.mxu0
        %v1546 = vadd.f32 0.0, %v1545
        %v1547 = vpop.f32.mrf.mxu0
        %v1548 = vpop.f32.mrf.mxu0
        %v1549 = vpop.f32.mrf.mxu0
        %1550 = vdwg.mxu0
        %1552 = vrot.lane.b32.xlu0 %v1454, 8
        %v1553 = vpop.permute.xlu0 %1552
        %1556 = vrot.lane.b32.xlu0 %v1500, 16
        %v1557 = vpop.permute.xlu0 %1556
        %1560 = vrot.lane.b32.xlu0 %v1546, 24
        %v1561 = vpop.permute.xlu0 %1560
        %v1563 = vsel %vm1129, %v1408, %v1553
        %vm1564 = vcmask 130048
        %v1565 = vsel %vm1564, %v1563, %v1557
        %vm1566 = vcmask 195584
        %v1567 = vsel %vm1566, %v1565, %v1561
        %v1568 = vpack.c.bf16 %v1567, %v1567
        %v1569 = vld [vmem:[#allocation11] sm:$0xf]
        %v1570 = vld [vmem:[#allocation11 + $0x4] sm:$0xf]
        %v1571 = vld [vmem:[#allocation11 + $0x8] sm:$0xf]
        %v1572 = vld [vmem:[#allocation11 + $0xc] sm:$0xf]
        %v1577 = vunpack.c.l.b16 %v1569
        %v1578 = vunpack.c.l.b16 %v1570
        %v1579 = vunpack.c.l.b16 %v1571
        %v1580 = vunpack.c.l.b16 %v1572
        %v1581 = vpack.c.b16 %v1578, %v1577
        %v1582 = vpack.c.b16 %v1580, %v1579
        %v1586 = vsel %vm927, %v1568, 0
        %1588 = vmatprep.subr.bf16.mxu0 0
        %1589 = vmatpush1.bf16.msra.mxu0 0
        %1590 = vmatprep.subr.bf16.mxu0 0
        %1591 = vmatpush1.bf16.msra.mxu0 0
        %1592 = vmatprep.subr.bf16.mxu0 0
        %1593 = vmatpush1.bf16.msra.mxu0 0
        %1594 = vmatprep.subr.bf16.mxu0 0
        %1595 = vmatpush1.bf16.msra.mxu0 0
        %1596 = vmatprep.subr.bf16.mxu0 0
        %1597 = vmatpush1.bf16.msra.mxu0 0
        %1598 = vmatprep.subr.bf16.mxu0 0
        %1599 = vmatpush1.bf16.msra.mxu0 0
        %1600 = vmatprep.subr.bf16.mxu0 0
        %1601 = vmatpush1.bf16.msra.mxu0 %v1582
        %1602 = vmatprep.subr.bf16.mxu0 0
        %1603 = vmatpush1.bf16.msra.mxu0 %v1581
        %1604 = vmatprep.subr.bf16.mxu0 0
        %1605 = vmatpush2.bf16.msra.mxu0 0
        %1606 = vmatprep.subr.bf16.mxu0 0
        %1607 = vmatpush2.bf16.msra.mxu0 0
        %1608 = vmatprep.subr.bf16.mxu0 0
        %1609 = vmatpush2.bf16.msra.mxu0 0
        %1610 = vmatprep.subr.bf16.mxu0 0
        %1611 = vmatpush2.bf16.msra.mxu0 0
        %1612 = vmatprep.subr.bf16.mxu0 0
        %1613 = vmatpush2.bf16.msra.mxu0 0
        %1614 = vmatprep.subr.bf16.mxu0 0
        %1615 = vmatpush2.bf16.msra.mxu0 0
        %1616 = vmatprep.subr.bf16.mxu0 0
        %1617 = vmatpush2.bf16.msra.mxu0 0
        %1618 = vmatprep.subr.bf16.mxu0 0
        %1619 = vmatpush2.bf16.msra.mxu0 0
        %1620 = vmatprep.mubr.bf16.mxu0 0
        %1621 = vmatmul.mubr.bf16.gmra.mxu0 %v1586
        %v1622 = vpop.f32.mrf.mxu0
        %v1623 = vadd.f32 0.0, %v1622
        %v1624 = vpop.f32.mrf.mxu0
        %v1625 = vpop.f32.mrf.mxu0
        %v1626 = vpop.f32.mrf.mxu0
        %1627 = vdwg.mxu0
        %v1628 = vmul.f32 %v1623, 0.35355338
        %v1629 = vld [vmem:[#allocation13] sm:$0xf]
        %v1630 = vld [vmem:[#allocation13 + $0x4] sm:$0xf]
        %v1631 = vld [vmem:[#allocation13 + $0x8] sm:$0xf]
        %v1632 = vld [vmem:[#allocation13 + $0xc] sm:$0xf]
        %v1637 = vunpack.c.l.b16 %v1629
        %v1638 = vunpack.c.l.b16 %v1630
        %v1639 = vunpack.c.l.b16 %v1631
        %v1640 = vunpack.c.l.b16 %v1632
        %v1641 = vpack.c.b16 %v1638, %v1637
        %v1642 = vpack.c.b16 %v1640, %v1639
        %v1646 = vsel %vm927, %v910, 0
        %1648 = vmatprep.subr.bf16.mxu0 0
        %1649 = vmatpush1.bf16.msra.mxu0 0
        %1650 = vmatprep.subr.bf16.mxu0 0
        %1651 = vmatpush1.bf16.msra.mxu0 0
        %1652 = vmatprep.subr.bf16.mxu0 0
        %1653 = vmatpush1.bf16.msra.mxu0 0
        %1654 = vmatprep.subr.bf16.mxu0 0
        %1655 = vmatpush1.bf16.msra.mxu0 0
        %1656 = vmatprep.subr.bf16.mxu0 0
        %1657 = vmatpush1.bf16.msra.mxu0 0
        %1658 = vmatprep.subr.bf16.mxu0 0
        %1659 = vmatpush1.bf16.msra.mxu0 0
        %1660 = vmatprep.subr.bf16.mxu0 0
        %1661 = vmatpush1.bf16.msra.mxu0 %v1642
        %1662 = vmatprep.subr.bf16.mxu0 0
        %1663 = vmatpush1.bf16.msra.mxu0 %v1641
        %1664 = vmatprep.subr.bf16.mxu0 0
        %1665 = vmatpush2.bf16.msra.mxu0 0
        %1666 = vmatprep.subr.bf16.mxu0 0
        %1667 = vmatpush2.bf16.msra.mxu0 0
        %1668 = vmatprep.subr.bf16.mxu0 0
        %1669 = vmatpush2.bf16.msra.mxu0 0
        %1670 = vmatprep.subr.bf16.mxu0 0
        %1671 = vmatpush2.bf16.msra.mxu0 0
        %1672 = vmatprep.subr.bf16.mxu0 0
        %1673 = vmatpush2.bf16.msra.mxu0 0
        %1674 = vmatprep.subr.bf16.mxu0 0
        %1675 = vmatpush2.bf16.msra.mxu0 0
        %1676 = vmatprep.subr.bf16.mxu0 0
        %1677 = vmatpush2.bf16.msra.mxu0 0
        %1678 = vmatprep.subr.bf16.mxu0 0
        %1679 = vmatpush2.bf16.msra.mxu0 0
        %1680 = vmatprep.mubr.bf16.mxu0 0
        %1681 = vmatmul.mubr.bf16.gmra.mxu0 %v1646
        %v1682 = vpop.f32.mrf.mxu0
        %v1683 = vadd.f32 0.0, %v1682
        %v1684 = vpop.f32.mrf.mxu0
        %v1685 = vpop.f32.mrf.mxu0
        %v1686 = vpop.f32.mrf.mxu0
        %1687 = vdwg.mxu0
        %v1688 = vld [vmem:[#allocation14] sm:$0xf]
        %v1689 = vld [vmem:[#allocation14 + $0x4] sm:$0xf]
        %v1690 = vld [vmem:[#allocation14 + $0x8] sm:$0xf]
        %v1691 = vld [vmem:[#allocation14 + $0xc] sm:$0xf]
        %v1696 = vunpack.c.l.b16 %v1688
        %v1697 = vunpack.c.l.b16 %v1689
        %v1698 = vunpack.c.l.b16 %v1690
        %v1699 = vunpack.c.l.b16 %v1691
        %v1700 = vpack.c.b16 %v1697, %v1696
        %v1701 = vpack.c.b16 %v1699, %v1698
        %1704 = vmatprep.subr.bf16.mxu0 0
        %1705 = vmatpush1.bf16.msra.mxu0 0
        %1706 = vmatprep.subr.bf16.mxu0 0
        %1707 = vmatpush1.bf16.msra.mxu0 0
        %1708 = vmatprep.subr.bf16.mxu0 0
        %1709 = vmatpush1.bf16.msra.mxu0 0
        %1710 = vmatprep.subr.bf16.mxu0 0
        %1711 = vmatpush1.bf16.msra.mxu0 0
        %1712 = vmatprep.subr.bf16.mxu0 0
        %1713 = vmatpush1.bf16.msra.mxu0 0
        %1714 = vmatprep.subr.bf16.mxu0 0
        %1715 = vmatpush1.bf16.msra.mxu0 0
        %1716 = vmatprep.subr.bf16.mxu0 0
        %1717 = vmatpush1.bf16.msra.mxu0 %v1701
        %1718 = vmatprep.subr.bf16.mxu0 0
        %1719 = vmatpush1.bf16.msra.mxu0 %v1700
        %1720 = vmatprep.subr.bf16.mxu0 0
        %1721 = vmatpush2.bf16.msra.mxu0 0
        %1722 = vmatprep.subr.bf16.mxu0 0
        %1723 = vmatpush2.bf16.msra.mxu0 0
        %1724 = vmatprep.subr.bf16.mxu0 0
        %1725 = vmatpush2.bf16.msra.mxu0 0
        %1726 = vmatprep.subr.bf16.mxu0 0
        %1727 = vmatpush2.bf16.msra.mxu0 0
        %1728 = vmatprep.subr.bf16.mxu0 0
        %1729 = vmatpush2.bf16.msra.mxu0 0
        %1730 = vmatprep.subr.bf16.mxu0 0
        %1731 = vmatpush2.bf16.msra.mxu0 0
        %1732 = vmatprep.subr.bf16.mxu0 0
        %1733 = vmatpush2.bf16.msra.mxu0 0
        %1734 = vmatprep.subr.bf16.mxu0 0
        %1735 = vmatpush2.bf16.msra.mxu0 0
        %1736 = vmatprep.mubr.bf16.mxu0 0
        %1737 = vmatmul.mubr.bf16.gmra.mxu0 %v1646
        %v1738 = vpop.f32.mrf.mxu0
        %v1739 = vadd.f32 0.0, %v1738
        %v1740 = vpop.f32.mrf.mxu0
        %v1741 = vpop.f32.mrf.mxu0
        %v1742 = vpop.f32.mrf.mxu0
        %1743 = vdwg.mxu0
        %1745 = vrot.lane.b32.xlu0 %v1628, 120
        %v1746 = vpop.permute.xlu0 %1745
        %1748 = vrot.lane.b32.xlu0 %v1628, 112
        %v1749 = vpop.permute.xlu0 %1748
        %1751 = vrot.lane.b32.xlu0 %v1628, 104
        %v1752 = vpop.permute.xlu0 %1751
        %v1754 = vpack.c.bf16 %v1628, %v1628
        %v1755 = vpack.c.bf16 %v1746, %v1746
        %v1756 = vpack.c.bf16 %v1749, %v1749
        %v1757 = vpack.c.bf16 %v1752, %v1752
        %1759 = vrot.lane.b32.xlu0 %v1683, 120
        %v1760 = vpop.permute.xlu0 %1759
        %1762 = vrot.lane.b32.xlu0 %v1683, 112
        %v1763 = vpop.permute.xlu0 %1762
        %1765 = vrot.lane.b32.xlu0 %v1683, 104
        %v1766 = vpop.permute.xlu0 %1765
        %v1768 = vpack.c.bf16 %v1683, %v1683
        %v1769 = vpack.c.bf16 %v1760, %v1760
        %v1770 = vpack.c.bf16 %v1763, %v1763
        %v1771 = vpack.c.bf16 %v1766, %v1766
        %1773 = vrot.lane.b32.xlu0 %v1739, 120
        %v1774 = vpop.permute.xlu0 %1773
        %1776 = vrot.lane.b32.xlu0 %v1739, 112
        %v1777 = vpop.permute.xlu0 %1776
        %1779 = vrot.lane.b32.xlu0 %v1739, 104
        %v1780 = vpop.permute.xlu0 %1779
        %v1782 = vpack.c.bf16 %v1739, %v1739
        %v1783 = vpack.c.bf16 %v1774, %v1774
        %v1784 = vpack.c.bf16 %v1777, %v1777
        %v1785 = vpack.c.bf16 %v1780, %v1780
        %v1787 = vsel %vm1129, %v1754, 0
        %v1790 = vsel %vm1129, %v1768, 0
        %1792 = vmatprep.subr.bf16.mxu0 0
        %1793 = vmatpush1.bf16.xpose.msra.mxu0 0
        %1794 = vmatprep.subr.bf16.mxu0 0
        %1795 = vmatpush1.bf16.xpose.msra.mxu0 0
        %1796 = vmatprep.subr.bf16.mxu0 0
        %1797 = vmatpush1.bf16.xpose.msra.mxu0 0
        %1798 = vmatprep.subr.bf16.mxu0 0
        %1799 = vmatpush1.bf16.xpose.msra.mxu0 0
        %1800 = vmatprep.subr.bf16.mxu0 0
        %1801 = vmatpush1.bf16.xpose.msra.mxu0 0
        %1802 = vmatprep.subr.bf16.mxu0 0
        %1803 = vmatpush1.bf16.xpose.msra.mxu0 0
        %1804 = vmatprep.subr.bf16.mxu0 0
        %1805 = vmatpush1.bf16.xpose.msra.mxu0 0
        %1806 = vmatprep.subr.bf16.mxu0 0
        %1807 = vmatpush1.bf16.xpose.msra.mxu0 %v1790
        %1808 = vmatprep.subr.bf16.mxu0 0
        %1809 = vmatpush2.bf16.xpose.msra.mxu0 0
        %1810 = vmatprep.subr.bf16.mxu0 0
        %1811 = vmatpush2.bf16.xpose.msra.mxu0 0
        %1812 = vmatprep.subr.bf16.mxu0 0
        %1813 = vmatpush2.bf16.xpose.msra.mxu0 0
        %1814 = vmatprep.subr.bf16.mxu0 0
        %1815 = vmatpush2.bf16.xpose.msra.mxu0 0
        %1816 = vmatprep.subr.bf16.mxu0 0
        %1817 = vmatpush2.bf16.xpose.msra.mxu0 0
        %1818 = vmatprep.subr.bf16.mxu0 0
        %1819 = vmatpush2.bf16.xpose.msra.mxu0 0
        %1820 = vmatprep.subr.bf16.mxu0 0
        %1821 = vmatpush2.bf16.xpose.msra.mxu0 0
        %1822 = vmatprep.subr.bf16.mxu0 0
        %1823 = vmatpush2.bf16.xpose.msra.mxu0 0
        %1824 = vmatprep.mubr.bf16.mxu0 0
        %1825 = vmatmul.mubr.bf16.gmra.mxu0 %v1787
        %v1826 = vpop.f32.mrf.mxu0
        %v1827 = vadd.f32 %v907, %v1826
        %v1828 = vpop.f32.mrf.mxu0
        %v1829 = vpop.f32.mrf.mxu0
        %v1830 = vpop.f32.mrf.mxu0
        %1831 = vdwg.mxu0
        %v1833 = vsel %vm1129, %v1755, 0
        %v1836 = vsel %vm1129, %v1769, 0
        %1838 = vmatprep.subr.bf16.mxu0 0
        %1839 = vmatpush1.bf16.xpose.msra.mxu0 0
        %1840 = vmatprep.subr.bf16.mxu0 0
        %1841 = vmatpush1.bf16.xpose.msra.mxu0 0
        %1842 = vmatprep.subr.bf16.mxu0 0
        %1843 = vmatpush1.bf16.xpose.msra.mxu0 0
        %1844 = vmatprep.subr.bf16.mxu0 0
        %1845 = vmatpush1.bf16.xpose.msra.mxu0 0
        %1846 = vmatprep.subr.bf16.mxu0 0
        %1847 = vmatpush1.bf16.xpose.msra.mxu0 0
        %1848 = vmatprep.subr.bf16.mxu0 0
        %1849 = vmatpush1.bf16.xpose.msra.mxu0 0
        %1850 = vmatprep.subr.bf16.mxu0 0
        %1851 = vmatpush1.bf16.xpose.msra.mxu0 0
        %1852 = vmatprep.subr.bf16.mxu0 0
        %1853 = vmatpush1.bf16.xpose.msra.mxu0 %v1836
        %1854 = vmatprep.subr.bf16.mxu0 0
        %1855 = vmatpush2.bf16.xpose.msra.mxu0 0
        %1856 = vmatprep.subr.bf16.mxu0 0
        %1857 = vmatpush2.bf16.xpose.msra.mxu0 0
        %1858 = vmatprep.subr.bf16.mxu0 0
        %1859 = vmatpush2.bf16.xpose.msra.mxu0 0
        %1860 = vmatprep.subr.bf16.mxu0 0
        %1861 = vmatpush2.bf16.xpose.msra.mxu0 0
        %1862 = vmatprep.subr.bf16.mxu0 0
        %1863 = vmatpush2.bf16.xpose.msra.mxu0 0
        %1864 = vmatprep.subr.bf16.mxu0 0
        %1865 = vmatpush2.bf16.xpose.msra.mxu0 0
        %1866 = vmatprep.subr.bf16.mxu0 0
        %1867 = vmatpush2.bf16.xpose.msra.mxu0 0
        %1868 = vmatprep.subr.bf16.mxu0 0
        %1869 = vmatpush2.bf16.xpose.msra.mxu0 0
        %1870 = vmatprep.mubr.bf16.mxu0 0
        %1871 = vmatmul.mubr.bf16.gmra.mxu0 %v1833
        %v1872 = vpop.f32.mrf.mxu0
        %v1873 = vadd.f32 %v907, %v1872
        %v1874 = vpop.f32.mrf.mxu0
        %v1875 = vpop.f32.mrf.mxu0
        %v1876 = vpop.f32.mrf.mxu0
        %1877 = vdwg.mxu0
        %v1879 = vsel %vm1129, %v1756, 0
        %v1882 = vsel %vm1129, %v1770, 0
        %1884 = vmatprep.subr.bf16.mxu0 0
        %1885 = vmatpush1.bf16.xpose.msra.mxu0 0
        %1886 = vmatprep.subr.bf16.mxu0 0
        %1887 = vmatpush1.bf16.xpose.msra.mxu0 0
        %1888 = vmatprep.subr.bf16.mxu0 0
        %1889 = vmatpush1.bf16.xpose.msra.mxu0 0
        %1890 = vmatprep.subr.bf16.mxu0 0
        %1891 = vmatpush1.bf16.xpose.msra.mxu0 0
        %1892 = vmatprep.subr.bf16.mxu0 0
        %1893 = vmatpush1.bf16.xpose.msra.mxu0 0
        %1894 = vmatprep.subr.bf16.mxu0 0
        %1895 = vmatpush1.bf16.xpose.msra.mxu0 0
        %1896 = vmatprep.subr.bf16.mxu0 0
        %1897 = vmatpush1.bf16.xpose.msra.mxu0 0
        %1898 = vmatprep.subr.bf16.mxu0 0
        %1899 = vmatpush1.bf16.xpose.msra.mxu0 %v1882
        %1900 = vmatprep.subr.bf16.mxu0 0
        %1901 = vmatpush2.bf16.xpose.msra.mxu0 0
        %1902 = vmatprep.subr.bf16.mxu0 0
        %1903 = vmatpush2.bf16.xpose.msra.mxu0 0
        %1904 = vmatprep.subr.bf16.mxu0 0
        %1905 = vmatpush2.bf16.xpose.msra.mxu0 0
        %1906 = vmatprep.subr.bf16.mxu0 0
        %1907 = vmatpush2.bf16.xpose.msra.mxu0 0
        %1908 = vmatprep.subr.bf16.mxu0 0
        %1909 = vmatpush2.bf16.xpose.msra.mxu0 0
        %1910 = vmatprep.subr.bf16.mxu0 0
        %1911 = vmatpush2.bf16.xpose.msra.mxu0 0
        %1912 = vmatprep.subr.bf16.mxu0 0
        %1913 = vmatpush2.bf16.xpose.msra.mxu0 0
        %1914 = vmatprep.subr.bf16.mxu0 0
        %1915 = vmatpush2.bf16.xpose.msra.mxu0 0
        %1916 = vmatprep.mubr.bf16.mxu0 0
        %1917 = vmatmul.mubr.bf16.gmra.mxu0 %v1879
        %v1918 = vpop.f32.mrf.mxu0
        %v1919 = vadd.f32 %v907, %v1918
        %v1920 = vpop.f32.mrf.mxu0
        %v1921 = vpop.f32.mrf.mxu0
        %v1922 = vpop.f32.mrf.mxu0
        %1923 = vdwg.mxu0
        %v1925 = vsel %vm1129, %v1757, 0
        %v1928 = vsel %vm1129, %v1771, 0
        %1930 = vmatprep.subr.bf16.mxu0 0
        %1931 = vmatpush1.bf16.xpose.msra.mxu0 0
        %1932 = vmatprep.subr.bf16.mxu0 0
        %1933 = vmatpush1.bf16.xpose.msra.mxu0 0
        %1934 = vmatprep.subr.bf16.mxu0 0
        %1935 = vmatpush1.bf16.xpose.msra.mxu0 0
        %1936 = vmatprep.subr.bf16.mxu0 0
        %1937 = vmatpush1.bf16.xpose.msra.mxu0 0
        %1938 = vmatprep.subr.bf16.mxu0 0
        %1939 = vmatpush1.bf16.xpose.msra.mxu0 0
        %1940 = vmatprep.subr.bf16.mxu0 0
        %1941 = vmatpush1.bf16.xpose.msra.mxu0 0
        %1942 = vmatprep.subr.bf16.mxu0 0
        %1943 = vmatpush1.bf16.xpose.msra.mxu0 0
        %1944 = vmatprep.subr.bf16.mxu0 0
        %1945 = vmatpush1.bf16.xpose.msra.mxu0 %v1928
        %1946 = vmatprep.subr.bf16.mxu0 0
        %1947 = vmatpush2.bf16.xpose.msra.mxu0 0
        %1948 = vmatprep.subr.bf16.mxu0 0
        %1949 = vmatpush2.bf16.xpose.msra.mxu0 0
        %1950 = vmatprep.subr.bf16.mxu0 0
        %1951 = vmatpush2.bf16.xpose.msra.mxu0 0
        %1952 = vmatprep.subr.bf16.mxu0 0
        %1953 = vmatpush2.bf16.xpose.msra.mxu0 0
        %1954 = vmatprep.subr.bf16.mxu0 0
        %1955 = vmatpush2.bf16.xpose.msra.mxu0 0
        %1956 = vmatprep.subr.bf16.mxu0 0
        %1957 = vmatpush2.bf16.xpose.msra.mxu0 0
        %1958 = vmatprep.subr.bf16.mxu0 0
        %1959 = vmatpush2.bf16.xpose.msra.mxu0 0
        %1960 = vmatprep.subr.bf16.mxu0 0
        %1961 = vmatpush2.bf16.xpose.msra.mxu0 0
        %1962 = vmatprep.mubr.bf16.mxu0 0
        %1963 = vmatmul.mubr.bf16.gmra.mxu0 %v1925
        %v1964 = vpop.f32.mrf.mxu0
        %v1965 = vadd.f32 %v907, %v1964
        %v1966 = vpop.f32.mrf.mxu0
        %v1967 = vpop.f32.mrf.mxu0
        %v1968 = vpop.f32.mrf.mxu0
        %1969 = vdwg.mxu0
        %v1970 = vsel %vm1129, %v1827, -inf
        %1971 = vmax.xlane.f32.xlu0 %v1970
        %v1972 = vpop.xlane.xlu0 %1971
        %v1973 = vsel %vm1129, %v1873, -inf
        %1974 = vmax.xlane.f32.xlu0 %v1973
        %v1975 = vpop.xlane.xlu0 %1974
        %v1976 = vsel %vm1129, %v1919, -inf
        %1977 = vmax.xlane.f32.xlu0 %v1976
        %v1978 = vpop.xlane.xlu0 %1977
        %v1979 = vsel %vm1129, %v1965, -inf
        %1980 = vmax.xlane.f32.xlu0 %v1979
        %v1981 = vpop.xlane.xlu0 %1980
        %v1982 = vsub.f32 %v1827, %v1972
        %v1983 = vsub.f32 %v1873, %v1975
        %v1984 = vsub.f32 %v1919, %v1978
        %v1985 = vsub.f32 %v1965, %v1981
        %v1986 = vmul.f32 %v1982, 1.442695
        %v1987 = vpow.pop %v1986
        %v1988 = vmul.f32 %v1983, 1.442695
        %v1989 = vpow.pop %v1988
        %v1990 = vmul.f32 %v1984, 1.442695
        %v1991 = vpow.pop %v1990
        %v1992 = vmul.f32 %v1985, 1.442695
        %v1993 = vpow.pop %v1992
        %v1994 = vsel %vm1129, %v1987, 0.0
        %1995 = vadd.xlane.f32.xlu0 %v1994
        %v1996 = vpop.xlane.xlu0 %1995
        %v1997 = vsel %vm1129, %v1989, 0.0
        %1998 = vadd.xlane.f32.xlu0 %v1997
        %v1999 = vpop.xlane.xlu0 %1998
        %v2000 = vsel %vm1129, %v1991, 0.0
        %2001 = vadd.xlane.f32.xlu0 %v2000
        %v2002 = vpop.xlane.xlu0 %2001
        %v2003 = vsel %vm1129, %v1993, 0.0
        %2004 = vadd.xlane.f32.xlu0 %v2003
        %v2005 = vpop.xlane.xlu0 %2004
        %v2006 = vrcp.pop %v1996
        %v2007 = vrcp.pop %v1999
        %v2008 = vrcp.pop %v2002
        %v2009 = vrcp.pop %v2005
        %v2010 = vmul.f32 %v1987, %v2006
        %v2011 = vmul.f32 %v1989, %v2007
        %v2012 = vmul.f32 %v1991, %v2008
        %v2013 = vmul.f32 %v1993, %v2009
        %2014 = vst.msk [vmem:[%s886] sm:$0xff] %vm1129, %v2010
        %2015 = vst.msk [vmem:[%s886 + $0x8] sm:$0xff] %vm1129, %v2011
        %2016 = vst.msk [vmem:[%s886 + $0x10] sm:$0xff] %vm1129, %v2012
        %2017 = vst.msk [vmem:[%s886 + $0x18] sm:$0xff] %vm1129, %v2013
        %v2018 = vpack.c.bf16 %v2010, %v2010
        %v2019 = vpack.c.bf16 %v2011, %v2011
        %v2020 = vpack.c.bf16 %v2012, %v2012
        %v2021 = vpack.c.bf16 %v2013, %v2013
        %v2023 = vsel %vm1129, %v2018, 0
        %v2026 = vsel %vm1369, %v1782, 0
        %2028 = vmatprep.subr.bf16.mxu0 0
        %2029 = vmatpush1.bf16.msra.mxu0 0
        %2030 = vmatprep.subr.bf16.mxu0 0
        %2031 = vmatpush1.bf16.msra.mxu0 0
        %2032 = vmatprep.subr.bf16.mxu0 0
        %2033 = vmatpush1.bf16.msra.mxu0 0
        %2034 = vmatprep.subr.bf16.mxu0 0
        %2035 = vmatpush1.bf16.msra.mxu0 0
        %2036 = vmatprep.subr.bf16.mxu0 0
        %2037 = vmatpush1.bf16.msra.mxu0 0
        %2038 = vmatprep.subr.bf16.mxu0 0
        %2039 = vmatpush1.bf16.msra.mxu0 0
        %2040 = vmatprep.subr.bf16.mxu0 0
        %2041 = vmatpush1.bf16.msra.mxu0 0
        %2042 = vmatprep.subr.bf16.mxu0 0
        %2043 = vmatpush1.bf16.msra.mxu0 %v2026
        %2044 = vmatprep.subr.bf16.mxu0 0
        %2045 = vmatpush2.bf16.msra.mxu0 0
        %2046 = vmatprep.subr.bf16.mxu0 0
        %2047 = vmatpush2.bf16.msra.mxu0 0
        %2048 = vmatprep.subr.bf16.mxu0 0
        %2049 = vmatpush2.bf16.msra.mxu0 0
        %2050 = vmatprep.subr.bf16.mxu0 0
        %2051 = vmatpush2.bf16.msra.mxu0 0
        %2052 = vmatprep.subr.bf16.mxu0 0
        %2053 = vmatpush2.bf16.msra.mxu0 0
        %2054 = vmatprep.subr.bf16.mxu0 0
        %2055 = vmatpush2.bf16.msra.mxu0 0
        %2056 = vmatprep.subr.bf16.mxu0 0
        %2057 = vmatpush2.bf16.msra.mxu0 0
        %2058 = vmatprep.subr.bf16.mxu0 0
        %2059 = vmatpush2.bf16.msra.mxu0 0
        %2060 = vmatprep.mubr.bf16.mxu0 0
        %2061 = vmatmul.mubr.bf16.gmra.mxu0 %v2023
        %v2062 = vpop.f32.mrf.mxu0
        %v2063 = vadd.f32 0.0, %v2062
        %v2064 = vpop.f32.mrf.mxu0
        %v2065 = vpop.f32.mrf.mxu0
        %v2066 = vpop.f32.mrf.mxu0
        %2067 = vdwg.mxu0
        %v2069 = vsel %vm1129, %v2019, 0
        %v2072 = vsel %vm1369, %v1783, 0
        %2074 = vmatprep.subr.bf16.mxu0 0
        %2075 = vmatpush1.bf16.msra.mxu0 0
        %2076 = vmatprep.subr.bf16.mxu0 0
        %2077 = vmatpush1.bf16.msra.mxu0 0
        %2078 = vmatprep.subr.bf16.mxu0 0
        %2079 = vmatpush1.bf16.msra.mxu0 0
        %2080 = vmatprep.subr.bf16.mxu0 0
        %2081 = vmatpush1.bf16.msra.mxu0 0
        %2082 = vmatprep.subr.bf16.mxu0 0
        %2083 = vmatpush1.bf16.msra.mxu0 0
        %2084 = vmatprep.subr.bf16.mxu0 0
        %2085 = vmatpush1.bf16.msra.mxu0 0
        %2086 = vmatprep.subr.bf16.mxu0 0
        %2087 = vmatpush1.bf16.msra.mxu0 0
        %2088 = vmatprep.subr.bf16.mxu0 0
        %2089 = vmatpush1.bf16.msra.mxu0 %v2072
        %2090 = vmatprep.subr.bf16.mxu0 0
        %2091 = vmatpush2.bf16.msra.mxu0 0
        %2092 = vmatprep.subr.bf16.mxu0 0
        %2093 = vmatpush2.bf16.msra.mxu0 0
        %2094 = vmatprep.subr.bf16.mxu0 0
        %2095 = vmatpush2.bf16.msra.mxu0 0
        %2096 = vmatprep.subr.bf16.mxu0 0
        %2097 = vmatpush2.bf16.msra.mxu0 0
        %2098 = vmatprep.subr.bf16.mxu0 0
        %2099 = vmatpush2.bf16.msra.mxu0 0
        %2100 = vmatprep.subr.bf16.mxu0 0
        %2101 = vmatpush2.bf16.msra.mxu0 0
        %2102 = vmatprep.subr.bf16.mxu0 0
        %2103 = vmatpush2.bf16.msra.mxu0 0
        %2104 = vmatprep.subr.bf16.mxu0 0
        %2105 = vmatpush2.bf16.msra.mxu0 0
        %2106 = vmatprep.mubr.bf16.mxu0 0
        %2107 = vmatmul.mubr.bf16.gmra.mxu0 %v2069
        %v2108 = vpop.f32.mrf.mxu0
        %v2109 = vadd.f32 0.0, %v2108
        %v2110 = vpop.f32.mrf.mxu0
        %v2111 = vpop.f32.mrf.mxu0
        %v2112 = vpop.f32.mrf.mxu0
        %2113 = vdwg.mxu0
        %v2115 = vsel %vm1129, %v2020, 0
        %v2118 = vsel %vm1369, %v1784, 0
        %2120 = vmatprep.subr.bf16.mxu0 0
        %2121 = vmatpush1.bf16.msra.mxu0 0
        %2122 = vmatprep.subr.bf16.mxu0 0
        %2123 = vmatpush1.bf16.msra.mxu0 0
        %2124 = vmatprep.subr.bf16.mxu0 0
        %2125 = vmatpush1.bf16.msra.mxu0 0
        %2126 = vmatprep.subr.bf16.mxu0 0
        %2127 = vmatpush1.bf16.msra.mxu0 0
        %2128 = vmatprep.subr.bf16.mxu0 0
        %2129 = vmatpush1.bf16.msra.mxu0 0
        %2130 = vmatprep.subr.bf16.mxu0 0
        %2131 = vmatpush1.bf16.msra.mxu0 0
        %2132 = vmatprep.subr.bf16.mxu0 0
        %2133 = vmatpush1.bf16.msra.mxu0 0
        %2134 = vmatprep.subr.bf16.mxu0 0
        %2135 = vmatpush1.bf16.msra.mxu0 %v2118
        %2136 = vmatprep.subr.bf16.mxu0 0
        %2137 = vmatpush2.bf16.msra.mxu0 0
        %2138 = vmatprep.subr.bf16.mxu0 0
        %2139 = vmatpush2.bf16.msra.mxu0 0
        %2140 = vmatprep.subr.bf16.mxu0 0
        %2141 = vmatpush2.bf16.msra.mxu0 0
        %2142 = vmatprep.subr.bf16.mxu0 0
        %2143 = vmatpush2.bf16.msra.mxu0 0
        %2144 = vmatprep.subr.bf16.mxu0 0
        %2145 = vmatpush2.bf16.msra.mxu0 0
        %2146 = vmatprep.subr.bf16.mxu0 0
        %2147 = vmatpush2.bf16.msra.mxu0 0
        %2148 = vmatprep.subr.bf16.mxu0 0
        %2149 = vmatpush2.bf16.msra.mxu0 0
        %2150 = vmatprep.subr.bf16.mxu0 0
        %2151 = vmatpush2.bf16.msra.mxu0 0
        %2152 = vmatprep.mubr.bf16.mxu0 0
        %2153 = vmatmul.mubr.bf16.gmra.mxu0 %v2115
        %v2154 = vpop.f32.mrf.mxu0
        %v2155 = vadd.f32 0.0, %v2154
        %v2156 = vpop.f32.mrf.mxu0
        %v2157 = vpop.f32.mrf.mxu0
        %v2158 = vpop.f32.mrf.mxu0
        %2159 = vdwg.mxu0
        %v2161 = vsel %vm1129, %v2021, 0
        %v2164 = vsel %vm1369, %v1785, 0
        %2166 = vmatprep.subr.bf16.mxu0 0
        %2167 = vmatpush1.bf16.msra.mxu0 0
        %2168 = vmatprep.subr.bf16.mxu0 0
        %2169 = vmatpush1.bf16.msra.mxu0 0
        %2170 = vmatprep.subr.bf16.mxu0 0
        %2171 = vmatpush1.bf16.msra.mxu0 0
        %2172 = vmatprep.subr.bf16.mxu0 0
        %2173 = vmatpush1.bf16.msra.mxu0 0
        %2174 = vmatprep.subr.bf16.mxu0 0
        %2175 = vmatpush1.bf16.msra.mxu0 0
        %2176 = vmatprep.subr.bf16.mxu0 0
        %2177 = vmatpush1.bf16.msra.mxu0 0
        %2178 = vmatprep.subr.bf16.mxu0 0
        %2179 = vmatpush1.bf16.msra.mxu0 0
        %2180 = vmatprep.subr.bf16.mxu0 0
        %2181 = vmatpush1.bf16.msra.mxu0 %v2164
        %2182 = vmatprep.subr.bf16.mxu0 0
        %2183 = vmatpush2.bf16.msra.mxu0 0
        %2184 = vmatprep.subr.bf16.mxu0 0
        %2185 = vmatpush2.bf16.msra.mxu0 0
        %2186 = vmatprep.subr.bf16.mxu0 0
        %2187 = vmatpush2.bf16.msra.mxu0 0
        %2188 = vmatprep.subr.bf16.mxu0 0
        %2189 = vmatpush2.bf16.msra.mxu0 0
        %2190 = vmatprep.subr.bf16.mxu0 0
        %2191 = vmatpush2.bf16.msra.mxu0 0
        %2192 = vmatprep.subr.bf16.mxu0 0
        %2193 = vmatpush2.bf16.msra.mxu0 0
        %2194 = vmatprep.subr.bf16.mxu0 0
        %2195 = vmatpush2.bf16.msra.mxu0 0
        %2196 = vmatprep.subr.bf16.mxu0 0
        %2197 = vmatpush2.bf16.msra.mxu0 0
        %2198 = vmatprep.mubr.bf16.mxu0 0
        %2199 = vmatmul.mubr.bf16.gmra.mxu0 %v2161
        %v2200 = vpop.f32.mrf.mxu0
        %v2201 = vadd.f32 0.0, %v2200
        %v2202 = vpop.f32.mrf.mxu0
        %v2203 = vpop.f32.mrf.mxu0
        %v2204 = vpop.f32.mrf.mxu0
        %2205 = vdwg.mxu0
        %2207 = vrot.lane.b32.xlu0 %v2109, 8
        %v2208 = vpop.permute.xlu0 %2207
        %2211 = vrot.lane.b32.xlu0 %v2155, 16
        %v2212 = vpop.permute.xlu0 %2211
        %2215 = vrot.lane.b32.xlu0 %v2201, 24
        %v2216 = vpop.permute.xlu0 %2215
        %v2218 = vsel %vm1129, %v2063, %v2208
        %v2219 = vsel %vm1564, %v2218, %v2212
        %v2220 = vsel %vm1566, %v2219, %v2216
        %v2221 = vpack.c.bf16 %v2220, %v2220
        %v2222 = vld [vmem:[#allocation16] sm:$0xf]
        %v2223 = vld [vmem:[#allocation16 + $0x4] sm:$0xf]
        %v2224 = vld [vmem:[#allocation16 + $0x8] sm:$0xf]
        %v2225 = vld [vmem:[#allocation16 + $0xc] sm:$0xf]
        %v2230 = vunpack.c.l.b16 %v2222
        %v2231 = vunpack.c.l.b16 %v2223
        %v2232 = vunpack.c.l.b16 %v2224
        %v2233 = vunpack.c.l.b16 %v2225
        %v2234 = vpack.c.b16 %v2231, %v2230
        %v2235 = vpack.c.b16 %v2233, %v2232
        %v2239 = vsel %vm927, %v2221, 0
        %2241 = vmatprep.subr.bf16.mxu0 0
        %2242 = vmatpush1.bf16.msra.mxu0 0
        %2243 = vmatprep.subr.bf16.mxu0 0
        %2244 = vmatpush1.bf16.msra.mxu0 0
        %2245 = vmatprep.subr.bf16.mxu0 0
        %2246 = vmatpush1.bf16.msra.mxu0 0
        %2247 = vmatprep.subr.bf16.mxu0 0
        %2248 = vmatpush1.bf16.msra.mxu0 0
        %2249 = vmatprep.subr.bf16.mxu0 0
        %2250 = vmatpush1.bf16.msra.mxu0 0
        %2251 = vmatprep.subr.bf16.mxu0 0
        %2252 = vmatpush1.bf16.msra.mxu0 0
        %2253 = vmatprep.subr.bf16.mxu0 0
        %2254 = vmatpush1.bf16.msra.mxu0 %v2235
        %2255 = vmatprep.subr.bf16.mxu0 0
        %2256 = vmatpush1.bf16.msra.mxu0 %v2234
        %2257 = vmatprep.subr.bf16.mxu0 0
        %2258 = vmatpush2.bf16.msra.mxu0 0
        %2259 = vmatprep.subr.bf16.mxu0 0
        %2260 = vmatpush2.bf16.msra.mxu0 0
        %2261 = vmatprep.subr.bf16.mxu0 0
        %2262 = vmatpush2.bf16.msra.mxu0 0
        %2263 = vmatprep.subr.bf16.mxu0 0
        %2264 = vmatpush2.bf16.msra.mxu0 0
        %2265 = vmatprep.subr.bf16.mxu0 0
        %2266 = vmatpush2.bf16.msra.mxu0 0
        %2267 = vmatprep.subr.bf16.mxu0 0
        %2268 = vmatpush2.bf16.msra.mxu0 0
        %2269 = vmatprep.subr.bf16.mxu0 0
        %2270 = vmatpush2.bf16.msra.mxu0 0
        %2271 = vmatprep.subr.bf16.mxu0 0
        %2272 = vmatpush2.bf16.msra.mxu0 0
        %2273 = vmatprep.mubr.bf16.mxu0 0
        %2274 = vmatmul.mubr.bf16.gmra.mxu0 %v2239
        %v2275 = vpop.f32.mrf.mxu0
        %v2276 = vadd.f32 0.0, %v2275
        %v2277 = vpop.f32.mrf.mxu0
        %v2278 = vpop.f32.mrf.mxu0
        %v2279 = vpop.f32.mrf.mxu0
        %2280 = vdwg.mxu0
        %v2281 = vadd.f32 %v903, %v2276
        %v2282 = vld [vmem:[%s14] sm:$0x1]
        %v2283 = vld [vmem:[%s15] sm:$0x1]
        %v2284 = vsel %vm927, %v2281, 0.0
        %2285 = vadd.xlane.f32.xlu0 %v2284
        %v2286 = vpop.xlane.xlu0 %2285
        %v2287 = vrcp.pop 32.0
        %v2288 = vmul.f32 %v2286, %v2287
        %v2289 = vsub.f32 %v2281, %v2288
        %v2290 = vmul.f32 %v2289, %v2289
        %v2291 = vsel %vm927, %v2290, 0.0
        %2292 = vadd.xlane.f32.xlu0 %v2291
        %v2293 = vpop.xlane.xlu0 %2292
        %v2294 = vmul.f32 %v2293, %v2287
        %v2295 = vadd.f32 %v2294, 1e-05
        %v2296 = vrsqrt.pop %v2295
        %v2297 = vmul.f32 %v2289, %v2296
        %v2299 = vlaneseq
        %v2300 = vshrl.u32 %v2299, 7
        %v2301 = vsub.s32 0, %v2300
        %v2302 = vrot.slane %v2282, %v2301
        %v2304 = vmul.f32 %v2297, %v2302
        %v2306 = vlaneseq
        %v2307 = vshrl.u32 %v2306, 7
        %v2308 = vsub.s32 0, %v2307
        %v2309 = vrot.slane %v2283, %v2308
        %v2311 = vadd.f32 %v2304, %v2309
        %v2312 = vpack.c.bf16 %v2311, %v2311
        %v2313 = vld [vmem:[#allocation17] sm:$0xf]
        %v2314 = vld [vmem:[#allocation17 + $0x4] sm:$0xf]
        %v2315 = vld [vmem:[#allocation17 + $0x8] sm:$0xf]
        %v2316 = vld [vmem:[#allocation17 + $0xc] sm:$0xf]
        %v2321 = vunpack.c.l.b16 %v2313
        %v2322 = vunpack.c.l.b16 %v2314
        %v2323 = vunpack.c.l.b16 %v2315
        %v2324 = vunpack.c.l.b16 %v2316
        %v2325 = vpack.c.b16 %v2322, %v2321
        %v2326 = vpack.c.b16 %v2324, %v2323
        %v2330 = vsel %vm927, %v2312, 0
        %2332 = vmatprep.subr.bf16.mxu0 0
        %2333 = vmatpush1.bf16.msra.mxu0 0
        %2334 = vmatprep.subr.bf16.mxu0 0
        %2335 = vmatpush1.bf16.msra.mxu0 0
        %2336 = vmatprep.subr.bf16.mxu0 0
        %2337 = vmatpush1.bf16.msra.mxu0 0
        %2338 = vmatprep.subr.bf16.mxu0 0
        %2339 = vmatpush1.bf16.msra.mxu0 0
        %2340 = vmatprep.subr.bf16.mxu0 0
        %2341 = vmatpush1.bf16.msra.mxu0 0
        %2342 = vmatprep.subr.bf16.mxu0 0
        %2343 = vmatpush1.bf16.msra.mxu0 0
        %2344 = vmatprep.subr.bf16.mxu0 0
        %2345 = vmatpush1.bf16.msra.mxu0 %v2326
        %2346 = vmatprep.subr.bf16.mxu0 0
        %2347 = vmatpush1.bf16.msra.mxu0 %v2325
        %2348 = vmatprep.subr.bf16.mxu0 0
        %2349 = vmatpush2.bf16.msra.mxu0 0
        %2350 = vmatprep.subr.bf16.mxu0 0
        %2351 = vmatpush2.bf16.msra.mxu0 0
        %2352 = vmatprep.subr.bf16.mxu0 0
        %2353 = vmatpush2.bf16.msra.mxu0 0
        %2354 = vmatprep.subr.bf16.mxu0 0
        %2355 = vmatpush2.bf16.msra.mxu0 0
        %2356 = vmatprep.subr.bf16.mxu0 0
        %2357 = vmatpush2.bf16.msra.mxu0 0
        %2358 = vmatprep.subr.bf16.mxu0 0
        %2359 = vmatpush2.bf16.msra.mxu0 0
        %2360 = vmatprep.subr.bf16.mxu0 0
        %2361 = vmatpush2.bf16.msra.mxu0 0
        %2362 = vmatprep.subr.bf16.mxu0 0
        %2363 = vmatpush2.bf16.msra.mxu0 0
        %2364 = vmatprep.mubr.bf16.mxu0 0
        %2365 = vmatmul.mubr.bf16.gmra.mxu0 %v2330
        %v2366 = vpop.f32.mrf.mxu0
        %v2367 = vadd.f32 0.0, %v2366
        %v2368 = vpop.f32.mrf.mxu0
        %v2369 = vpop.f32.mrf.mxu0
        %v2370 = vpop.f32.mrf.mxu0
        %2371 = vdwg.mxu0
        %v2372 = vmax.f32 %v2367, 0.0
        %v2373 = vpack.c.bf16 %v2372, %v2372
        %v2374 = vld [vmem:[%s13] sm:$0xf]
        %v2375 = vld [vmem:[%s13 + $0x4] sm:$0xf]
        %v2376 = vld [vmem:[%s13 + $0x8] sm:$0xf]
        %v2377 = vld [vmem:[%s13 + $0xc] sm:$0xf]
        %v2378 = vld [vmem:[%s13 + $0x10] sm:$0xf]
        %v2379 = vld [vmem:[%s13 + $0x14] sm:$0xf]
        %v2380 = vld [vmem:[%s13 + $0x18] sm:$0xf]
        %v2381 = vld [vmem:[%s13 + $0x1c] sm:$0xf]
        %v2390 = vunpack.c.l.b16 %v2374
        %v2391 = vunpack.c.l.b16 %v2375
        %v2392 = vunpack.c.l.b16 %v2376
        %v2393 = vunpack.c.l.b16 %v2377
        %v2394 = vunpack.c.l.b16 %v2378
        %v2395 = vunpack.c.l.b16 %v2379
        %v2396 = vunpack.c.l.b16 %v2380
        %v2397 = vunpack.c.l.b16 %v2381
        %v2398 = vpack.c.b16 %v2391, %v2390
        %v2399 = vpack.c.b16 %v2393, %v2392
        %v2400 = vpack.c.b16 %v2395, %v2394
        %v2401 = vpack.c.b16 %v2397, %v2396
        %vm2406 = vcmask 523264
        %v2408 = vsel %vm2406, %v2373, 0
        %2410 = vmatprep.subr.bf16.mxu0 0
        %2411 = vmatpush1.bf16.msra.mxu0 0
        %2412 = vmatprep.subr.bf16.mxu0 0
        %2413 = vmatpush1.bf16.msra.mxu0 0
        %2414 = vmatprep.subr.bf16.mxu0 0
        %2415 = vmatpush1.bf16.msra.mxu0 0
        %2416 = vmatprep.subr.bf16.mxu0 0
        %2417 = vmatpush1.bf16.msra.mxu0 0
        %2418 = vmatprep.subr.bf16.mxu0 0
        %2419 = vmatpush1.bf16.msra.mxu0 %v2401
        %2420 = vmatprep.subr.bf16.mxu0 0
        %2421 = vmatpush1.bf16.msra.mxu0 %v2400
        %2422 = vmatprep.subr.bf16.mxu0 0
        %2423 = vmatpush1.bf16.msra.mxu0 %v2399
        %2424 = vmatprep.subr.bf16.mxu0 0
        %2425 = vmatpush1.bf16.msra.mxu0 %v2398
        %2426 = vmatprep.subr.bf16.mxu0 0
        %2427 = vmatpush2.bf16.msra.mxu0 0
        %2428 = vmatprep.subr.bf16.mxu0 0
        %2429 = vmatpush2.bf16.msra.mxu0 0
        %2430 = vmatprep.subr.bf16.mxu0 0
        %2431 = vmatpush2.bf16.msra.mxu0 0
        %2432 = vmatprep.subr.bf16.mxu0 0
        %2433 = vmatpush2.bf16.msra.mxu0 0
        %2434 = vmatprep.subr.bf16.mxu0 0
        %2435 = vmatpush2.bf16.msra.mxu0 0
        %2436 = vmatprep.subr.bf16.mxu0 0
        %2437 = vmatpush2.bf16.msra.mxu0 0
        %2438 = vmatprep.subr.bf16.mxu0 0
        %2439 = vmatpush2.bf16.msra.mxu0 0
        %2440 = vmatprep.subr.bf16.mxu0 0
        %2441 = vmatpush2.bf16.msra.mxu0 0
        %2442 = vmatprep.mubr.bf16.mxu0 0
        %2443 = vmatmul.mubr.bf16.gmra.mxu0 %v2408
        %v2444 = vpop.f32.mrf.mxu0
        %v2445 = vadd.f32 0.0, %v2444
        %v2446 = vpop.f32.mrf.mxu0
        %v2447 = vpop.f32.mrf.mxu0
        %v2448 = vpop.f32.mrf.mxu0
        %2449 = vdwg.mxu0
        %v2450 = vadd.f32 %v2311, %v2445
        %v2451 = vld [vmem:[%s16] sm:$0x1]
        %v2452 = vld [vmem:[%s17] sm:$0x1]
        %v2453 = vsel %vm927, %v2450, 0.0
        %2454 = vadd.xlane.f32.xlu0 %v2453
        %v2455 = vpop.xlane.xlu0 %2454
        %v2456 = vmul.f32 %v2455, %v2287
        %v2457 = vsub.f32 %v2450, %v2456
        %v2458 = vmul.f32 %v2457, %v2457
        %v2459 = vsel %vm927, %v2458, 0.0
        %2460 = vadd.xlane.f32.xlu0 %v2459
        %v2461 = vpop.xlane.xlu0 %2460
        %v2462 = vmul.f32 %v2461, %v2287
        %v2463 = vadd.f32 %v2462, 1e-05
        %v2464 = vrsqrt.pop %v2463
        %v2465 = vmul.f32 %v2457, %v2464
        %v2467 = vlaneseq
        %v2468 = vshrl.u32 %v2467, 7
        %v2469 = vsub.s32 0, %v2468
        %v2470 = vrot.slane %v2451, %v2469
        %v2472 = vmul.f32 %v2465, %v2470
        %v2474 = vlaneseq
        %v2475 = vshrl.u32 %v2474, 7
        %v2476 = vsub.s32 0, %v2475
        %v2477 = vrot.slane %v2452, %v2476
        %v2479 = vadd.f32 %v2472, %v2477
        %2480 = vst.msk [vmem:[%s872] sm:$0xff] %vm927, %v2479
        %s2481 = sand.u32 %s479, 1
        %s2482 = scalar_lea.sflag [#allocation4], %s2481
        %s2483 = sand.u32 %s479, 1
        %s2484 = smul.addr %s2483, 8
        %s2485 = scalar_lea.vmem [#allocation19], %s2484
        %s2486 = sand.u32 %s48, 1
        %s2487 = scalar_lea.sflag [#allocation21], %s2486
        %s2488 = sand.u32 %s507, 1
        %s2489 = smul.addr %s2488, 32
        %s2490 = scalar_lea.vmem [#allocation20], %s2489
        %s2491 = sand.u32 %s48, 1
        %s2492 = scalar_lea.sflag [#allocation21], %s2491
        %s2493 = sand.u32 %s535, 1
        %s2494 = smul.addr %s2493, 32
        %s2495 = scalar_lea.vmem [#allocation22], %s2494
        // Predicated region
        $region133: #{tpu_custom_call.1} parent=91 // pred_check
          %p2496 = pneg %p489
        $region134: #{tpu_custom_call.1} parent=91 // pred_check_branch
          %2498 = sbr.rel (%p2496) target = $region136
        $region135: #{tpu_custom_call.1} parent=91 // pred_region
          %s2500 = ssub.s32 128, 128
          %2501 = vsyncadd %s2482, %s2500
          %s2502 = sadd.s32 %s53, %s52
          %s2503 = smul.addr %s2502, 128
          %s2504 = scalar_lea.hbm %s18, %s2503
          %s2506 = sshll.u32 %s2485, 4
          %s2507 = int_to_ptr.vmem [resolvable:$true] %s2506
          %2509 = dma.vmem_to_hbm [thread:$0]  %s2507, 128, %s2504, %s2482
        $region136: #{tpu_custom_call.1} parent=91 // pred_fallthru
          _
        // Predicated region
        $region137: #{tpu_custom_call.1} parent=91 // pred_check
          %p2510 = pneg %p517
        $region138: #{tpu_custom_call.1} parent=91 // pred_check_branch
          %2512 = sbr.rel (%p2510) target = $region140
        $region139: #{tpu_custom_call.1} parent=91 // pred_region
          %s2514 = ssub.s32 512, 512
          %2515 = vsyncadd %s2487, %s2514
          %s2516 = smul.addr %s52, 4
          %s2517 = sadd.s32 %s53, %s2516
          %s2518 = smul.addr %s2517, 128
          %s2519 = scalar_lea.hbm %s19, %s2518
          %s2520 = sshll.u32 %s2490, 4
          %s2521 = int_to_ptr.vmem [resolvable:$true] %s2520
          %2526 = dma.vmem_to_hbm [thread:$0]  %s2521, 512, %s2519, %s2487, 128, 128, 8
        $region140: #{tpu_custom_call.1} parent=91 // pred_fallthru
          _
        // Predicated region
        $region141: #{tpu_custom_call.1} parent=91 // pred_check
          %p2527 = pneg %p545
        $region142: #{tpu_custom_call.1} parent=91 // pred_check_branch
          %2529 = sbr.rel (%p2527) target = $region144
        $region143: #{tpu_custom_call.1} parent=91 // pred_region
          %s2531 = ssub.s32 512, 512
          %2532 = vsyncadd %s2492, %s2531
          %s2533 = smul.addr %s52, 4
          %s2534 = sadd.s32 %s53, %s2533
          %s2535 = smul.addr %s2534, 128
          %s2536 = scalar_lea.hbm %s20, %s2535
          %s2537 = sshll.u32 %s2495, 4
          %s2538 = int_to_ptr.vmem [resolvable:$true] %s2537
          %2543 = dma.vmem_to_hbm [thread:$0]  %s2538, 512, %s2536, %s2492, 128, 128, 8
        $region144: #{tpu_custom_call.1} parent=91 // pred_fallthru
          _
      $region92: #{tpu_custom_call.1} parent=5 // pred_fallthru
        _
      %p2544 = scmp.le.s32.totalorder 2, %s43
      // Predicated region
      $region145: #{tpu_custom_call.1} parent=5 // pred_check
        %p2545 = pneg %p2544
      $region146: #{tpu_custom_call.1} parent=5 // pred_check_branch
        %2547 = sbr.rel (%p2545) target = $region148
      $region147: #{tpu_custom_call.1} parent=5 // pred_region
        %s2548 = ssub.s32 %s43, 2
        // Predicated region
        $region149: #{tpu_custom_call.1} parent=147 // pred_check
          %p2549 = pneg %p495
        $region150: #{tpu_custom_call.1} parent=147 // pred_check_branch
          %2551 = sbr.rel (%p2549) target = $region152
        $region151: #{tpu_custom_call.1} parent=147 // pred_region
          %s2552 = sand.u32 %s480, 1
          %s2553 = scalar_lea.sflag [#allocation4], %s2552
          %s2554 = sand.u32 %s480, 1
          %s2555 = smul.addr %s2554, 8
          %s2556 = scalar_lea.vmem [#allocation19], %s2555
          %2557 = dma.done %s2553, 128
        $region152: #{tpu_custom_call.1} parent=147 // pred_fallthru
          _
        // Predicated region
        $region153: #{tpu_custom_call.1} parent=147 // pred_check
          %p2558 = pneg %p523
        $region154: #{tpu_custom_call.1} parent=147 // pred_check_branch
          %2560 = sbr.rel (%p2558) target = $region156
        $region155: #{tpu_custom_call.1} parent=147 // pred_region
          %s2561 = sand.u32 %s49, 1
          %s2562 = scalar_lea.sflag [#allocation21], %s2561
          %s2563 = sand.u32 %s508, 1
          %s2564 = smul.addr %s2563, 32
          %s2565 = scalar_lea.vmem [#allocation20], %s2564
          %2566 = dma.done %s2562, 512
        $region156: #{tpu_custom_call.1} parent=147 // pred_fallthru
          _
        // Predicated region
        $region157: #{tpu_custom_call.1} parent=147 // pred_check
          %p2567 = pneg %p551
        $region158: #{tpu_custom_call.1} parent=147 // pred_check_branch
          %2569 = sbr.rel (%p2567) target = $region160
        $region159: #{tpu_custom_call.1} parent=147 // pred_region
          %s2570 = sand.u32 %s49, 1
          %s2571 = scalar_lea.sflag [#allocation21], %s2570
          %s2572 = sand.u32 %s536, 1
          %s2573 = smul.addr %s2572, 32
          %s2574 = scalar_lea.vmem [#allocation22], %s2573
          %2575 = dma.done %s2571, 512
        $region160: #{tpu_custom_call.1} parent=147 // pred_fallthru
          _
      $region148: #{tpu_custom_call.1} parent=5 // pred_fallthru
        _
    $region6: #{tpu_custom_call.1} parent=1 // loop_footer
      %s47 = sadd.s32 1, %s43
    $region7: #{tpu_custom_call.1} parent=1 // loop_footer_branch
      %42 = sbr.rel target = $region3
    $region8: #{tpu_custom_call.1} parent=1 // loop_exit
      _
    %2576 = vsyncpa [#allocation3], 1
    %s2577 = scalar_lea.sflag [#allocation3], 1
    %2578 = vsyncpa %s2577, 1
    %2579 = vsyncpa [#allocation6], 1
    %s2580 = scalar_lea.sflag [#allocation6], 1
    %2581 = vsyncpa %s2580, 1
    %2582 = vsyncpa [#allocation9], 1
    %2583 = vsyncpa [#allocation12], 1
    %2584 = vsyncpa [#allocation15], 1
    %2585 = vsyncpa [#allocation18], 1
    %2586 = vsyncpa [#allocation4], 1
    %s2587 = scalar_lea.sflag [#allocation4], 1
    %2588 = vsyncpa %s2587, 1
    %2589 = vsyncpa [#allocation21], 1
    %s2590 = scalar_lea.sflag [#allocation21], 1
    %2591 = vsyncpa %s2590, 1

</llo_original>
